<compile_context>
chip_gen: v5e
topology: v5e:2x2
jax: 0.10.0
libtpu: 0.0.40
codegen_flags: <defaults>
</compile_context>

<pallas_src>
from functools import partial

import jax
import jax.numpy as jnp
from jax.experimental import pallas as pl
from jax.experimental.pallas import tpu as pltpu


def _round_up(x, m):
    return (x + m - 1) // m * m


def _lstm_gates(g, c, H):
    # PyTorch gate order: i, f, g, o.  H here is the lane-padded hidden width,
    # so every slice below is a whole-128-lane tile.
    i = jax.nn.sigmoid(g[:, 0 * H:1 * H])
    f = jax.nn.sigmoid(g[:, 1 * H:2 * H])
    gg = jnp.tanh(g[:, 2 * H:3 * H])
    o = jax.nn.sigmoid(g[:, 3 * H:4 * H])
    c_new = f * c + i * gg
    h_new = o * jnp.tanh(c_new)
    return h_new, c_new


def dec_kernel(emb2d_ref, len_ref,
               wih0_ref, whh0_ref, b0_ref,
               w1f_ref, b1_ref,
               wlin_ref, blin_ref,
               out_ref,
               x0w,                      # VMEM scratch (rows_pad, 4*Hp) f32
               *, hidden_p, prefix_n, batch, seq_len):
    Hp = hidden_p
    B = batch
    Tp1 = seq_len

    # Hoisted layer-0 input projection: one bf16 matmul (f32 accumulate) over
    # all (T+1)*B rows, written to VMEM scratch so the large result is NOT
    # pinned in vregs across the unrolled recurrence.
    x0w[...] = jnp.dot(emb2d_ref[...], wih0_ref[...],
                       preferred_element_type=jnp.float32) + b0_ref[...]

    # Weight / bias / length loads hoisted out of the time loop.
    whh0 = whh0_ref[...]            # (Hp, 4Hp) f32
    w1f = w1f_ref[...]              # (2Hp, 4Hp) f32 = [wih1; whh1]
    b1 = b1_ref[...]                # (1, 4Hp) f32
    lengths = len_ref[...]          # (B, 1) int32

    # LSTM state lives in vregs as loop-carried values (loop is unrolled).
    h0 = jnp.zeros((B, Hp), jnp.float32)
    c0 = jnp.zeros((B, Hp), jnp.float32)
    h1 = jnp.zeros((B, Hp), jnp.float32)
    c1 = jnp.zeros((B, Hp), jnp.float32)

    prefix_feats = []

    # Short static time loop -> fully unrolled.
    # TODO(synk): at production T use lax.fori_loop(..., unroll=2-4) reading
    # x0w from the scratch to bound code size and vreg live ranges.
    for t in range(Tp1):
        # Hoist the (B,1)->(B,Hp) mask broadcast once per step.
        maskb = jnp.broadcast_to(lengths > t, (B, Hp))

        # Layer 0: recurrent-only matmul (input projection precomputed, the
        # per-step slice is a cheap sublane-aligned VMEM load).
        g0 = x0w[pl.ds(t * B, B), :] + jnp.dot(
            h0, whh0, preferred_element_type=jnp.float32)
        h0n, c0n = _lstm_gates(g0, c0, Hp)
        h0 = jnp.where(maskb, h0n, h0)
        c0 = jnp.where(maskb, c0n, c0)

        # Layer 1: fused input + recurrent matmul on the lane-aligned
        # [h0n, h1] concat (Hp % 128 == 0 -> layout-clean, fusion stays).
        x1 = jnp.concatenate([h0n, h1], axis=1)         # (B, 2Hp)
        g1 = jnp.dot(x1, w1f, preferred_element_type=jnp.float32) + b1
        h1n, c1n = _lstm_gates(g1, c1, Hp)
        h1 = jnp.where(maskb, h1n, h1)
        c1 = jnp.where(maskb, c1n, c1)

        # Padded top-layer outputs for the first prefix_n+1 steps carried as
        # loop values (no feats VMEM scratch / masked partial stores).
        if t <= prefix_n:
            prefix_feats.append(jnp.where(maskb, h1n, 0.0))

    # hn[-1] is the last block; one lane-aligned concat right before the dot.
    feats = jnp.concatenate(prefix_feats + [h1], axis=1)   # (B, (prefix_n+2)*Hp)

    # Final linear: bf16 operands, f32 accumulate + f32 bias.
    logits = jnp.dot(feats.astype(jnp.bfloat16), wlin_ref[...],
                     preferred_element_type=jnp.float32) + blin_ref[...]

    # log_softmax over dim=1 (padded vocab columns carry a -1e30 bias).
    m = jnp.max(logits, axis=1, keepdims=True)
    lse = jnp.log(jnp.sum(jnp.exp(logits - m), axis=1, keepdims=True)) + m
    out_ref[...] = logits - lse


# ----------------------------- wrapper-side padding -------------------------

def _pad_gate_cols(w, H, Hp):
    # (R, 4H) -> (R, 4Hp): gate k's H columns land at column offset k*Hp.
    out = jnp.zeros((w.shape[0], 4 * Hp), w.dtype)
    for k in range(4):
        out = out.at[:, k * Hp:k * Hp + H].set(w[:, k * H:(k + 1) * H])
    return out


def _pad_hidden(w, H, Hp):
    # (H, 4H) -> (Hp, 4Hp): zero rows for padded hidden units + gate columns.
    return _pad_gate_cols(jnp.pad(w, ((0, Hp - H), (0, 0))), H, Hp)


def dec_forward(features, captions, lengths, params, *, prefix_n=2):
    # Glue in plain JAX: embedding lookup, concat image features, time-major.
    emb = jnp.take(params["embed"], captions, axis=0)              # (B, T, E)
    emb = jnp.concatenate([features[:, None, :], emb], axis=1)     # (B, T+1, E)
    emb = jnp.transpose(emb, (1, 0, 2))                            # (T+1, B, E)

    B = features.shape[0]
    Tp1, _, E = emb.shape

    # bf16 MXU LHS for the hoisted projection; rows padded to the bf16
    # sublane-packing granularity (16) so the big matmul is tile-aligned.
    rows = Tp1 * B
    rows_pad = _round_up(rows, 16)
    emb2d = emb.reshape(rows, E).astype(jnp.bfloat16)
    if rows_pad != rows:
        emb2d = jnp.pad(emb2d, ((0, rows_pad - rows), (0, 0)))

    H = params["whh0"].shape[0]
    Hp = _round_up(H, 128)          # lane-aligned hidden width inside kernel
    ans_vocab = params["wlin"].shape[1]
    ans_pad = _round_up(ans_vocab, 128)
    n_blk = prefix_n + 2            # prefix_n+1 step hiddens + hn[-1]
    lin_in_p = n_blk * Hp

    # ---- Lane-pad LSTM weights; padded hidden units stay exactly 0. --------
    wih0 = _pad_gate_cols(params["wih0"], H, Hp).astype(jnp.bfloat16)  # (E,4Hp)
    whh0 = _pad_hidden(params["whh0"], H, Hp)                          # (Hp,4Hp)
    b0 = _pad_gate_cols(params["b0"], H, Hp)                           # (1,4Hp)
    wih1 = _pad_hidden(params["wih1"], H, Hp)
    whh1 = _pad_hidden(params["whh1"], H, Hp)
    w1f = jnp.concatenate([wih1, whh1], axis=0)                        # (2Hp,4Hp)
    b1 = _pad_gate_cols(params["b1"], H, Hp)

    # ---- Final linear: place each H-row block at blk*Hp, pad vocab cols. ---
    wlin = jnp.zeros((lin_in_p, ans_pad), jnp.float32)
    for blk in range(n_blk):
        wlin = wlin.at[blk * Hp:blk * Hp + H, :ans_vocab].set(
            params["wlin"][blk * H:(blk + 1) * H, :])
    wlin = wlin.astype(jnp.bfloat16)
    if ans_pad != ans_vocab:
        blin = jnp.concatenate(
            [params["blin"],
             jnp.full((1, ans_pad - ans_vocab), -1e30, jnp.float32)], axis=1)
    else:
        blin = params["blin"]

    len2d = lengths.reshape(B, 1).astype(jnp.int32)

    operands = (emb2d, len2d, wih0, whh0, b0, w1f, b1, wlin, blin)

    # VMEM budget + cost estimate (review item).
    io_bytes = sum(int(a.size) * a.dtype.itemsize for a in operands)
    io_bytes += B * ans_pad * 4                               # output
    scratch_bytes = rows_pad * 4 * Hp * 4                     # x0w scratch
    vmem_limit = int(min(128 * 1024 * 1024,
                         max(8 * 1024 * 1024, 2 * (io_bytes + scratch_bytes))))
    flops = 2 * (rows_pad * E * 4 * Hp                        # input projection
                 + Tp1 * B * 3 * Hp * 4 * Hp                  # recurrence
                 + B * lin_in_p * ans_pad)                    # final linear
    transcendentals = Tp1 * B * 10 * Hp + B * ans_pad
    cost = pl.CostEstimate(flops=int(flops),
                           transcendentals=int(transcendentals),
                           bytes_accessed=int(io_bytes))

    kernel = partial(dec_kernel, hidden_p=Hp, prefix_n=prefix_n,
                     batch=B, seq_len=Tp1)
    out_pad = pl.pallas_call(
        kernel,
        out_shape=jax.ShapeDtypeStruct((B, ans_pad), jnp.float32),
        in_specs=[pl.BlockSpec(memory_space=pltpu.MemorySpace.VMEM)] * len(operands),
        out_specs=pl.BlockSpec(memory_space=pltpu.MemorySpace.VMEM),
        scratch_shapes=[
            pltpu.VMEM((rows_pad, 4 * Hp), jnp.float32),   # hoisted layer-0 proj
        ],
        compiler_params=pltpu.CompilerParams(vmem_limit_bytes=vmem_limit),
        cost_estimate=cost,
    )(*operands)
    # TODO(synk): production sizes -> tile wlin over the vocab axis and add a
    # parallel batch grid axis (v7x dual TensorCores); stream emb2d in chunks.
    return out_pad[:, :ans_vocab]


def dec_reference(features, captions, lengths, params, *, prefix_n=2):
    """Pure-JAX f32 reference with identical semantics (sanity check)."""
    emb = jnp.take(params["embed"], captions, axis=0)
    emb = jnp.concatenate([features[:, None, :], emb], axis=1)     # (B, T+1, E)
    B, Tp1, _ = emb.shape
    H = params["whh0"].shape[0]

    def cell(x, h, c, wih, whh, b):
        g = x @ wih + h @ whh + b
        i = jax.nn.sigmoid(g[:, 0 * H:1 * H])
        f = jax.nn.sigmoid(g[:, 1 * H:2 * H])
        gg = jnp.tanh(g[:, 2 * H:3 * H])
        o = jax.nn.sigmoid(g[:, 3 * H:4 * H])
        c_new = f * c + i * gg
        return o * jnp.tanh(c_new), c_new

    h0 = jnp.zeros((B, H)); c0 = jnp.zeros((B, H))
    h1 = jnp.zeros((B, H)); c1 = jnp.zeros((B, H))
    hpref = []
    lens = lengths.reshape(B, 1)
    for t in range(Tp1):
        mask = lens > t
        x0 = emb[:, t, :]
        h0n, c0n = cell(x0, h0, c0, params["wih0"], params["whh0"], params["b0"])
        h0 = jnp.where(mask, h0n, h0); c0 = jnp.where(mask, c0n, c0)
        h1n, c1n = cell(h0n, h1, c1, params["wih1"], params["whh1"], params["b1"])
        h1 = jnp.where(mask, h1n, h1); c1 = jnp.where(mask, c1n, c1)
        if t <= prefix_n:
            hpref.append(jnp.where(mask, h1n, 0.0))
    feats = jnp.concatenate(hpref + [h1], axis=1)
    logits = feats @ params["wlin"] + params["blin"]
    return jax.nn.log_softmax(logits, axis=1)


def init_params(key, *, vocab_size, embed_size, hidden_size, ans_vocab_size,
                prefix_n):
    H = hidden_size
    k = 1.0 / jnp.sqrt(jnp.float32(H))
    keys = jax.random.split(key, 12)

    def u(kk, shape):
        return jax.random.uniform(kk, shape, jnp.float32, -k, k)

    lin_in = (prefix_n + 2) * H   # see TODO note at top of file
    return {
        "embed": jax.random.normal(keys[0], (vocab_size, embed_size), jnp.float32),
        # LSTM layer 0 (input size E), stored transposed: (E, 4H) / (H, 4H)
        "wih0": u(keys[1], (embed_size, 4 * H)),
        "whh0": u(keys[2], (H, 4 * H)),
        "b0":   u(keys[3], (1, 4 * H)) + u(keys[4], (1, 4 * H)),   # b_ih + b_hh
        # LSTM layer 1 (input size H)
        "wih1": u(keys[5], (H, 4 * H)),
        "whh1": u(keys[6], (H, 4 * H)),
        "b1":   u(keys[7], (1, 4 * H)) + u(keys[8], (1, 4 * H)),
        # Final linear, stored transposed: (lin_in, ans_vocab)
        "wlin": u(keys[9], (lin_in, ans_vocab_size)),
        "blin": u(keys[10], (1, ans_vocab_size)),
    }


if __name__ == "__main__":
    # Small shapes consistent with the module.
    B, T = 8, 8                 # batch, caption length
    E, H = 32, 32               # embed_size, hidden_size
    VOCAB, ANS_VOCAB = 64, 16
    PREFIX_N = 2                # use_prefix_n=2 -> prefix_n=2

    key = jax.random.PRNGKey(0)
    kf, kc, kp = jax.random.split(key, 3)

    features = jax.random.normal(kf, (B, E), jnp.float32)           # (B, E)
    captions = jax.random.randint(kc, (B, T), 0, VOCAB, jnp.int32)  # (B, T)
    # lengths include the prepended feature step; sorted descending, all >= 1
    lengths = jnp.array([9, 8, 6, 5, 4, 4, 3, 3], dtype=jnp.int32)  # (B,)
    assert int(lengths.min()) >= 1, "pack_padded_sequence requires lengths >= 1"

    params = init_params(kp, vocab_size=VOCAB, embed_size=E, hidden_size=H,
                         ans_vocab_size=ANS_VOCAB, prefix_n=PREFIX_N)

    out = dec_forward(features, captions, lengths, params, prefix_n=PREFIX_N)
    out = jax.block_until_ready(out)

    ref = dec_reference(features, captions, lengths, params, prefix_n=PREFIX_N)
    assert out.shape == (B, ANS_VOCAB)
    # bf16 operands on the two big matmuls (f32 accumulate) -> slightly looser
    # tolerance vs the pure-f32 reference.
    assert bool(jnp.allclose(out, ref, atol=2e-2, rtol=2e-2)), "kernel mismatch"

    print("KERNEL_OK")
</pallas_src>

<mosaic_0001>
module attributes {stable_mosaic.version = 11 : i64} {
  func.func @dec_kernel(%arg0: memref<80x32xbf16, #tpu.memory_space<vmem>>, %arg1: memref<8x1xi32, #tpu.memory_space<vmem>>, %arg2: memref<32x512xbf16, #tpu.memory_space<vmem>>, %arg3: memref<128x512xf32, #tpu.memory_space<vmem>>, %arg4: memref<1x512xf32, #tpu.memory_space<vmem>>, %arg5: memref<256x512xf32, #tpu.memory_space<vmem>>, %arg6: memref<1x512xf32, #tpu.memory_space<vmem>>, %arg7: memref<512x128xbf16, #tpu.memory_space<vmem>>, %arg8: memref<1x128xf32, #tpu.memory_space<vmem>>, %arg9: memref<8x128xf32, #tpu.memory_space<vmem>>, %arg10: memref<80x512xf32, #tpu.memory_space<vmem>>) attributes {dimension_semantics = [], scalar_prefetch = 0 : i64, scratch_operands = 1 : i64, tpu.core_type = #tpu.core_type<tc>} {
    %c0 = arith.constant 0 : index
    %c0_0 = arith.constant 0 : index
    %0 = vector.load %arg0[%c0, %c0_0] : memref<80x32xbf16, #tpu.memory_space<vmem>>, vector<80x32xbf16>
    %c0_1 = arith.constant 0 : index
    %c0_2 = arith.constant 0 : index
    %1 = vector.load %arg2[%c0_1, %c0_2] : memref<32x512xbf16, #tpu.memory_space<vmem>>, vector<32x512xbf16>
    %cst = arith.constant dense<0.000000e+00> : vector<80x512xf32>
    %2 = tpu.matmul %0, %1, %cst {dimension_numbers = #tpu.dot_dimension_numbers<[1], [0], [0], [1], [0, 0, 1, 1], [], []>} : vector<80x32xbf16>, vector<32x512xbf16>, vector<80x512xf32> -> vector<80x512xf32>
    %c0_3 = arith.constant 0 : index
    %c0_4 = arith.constant 0 : index
    %3 = vector.load %arg4[%c0_3, %c0_4] : memref<1x512xf32, #tpu.memory_space<vmem>>, vector<1x512xf32>
    %4 = vector.broadcast %3 : vector<1x512xf32> to vector<80x512xf32>
    %5 = arith.addf %2, %4 : vector<80x512xf32>
    %c0_5 = arith.constant 0 : index
    %c0_6 = arith.constant 0 : index
    %6 = vector.load %arg10[%c0_5, %c0_6] : memref<80x512xf32, #tpu.memory_space<vmem>>, vector<80x512xf32>
    tpu.vector_store %arg10[%c0_5, %c0_6], %5 {strides = array<i32>} : memref<80x512xf32, #tpu.memory_space<vmem>>, vector<80x512xf32>,
    %c0_7 = arith.constant 0 : index
    %c0_8 = arith.constant 0 : index
    %7 = vector.load %arg3[%c0_7, %c0_8] : memref<128x512xf32, #tpu.memory_space<vmem>>, vector<128x512xf32>
    %c0_9 = arith.constant 0 : index
    %c0_10 = arith.constant 0 : index
    %8 = vector.load %arg5[%c0_9, %c0_10] : memref<256x512xf32, #tpu.memory_space<vmem>>, vector<256x512xf32>
    %c0_11 = arith.constant 0 : index
    %c0_12 = arith.constant 0 : index
    %9 = vector.load %arg6[%c0_11, %c0_12] : memref<1x512xf32, #tpu.memory_space<vmem>>, vector<1x512xf32>
    %c0_13 = arith.constant 0 : index
    %c0_14 = arith.constant 0 : index
    %10 = vector.load %arg1[%c0_13, %c0_14] : memref<8x1xi32, #tpu.memory_space<vmem>>, vector<8x1xi32>
    %cst_15 = arith.constant 0.000000e+00 : f32
    %11 = vector.broadcast %cst_15 : f32 to vector<8x128xf32>
    %cst_16 = arith.constant 0.000000e+00 : f32
    %12 = vector.broadcast %cst_16 : f32 to vector<8x128xf32>
    %cst_17 = arith.constant 0.000000e+00 : f32
    %13 = vector.broadcast %cst_17 : f32 to vector<8x128xf32>
    %cst_18 = arith.constant 0.000000e+00 : f32
    %14 = vector.broadcast %cst_18 : f32 to vector<8x128xf32>
    %c0_i32 = arith.constant 0 : i32
    %15 = vector.broadcast %c0_i32 : i32 to vector<8x1xi32>
    %16 = arith.cmpi sgt, %10, %15 : vector<8x1xi32>
    %17 = vector.shape_cast %16 : vector<8x1xi1> to vector<8x1xi1>
    %18 = vector.broadcast %17 : vector<8x1xi1> to vector<8x128xi1>
    %c0_19 = arith.constant 0 : index
    %c0_20 = arith.constant 0 : index
    %19 = vector.load %arg10[%c0_19, %c0_20] : memref<80x512xf32, #tpu.memory_space<vmem>>, vector<8x512xf32>
    %cst_21 = arith.constant dense<0.000000e+00> : vector<8x512xf32>
    %20 = tpu.matmul %11, %7, %cst_21 {dimension_numbers = #tpu.dot_dimension_numbers<[1], [0], [0], [1], [0, 0, 1, 1], [], []>} : vector<8x128xf32>, vector<128x512xf32>, vector<8x512xf32> -> vector<8x512xf32>
    %21 = arith.addf %19, %20 : vector<8x512xf32>
    %22 = vector.extract_strided_slice %21 {offsets = [0, 0], sizes = [8, 128], strides = [1, 1]} : vector<8x512xf32> to vector<8x128xf32>
    %23 = arith.negf %22 : vector<8x128xf32>
    %24 = math.exp %23 : vector<8x128xf32>
    %cst_22 = arith.constant 1.000000e+00 : f32
    %25 = vector.broadcast %cst_22 : f32 to vector<8x128xf32>
    %26 = arith.addf %25, %24 : vector<8x128xf32>
    %27 = arith.divf %25, %26 : vector<8x128xf32>
    %28 = vector.extract_strided_slice %21 {offsets = [0, 128], sizes = [8, 128], strides = [1, 1]} : vector<8x512xf32> to vector<8x128xf32>
    %29 = arith.negf %28 : vector<8x128xf32>
    %30 = math.exp %29 : vector<8x128xf32>
    %cst_23 = arith.constant 1.000000e+00 : f32
    %31 = vector.broadcast %cst_23 : f32 to vector<8x128xf32>
    %32 = arith.addf %31, %30 : vector<8x128xf32>
    %33 = arith.divf %31, %32 : vector<8x128xf32>
    %34 = vector.extract_strided_slice %21 {offsets = [0, 256], sizes = [8, 128], strides = [1, 1]} : vector<8x512xf32> to vector<8x128xf32>
    %35 = math.tanh %34 : vector<8x128xf32>
    %36 = vector.extract_strided_slice %21 {offsets = [0, 384], sizes = [8, 128], strides = [1, 1]} : vector<8x512xf32> to vector<8x128xf32>
    %37 = arith.negf %36 : vector<8x128xf32>
    %38 = math.exp %37 : vector<8x128xf32>
    %cst_24 = arith.constant 1.000000e+00 : f32
    %39 = vector.broadcast %cst_24 : f32 to vector<8x128xf32>
    %40 = arith.addf %39, %38 : vector<8x128xf32>
    %41 = arith.divf %39, %40 : vector<8x128xf32>
    %42 = arith.mulf %33, %12 : vector<8x128xf32>
    %43 = arith.mulf %27, %35 : vector<8x128xf32>
    %44 = arith.addf %42, %43 : vector<8x128xf32>
    %45 = math.tanh %44 : vector<8x128xf32>
    %46 = arith.mulf %41, %45 : vector<8x128xf32>
    %47 = arith.select %18, %46, %11 : vector<8x128xi1>, vector<8x128xf32>
    %48 = arith.select %18, %44, %12 : vector<8x128xi1>, vector<8x128xf32>
    %49 = tpu.concatenate %46, %13 in 1 : vector<8x128xf32>, vector<8x128xf32> -> vector<8x256xf32>
    %cst_25 = arith.constant dense<0.000000e+00> : vector<8x512xf32>
    %50 = tpu.matmul %49, %8, %cst_25 {dimension_numbers = #tpu.dot_dimension_numbers<[1], [0], [0], [1], [0, 0, 1, 1], [], []>} : vector<8x256xf32>, vector<256x512xf32>, vector<8x512xf32> -> vector<8x512xf32>
    %51 = vector.broadcast %9 : vector<1x512xf32> to vector<8x512xf32>
    %52 = arith.addf %50, %51 : vector<8x512xf32>
    %53 = vector.extract_strided_slice %52 {offsets = [0, 0], sizes = [8, 128], strides = [1, 1]} : vector<8x512xf32> to vector<8x128xf32>
    %54 = arith.negf %53 : vector<8x128xf32>
    %55 = math.exp %54 : vector<8x128xf32>
    %cst_26 = arith.constant 1.000000e+00 : f32
    %56 = vector.broadcast %cst_26 : f32 to vector<8x128xf32>
    %57 = arith.addf %56, %55 : vector<8x128xf32>
    %58 = arith.divf %56, %57 : vector<8x128xf32>
    %59 = vector.extract_strided_slice %52 {offsets = [0, 128], sizes = [8, 128], strides = [1, 1]} : vector<8x512xf32> to vector<8x128xf32>
    %60 = arith.negf %59 : vector<8x128xf32>
    %61 = math.exp %60 : vector<8x128xf32>
    %cst_27 = arith.constant 1.000000e+00 : f32
    %62 = vector.broadcast %cst_27 : f32 to vector<8x128xf32>
    %63 = arith.addf %62, %61 : vector<8x128xf32>
    %64 = arith.divf %62, %63 : vector<8x128xf32>
    %65 = vector.extract_strided_slice %52 {offsets = [0, 256], sizes = [8, 128], strides = [1, 1]} : vector<8x512xf32> to vector<8x128xf32>
    %66 = math.tanh %65 : vector<8x128xf32>
    %67 = vector.extract_strided_slice %52 {offsets = [0, 384], sizes = [8, 128], strides = [1, 1]} : vector<8x512xf32> to vector<8x128xf32>
    %68 = arith.negf %67 : vector<8x128xf32>
    %69 = math.exp %68 : vector<8x128xf32>
    %cst_28 = arith.constant 1.000000e+00 : f32
    %70 = vector.broadcast %cst_28 : f32 to vector<8x128xf32>
    %71 = arith.addf %70, %69 : vector<8x128xf32>
    %72 = arith.divf %70, %71 : vector<8x128xf32>
    %73 = arith.mulf %64, %14 : vector<8x128xf32>
    %74 = arith.mulf %58, %66 : vector<8x128xf32>
    %75 = arith.addf %73, %74 : vector<8x128xf32>
    %76 = math.tanh %75 : vector<8x128xf32>
    %77 = arith.mulf %72, %76 : vector<8x128xf32>
    %78 = arith.select %18, %77, %13 : vector<8x128xi1>, vector<8x128xf32>
    %79 = arith.select %18, %75, %14 : vector<8x128xi1>, vector<8x128xf32>
    %cst_29 = arith.constant 0.000000e+00 : f32
    %80 = vector.broadcast %cst_29 : f32 to vector<8x128xf32>
    %81 = arith.select %18, %77, %80 : vector<8x128xi1>, vector<8x128xf32>
    %c1_i32 = arith.constant 1 : i32
    %82 = vector.broadcast %c1_i32 : i32 to vector<8x1xi32>
    %83 = arith.cmpi sgt, %10, %82 : vector<8x1xi32>
    %84 = vector.shape_cast %83 : vector<8x1xi1> to vector<8x1xi1>
    %85 = vector.broadcast %84 : vector<8x1xi1> to vector<8x128xi1>
    %c8 = arith.constant 8 : index
    %c0_30 = arith.constant 0 : index
    %86 = vector.load %arg10[%c8, %c0_30] : memref<80x512xf32, #tpu.memory_space<vmem>>, vector<8x512xf32>
    %cst_31 = arith.constant dense<0.000000e+00> : vector<8x512xf32>
    %87 = tpu.matmul %47, %7, %cst_31 {dimension_numbers = #tpu.dot_dimension_numbers<[1], [0], [0], [1], [0, 0, 1, 1], [], []>} : vector<8x128xf32>, vector<128x512xf32>, vector<8x512xf32> -> vector<8x512xf32>
    %88 = arith.addf %86, %87 : vector<8x512xf32>
    %89 = vector.extract_strided_slice %88 {offsets = [0, 0], sizes = [8, 128], strides = [1, 1]} : vector<8x512xf32> to vector<8x128xf32>
    %90 = arith.negf %89 : vector<8x128xf32>
    %91 = math.exp %90 : vector<8x128xf32>
    %cst_32 = arith.constant 1.000000e+00 : f32
    %92 = vector.broadcast %cst_32 : f32 to vector<8x128xf32>
    %93 = arith.addf %92, %91 : vector<8x128xf32>
    %94 = arith.divf %92, %93 : vector<8x128xf32>
    %95 = vector.extract_strided_slice %88 {offsets = [0, 128], sizes = [8, 128], strides = [1, 1]} : vector<8x512xf32> to vector<8x128xf32>
    %96 = arith.negf %95 : vector<8x128xf32>
    %97 = math.exp %96 : vector<8x128xf32>
    %cst_33 = arith.constant 1.000000e+00 : f32
    %98 = vector.broadcast %cst_33 : f32 to vector<8x128xf32>
    %99 = arith.addf %98, %97 : vector<8x128xf32>
    %100 = arith.divf %98, %99 : vector<8x128xf32>
    %101 = vector.extract_strided_slice %88 {offsets = [0, 256], sizes = [8, 128], strides = [1, 1]} : vector<8x512xf32> to vector<8x128xf32>
    %102 = math.tanh %101 : vector<8x128xf32>
    %103 = vector.extract_strided_slice %88 {offsets = [0, 384], sizes = [8, 128], strides = [1, 1]} : vector<8x512xf32> to vector<8x128xf32>
    %104 = arith.negf %103 : vector<8x128xf32>
    %105 = math.exp %104 : vector<8x128xf32>
    %cst_34 = arith.constant 1.000000e+00 : f32
    %106 = vector.broadcast %cst_34 : f32 to vector<8x128xf32>
    %107 = arith.addf %106, %105 : vector<8x128xf32>
    %108 = arith.divf %106, %107 : vector<8x128xf32>
    %109 = arith.mulf %100, %48 : vector<8x128xf32>
    %110 = arith.mulf %94, %102 : vector<8x128xf32>
    %111 = arith.addf %109, %110 : vector<8x128xf32>
    %112 = math.tanh %111 : vector<8x128xf32>
    %113 = arith.mulf %108, %112 : vector<8x128xf32>
    %114 = arith.select %85, %113, %47 : vector<8x128xi1>, vector<8x128xf32>
    %115 = arith.select %85, %111, %48 : vector<8x128xi1>, vector<8x128xf32>
    %116 = tpu.concatenate %113, %78 in 1 : vector<8x128xf32>, vector<8x128xf32> -> vector<8x256xf32>
    %cst_35 = arith.constant dense<0.000000e+00> : vector<8x512xf32>
    %117 = tpu.matmul %116, %8, %cst_35 {dimension_numbers = #tpu.dot_dimension_numbers<[1], [0], [0], [1], [0, 0, 1, 1], [], []>} : vector<8x256xf32>, vector<256x512xf32>, vector<8x512xf32> -> vector<8x512xf32>
    %118 = vector.broadcast %9 : vector<1x512xf32> to vector<8x512xf32>
    %119 = arith.addf %117, %118 : vector<8x512xf32>
    %120 = vector.extract_strided_slice %119 {offsets = [0, 0], sizes = [8, 128], strides = [1, 1]} : vector<8x512xf32> to vector<8x128xf32>
    %121 = arith.negf %120 : vector<8x128xf32>
    %122 = math.exp %121 : vector<8x128xf32>
    %cst_36 = arith.constant 1.000000e+00 : f32
    %123 = vector.broadcast %cst_36 : f32 to vector<8x128xf32>
    %124 = arith.addf %123, %122 : vector<8x128xf32>
    %125 = arith.divf %123, %124 : vector<8x128xf32>
    %126 = vector.extract_strided_slice %119 {offsets = [0, 128], sizes = [8, 128], strides = [1, 1]} : vector<8x512xf32> to vector<8x128xf32>
    %127 = arith.negf %126 : vector<8x128xf32>
    %128 = math.exp %127 : vector<8x128xf32>
    %cst_37 = arith.constant 1.000000e+00 : f32
    %129 = vector.broadcast %cst_37 : f32 to vector<8x128xf32>
    %130 = arith.addf %129, %128 : vector<8x128xf32>
    %131 = arith.divf %129, %130 : vector<8x128xf32>
    %132 = vector.extract_strided_slice %119 {offsets = [0, 256], sizes = [8, 128], strides = [1, 1]} : vector<8x512xf32> to vector<8x128xf32>
    %133 = math.tanh %132 : vector<8x128xf32>
    %134 = vector.extract_strided_slice %119 {offsets = [0, 384], sizes = [8, 128], strides = [1, 1]} : vector<8x512xf32> to vector<8x128xf32>
    %135 = arith.negf %134 : vector<8x128xf32>
    %136 = math.exp %135 : vector<8x128xf32>
    %cst_38 = arith.constant 1.000000e+00 : f32
    %137 = vector.broadcast %cst_38 : f32 to vector<8x128xf32>
    %138 = arith.addf %137, %136 : vector<8x128xf32>
    %139 = arith.divf %137, %138 : vector<8x128xf32>
    %140 = arith.mulf %131, %79 : vector<8x128xf32>
    %141 = arith.mulf %125, %133 : vector<8x128xf32>
    %142 = arith.addf %140, %141 : vector<8x128xf32>
    %143 = math.tanh %142 : vector<8x128xf32>
    %144 = arith.mulf %139, %143 : vector<8x128xf32>
    %145 = arith.select %85, %144, %78 : vector<8x128xi1>, vector<8x128xf32>
    %146 = arith.select %85, %142, %79 : vector<8x128xi1>, vector<8x128xf32>
    %cst_39 = arith.constant 0.000000e+00 : f32
    %147 = vector.broadcast %cst_39 : f32 to vector<8x128xf32>
    %148 = arith.select %85, %144, %147 : vector<8x128xi1>, vector<8x128xf32>
    %c2_i32 = arith.constant 2 : i32
    %149 = vector.broadcast %c2_i32 : i32 to vector<8x1xi32>
    %150 = arith.cmpi sgt, %10, %149 : vector<8x1xi32>
    %151 = vector.shape_cast %150 : vector<8x1xi1> to vector<8x1xi1>
    %152 = vector.broadcast %151 : vector<8x1xi1> to vector<8x128xi1>
    %c16 = arith.constant 16 : index
    %c0_40 = arith.constant 0 : index
    %153 = vector.load %arg10[%c16, %c0_40] : memref<80x512xf32, #tpu.memory_space<vmem>>, vector<8x512xf32>
    %cst_41 = arith.constant dense<0.000000e+00> : vector<8x512xf32>
    %154 = tpu.matmul %114, %7, %cst_41 {dimension_numbers = #tpu.dot_dimension_numbers<[1], [0], [0], [1], [0, 0, 1, 1], [], []>} : vector<8x128xf32>, vector<128x512xf32>, vector<8x512xf32> -> vector<8x512xf32>
    %155 = arith.addf %153, %154 : vector<8x512xf32>
    %156 = vector.extract_strided_slice %155 {offsets = [0, 0], sizes = [8, 128], strides = [1, 1]} : vector<8x512xf32> to vector<8x128xf32>
    %157 = arith.negf %156 : vector<8x128xf32>
    %158 = math.exp %157 : vector<8x128xf32>
    %cst_42 = arith.constant 1.000000e+00 : f32
    %159 = vector.broadcast %cst_42 : f32 to vector<8x128xf32>
    %160 = arith.addf %159, %158 : vector<8x128xf32>
    %161 = arith.divf %159, %160 : vector<8x128xf32>
    %162 = vector.extract_strided_slice %155 {offsets = [0, 128], sizes = [8, 128], strides = [1, 1]} : vector<8x512xf32> to vector<8x128xf32>
    %163 = arith.negf %162 : vector<8x128xf32>
    %164 = math.exp %163 : vector<8x128xf32>
    %cst_43 = arith.constant 1.000000e+00 : f32
    %165 = vector.broadcast %cst_43 : f32 to vector<8x128xf32>
    %166 = arith.addf %165, %164 : vector<8x128xf32>
    %167 = arith.divf %165, %166 : vector<8x128xf32>
    %168 = vector.extract_strided_slice %155 {offsets = [0, 256], sizes = [8, 128], strides = [1, 1]} : vector<8x512xf32> to vector<8x128xf32>
    %169 = math.tanh %168 : vector<8x128xf32>
    %170 = vector.extract_strided_slice %155 {offsets = [0, 384], sizes = [8, 128], strides = [1, 1]} : vector<8x512xf32> to vector<8x128xf32>
    %171 = arith.negf %170 : vector<8x128xf32>
    %172 = math.exp %171 : vector<8x128xf32>
    %cst_44 = arith.constant 1.000000e+00 : f32
    %173 = vector.broadcast %cst_44 : f32 to vector<8x128xf32>
    %174 = arith.addf %173, %172 : vector<8x128xf32>
    %175 = arith.divf %173, %174 : vector<8x128xf32>
    %176 = arith.mulf %167, %115 : vector<8x128xf32>
    %177 = arith.mulf %161, %169 : vector<8x128xf32>
    %178 = arith.addf %176, %177 : vector<8x128xf32>
    %179 = math.tanh %178 : vector<8x128xf32>
    %180 = arith.mulf %175, %179 : vector<8x128xf32>
    %181 = arith.select %152, %180, %114 : vector<8x128xi1>, vector<8x128xf32>
    %182 = arith.select %152, %178, %115 : vector<8x128xi1>, vector<8x128xf32>
    %183 = tpu.concatenate %180, %145 in 1 : vector<8x128xf32>, vector<8x128xf32> -> vector<8x256xf32>
    %cst_45 = arith.constant dense<0.000000e+00> : vector<8x512xf32>
    %184 = tpu.matmul %183, %8, %cst_45 {dimension_numbers = #tpu.dot_dimension_numbers<[1], [0], [0], [1], [0, 0, 1, 1], [], []>} : vector<8x256xf32>, vector<256x512xf32>, vector<8x512xf32> -> vector<8x512xf32>
    %185 = vector.broadcast %9 : vector<1x512xf32> to vector<8x512xf32>
    %186 = arith.addf %184, %185 : vector<8x512xf32>
    %187 = vector.extract_strided_slice %186 {offsets = [0, 0], sizes = [8, 128], strides = [1, 1]} : vector<8x512xf32> to vector<8x128xf32>
    %188 = arith.negf %187 : vector<8x128xf32>
    %189 = math.exp %188 : vector<8x128xf32>
    %cst_46 = arith.constant 1.000000e+00 : f32
    %190 = vector.broadcast %cst_46 : f32 to vector<8x128xf32>
    %191 = arith.addf %190, %189 : vector<8x128xf32>
    %192 = arith.divf %190, %191 : vector<8x128xf32>
    %193 = vector.extract_strided_slice %186 {offsets = [0, 128], sizes = [8, 128], strides = [1, 1]} : vector<8x512xf32> to vector<8x128xf32>
    %194 = arith.negf %193 : vector<8x128xf32>
    %195 = math.exp %194 : vector<8x128xf32>
    %cst_47 = arith.constant 1.000000e+00 : f32
    %196 = vector.broadcast %cst_47 : f32 to vector<8x128xf32>
    %197 = arith.addf %196, %195 : vector<8x128xf32>
    %198 = arith.divf %196, %197 : vector<8x128xf32>
    %199 = vector.extract_strided_slice %186 {offsets = [0, 256], sizes = [8, 128], strides = [1, 1]} : vector<8x512xf32> to vector<8x128xf32>
    %200 = math.tanh %199 : vector<8x128xf32>
    %201 = vector.extract_strided_slice %186 {offsets = [0, 384], sizes = [8, 128], strides = [1, 1]} : vector<8x512xf32> to vector<8x128xf32>
    %202 = arith.negf %201 : vector<8x128xf32>
    %203 = math.exp %202 : vector<8x128xf32>
    %cst_48 = arith.constant 1.000000e+00 : f32
    %204 = vector.broadcast %cst_48 : f32 to vector<8x128xf32>
    %205 = arith.addf %204, %203 : vector<8x128xf32>
    %206 = arith.divf %204, %205 : vector<8x128xf32>
    %207 = arith.mulf %198, %146 : vector<8x128xf32>
    %208 = arith.mulf %192, %200 : vector<8x128xf32>
    %209 = arith.addf %207, %208 : vector<8x128xf32>
    %210 = math.tanh %209 : vector<8x128xf32>
    %211 = arith.mulf %206, %210 : vector<8x128xf32>
    %212 = arith.select %152, %211, %145 : vector<8x128xi1>, vector<8x128xf32>
    %213 = arith.select %152, %209, %146 : vector<8x128xi1>, vector<8x128xf32>
    %cst_49 = arith.constant 0.000000e+00 : f32
    %214 = vector.broadcast %cst_49 : f32 to vector<8x128xf32>
    %215 = arith.select %152, %211, %214 : vector<8x128xi1>, vector<8x128xf32>
    %c3_i32 = arith.constant 3 : i32
    %216 = vector.broadcast %c3_i32 : i32 to vector<8x1xi32>
    %217 = arith.cmpi sgt, %10, %216 : vector<8x1xi32>
    %218 = vector.shape_cast %217 : vector<8x1xi1> to vector<8x1xi1>
    %219 = vector.broadcast %218 : vector<8x1xi1> to vector<8x128xi1>
    %c24 = arith.constant 24 : index
    %c0_50 = arith.constant 0 : index
    %220 = vector.load %arg10[%c24, %c0_50] : memref<80x512xf32, #tpu.memory_space<vmem>>, vector<8x512xf32>
    %cst_51 = arith.constant dense<0.000000e+00> : vector<8x512xf32>
    %221 = tpu.matmul %181, %7, %cst_51 {dimension_numbers = #tpu.dot_dimension_numbers<[1], [0], [0], [1], [0, 0, 1, 1], [], []>} : vector<8x128xf32>, vector<128x512xf32>, vector<8x512xf32> -> vector<8x512xf32>
    %222 = arith.addf %220, %221 : vector<8x512xf32>
    %223 = vector.extract_strided_slice %222 {offsets = [0, 0], sizes = [8, 128], strides = [1, 1]} : vector<8x512xf32> to vector<8x128xf32>
    %224 = arith.negf %223 : vector<8x128xf32>
    %225 = math.exp %224 : vector<8x128xf32>
    %cst_52 = arith.constant 1.000000e+00 : f32
    %226 = vector.broadcast %cst_52 : f32 to vector<8x128xf32>
    %227 = arith.addf %226, %225 : vector<8x128xf32>
    %228 = arith.divf %226, %227 : vector<8x128xf32>
    %229 = vector.extract_strided_slice %222 {offsets = [0, 128], sizes = [8, 128], strides = [1, 1]} : vector<8x512xf32> to vector<8x128xf32>
    %230 = arith.negf %229 : vector<8x128xf32>
    %231 = math.exp %230 : vector<8x128xf32>
    %cst_53 = arith.constant 1.000000e+00 : f32
    %232 = vector.broadcast %cst_53 : f32 to vector<8x128xf32>
    %233 = arith.addf %232, %231 : vector<8x128xf32>
    %234 = arith.divf %232, %233 : vector<8x128xf32>
    %235 = vector.extract_strided_slice %222 {offsets = [0, 256], sizes = [8, 128], strides = [1, 1]} : vector<8x512xf32> to vector<8x128xf32>
    %236 = math.tanh %235 : vector<8x128xf32>
    %237 = vector.extract_strided_slice %222 {offsets = [0, 384], sizes = [8, 128], strides = [1, 1]} : vector<8x512xf32> to vector<8x128xf32>
    %238 = arith.negf %237 : vector<8x128xf32>
    %239 = math.exp %238 : vector<8x128xf32>
    %cst_54 = arith.constant 1.000000e+00 : f32
    %240 = vector.broadcast %cst_54 : f32 to vector<8x128xf32>
    %241 = arith.addf %240, %239 : vector<8x128xf32>
    %242 = arith.divf %240, %241 : vector<8x128xf32>
    %243 = arith.mulf %234, %182 : vector<8x128xf32>
    %244 = arith.mulf %228, %236 : vector<8x128xf32>
    %245 = arith.addf %243, %244 : vector<8x128xf32>
    %246 = math.tanh %245 : vector<8x128xf32>
    %247 = arith.mulf %242, %246 : vector<8x128xf32>
    %248 = arith.select %219, %247, %181 : vector<8x128xi1>, vector<8x128xf32>
    %249 = arith.select %219, %245, %182 : vector<8x128xi1>, vector<8x128xf32>
    %250 = tpu.concatenate %247, %212 in 1 : vector<8x128xf32>, vector<8x128xf32> -> vector<8x256xf32>
    %cst_55 = arith.constant dense<0.000000e+00> : vector<8x512xf32>
    %251 = tpu.matmul %250, %8, %cst_55 {dimension_numbers = #tpu.dot_dimension_numbers<[1], [0], [0], [1], [0, 0, 1, 1], [], []>} : vector<8x256xf32>, vector<256x512xf32>, vector<8x512xf32> -> vector<8x512xf32>
    %252 = vector.broadcast %9 : vector<1x512xf32> to vector<8x512xf32>
    %253 = arith.addf %251, %252 : vector<8x512xf32>
    %254 = vector.extract_strided_slice %253 {offsets = [0, 0], sizes = [8, 128], strides = [1, 1]} : vector<8x512xf32> to vector<8x128xf32>
    %255 = arith.negf %254 : vector<8x128xf32>
    %256 = math.exp %255 : vector<8x128xf32>
    %cst_56 = arith.constant 1.000000e+00 : f32
    %257 = vector.broadcast %cst_56 : f32 to vector<8x128xf32>
    %258 = arith.addf %257, %256 : vector<8x128xf32>
    %259 = arith.divf %257, %258 : vector<8x128xf32>
    %260 = vector.extract_strided_slice %253 {offsets = [0, 128], sizes = [8, 128], strides = [1, 1]} : vector<8x512xf32> to vector<8x128xf32>
    %261 = arith.negf %260 : vector<8x128xf32>
    %262 = math.exp %261 : vector<8x128xf32>
    %cst_57 = arith.constant 1.000000e+00 : f32
    %263 = vector.broadcast %cst_57 : f32 to vector<8x128xf32>
    %264 = arith.addf %263, %262 : vector<8x128xf32>
    %265 = arith.divf %263, %264 : vector<8x128xf32>
    %266 = vector.extract_strided_slice %253 {offsets = [0, 256], sizes = [8, 128], strides = [1, 1]} : vector<8x512xf32> to vector<8x128xf32>
    %267 = math.tanh %266 : vector<8x128xf32>
    %268 = vector.extract_strided_slice %253 {offsets = [0, 384], sizes = [8, 128], strides = [1, 1]} : vector<8x512xf32> to vector<8x128xf32>
    %269 = arith.negf %268 : vector<8x128xf32>
    %270 = math.exp %269 : vector<8x128xf32>
    %cst_58 = arith.constant 1.000000e+00 : f32
    %271 = vector.broadcast %cst_58 : f32 to vector<8x128xf32>
    %272 = arith.addf %271, %270 : vector<8x128xf32>
    %273 = arith.divf %271, %272 : vector<8x128xf32>
    %274 = arith.mulf %265, %213 : vector<8x128xf32>
    %275 = arith.mulf %259, %267 : vector<8x128xf32>
    %276 = arith.addf %274, %275 : vector<8x128xf32>
    %277 = math.tanh %276 : vector<8x128xf32>
    %278 = arith.mulf %273, %277 : vector<8x128xf32>
    %279 = arith.select %219, %278, %212 : vector<8x128xi1>, vector<8x128xf32>
    %280 = arith.select %219, %276, %213 : vector<8x128xi1>, vector<8x128xf32>
    %c4_i32 = arith.constant 4 : i32
    %281 = vector.broadcast %c4_i32 : i32 to vector<8x1xi32>
    %282 = arith.cmpi sgt, %10, %281 : vector<8x1xi32>
    %283 = vector.shape_cast %282 : vector<8x1xi1> to vector<8x1xi1>
    %284 = vector.broadcast %283 : vector<8x1xi1> to vector<8x128xi1>
    %c32 = arith.constant 32 : index
    %c0_59 = arith.constant 0 : index
    %285 = vector.load %arg10[%c32, %c0_59] : memref<80x512xf32, #tpu.memory_space<vmem>>, vector<8x512xf32>
    %cst_60 = arith.constant dense<0.000000e+00> : vector<8x512xf32>
    %286 = tpu.matmul %248, %7, %cst_60 {dimension_numbers = #tpu.dot_dimension_numbers<[1], [0], [0], [1], [0, 0, 1, 1], [], []>} : vector<8x128xf32>, vector<128x512xf32>, vector<8x512xf32> -> vector<8x512xf32>
    %287 = arith.addf %285, %286 : vector<8x512xf32>
    %288 = vector.extract_strided_slice %287 {offsets = [0, 0], sizes = [8, 128], strides = [1, 1]} : vector<8x512xf32> to vector<8x128xf32>
    %289 = arith.negf %288 : vector<8x128xf32>
    %290 = math.exp %289 : vector<8x128xf32>
    %cst_61 = arith.constant 1.000000e+00 : f32
    %291 = vector.broadcast %cst_61 : f32 to vector<8x128xf32>
    %292 = arith.addf %291, %290 : vector<8x128xf32>
    %293 = arith.divf %291, %292 : vector<8x128xf32>
    %294 = vector.extract_strided_slice %287 {offsets = [0, 128], sizes = [8, 128], strides = [1, 1]} : vector<8x512xf32> to vector<8x128xf32>
    %295 = arith.negf %294 : vector<8x128xf32>
    %296 = math.exp %295 : vector<8x128xf32>
    %cst_62 = arith.constant 1.000000e+00 : f32
    %297 = vector.broadcast %cst_62 : f32 to vector<8x128xf32>
    %298 = arith.addf %297, %296 : vector<8x128xf32>
    %299 = arith.divf %297, %298 : vector<8x128xf32>
    %300 = vector.extract_strided_slice %287 {offsets = [0, 256], sizes = [8, 128], strides = [1, 1]} : vector<8x512xf32> to vector<8x128xf32>
    %301 = math.tanh %300 : vector<8x128xf32>
    %302 = vector.extract_strided_slice %287 {offsets = [0, 384], sizes = [8, 128], strides = [1, 1]} : vector<8x512xf32> to vector<8x128xf32>
    %303 = arith.negf %302 : vector<8x128xf32>
    %304 = math.exp %303 : vector<8x128xf32>
    %cst_63 = arith.constant 1.000000e+00 : f32
    %305 = vector.broadcast %cst_63 : f32 to vector<8x128xf32>
    %306 = arith.addf %305, %304 : vector<8x128xf32>
    %307 = arith.divf %305, %306 : vector<8x128xf32>
    %308 = arith.mulf %299, %249 : vector<8x128xf32>
    %309 = arith.mulf %293, %301 : vector<8x128xf32>
    %310 = arith.addf %308, %309 : vector<8x128xf32>
    %311 = math.tanh %310 : vector<8x128xf32>
    %312 = arith.mulf %307, %311 : vector<8x128xf32>
    %313 = arith.select %284, %312, %248 : vector<8x128xi1>, vector<8x128xf32>
    %314 = arith.select %284, %310, %249 : vector<8x128xi1>, vector<8x128xf32>
    %315 = tpu.concatenate %312, %279 in 1 : vector<8x128xf32>, vector<8x128xf32> -> vector<8x256xf32>
    %cst_64 = arith.constant dense<0.000000e+00> : vector<8x512xf32>
    %316 = tpu.matmul %315, %8, %cst_64 {dimension_numbers = #tpu.dot_dimension_numbers<[1], [0], [0], [1], [0, 0, 1, 1], [], []>} : vector<8x256xf32>, vector<256x512xf32>, vector<8x512xf32> -> vector<8x512xf32>
    %317 = vector.broadcast %9 : vector<1x512xf32> to vector<8x512xf32>
    %318 = arith.addf %316, %317 : vector<8x512xf32>
    %319 = vector.extract_strided_slice %318 {offsets = [0, 0], sizes = [8, 128], strides = [1, 1]} : vector<8x512xf32> to vector<8x128xf32>
    %320 = arith.negf %319 : vector<8x128xf32>
    %321 = math.exp %320 : vector<8x128xf32>
    %cst_65 = arith.constant 1.000000e+00 : f32
    %322 = vector.broadcast %cst_65 : f32 to vector<8x128xf32>
    %323 = arith.addf %322, %321 : vector<8x128xf32>
    %324 = arith.divf %322, %323 : vector<8x128xf32>
    %325 = vector.extract_strided_slice %318 {offsets = [0, 128], sizes = [8, 128], strides = [1, 1]} : vector<8x512xf32> to vector<8x128xf32>
    %326 = arith.negf %325 : vector<8x128xf32>
    %327 = math.exp %326 : vector<8x128xf32>
    %cst_66 = arith.constant 1.000000e+00 : f32
    %328 = vector.broadcast %cst_66 : f32 to vector<8x128xf32>
    %329 = arith.addf %328, %327 : vector<8x128xf32>
    %330 = arith.divf %328, %329 : vector<8x128xf32>
    %331 = vector.extract_strided_slice %318 {offsets = [0, 256], sizes = [8, 128], strides = [1, 1]} : vector<8x512xf32> to vector<8x128xf32>
    %332 = math.tanh %331 : vector<8x128xf32>
    %333 = vector.extract_strided_slice %318 {offsets = [0, 384], sizes = [8, 128], strides = [1, 1]} : vector<8x512xf32> to vector<8x128xf32>
    %334 = arith.negf %333 : vector<8x128xf32>
    %335 = math.exp %334 : vector<8x128xf32>
    %cst_67 = arith.constant 1.000000e+00 : f32
    %336 = vector.broadcast %cst_67 : f32 to vector<8x128xf32>
    %337 = arith.addf %336, %335 : vector<8x128xf32>
    %338 = arith.divf %336, %337 : vector<8x128xf32>
    %339 = arith.mulf %330, %280 : vector<8x128xf32>
    %340 = arith.mulf %324, %332 : vector<8x128xf32>
    %341 = arith.addf %339, %340 : vector<8x128xf32>
    %342 = math.tanh %341 : vector<8x128xf32>
    %343 = arith.mulf %338, %342 : vector<8x128xf32>
    %344 = arith.select %284, %343, %279 : vector<8x128xi1>, vector<8x128xf32>
    %345 = arith.select %284, %341, %280 : vector<8x128xi1>, vector<8x128xf32>
    %c5_i32 = arith.constant 5 : i32
    %346 = vector.broadcast %c5_i32 : i32 to vector<8x1xi32>
    %347 = arith.cmpi sgt, %10, %346 : vector<8x1xi32>
    %348 = vector.shape_cast %347 : vector<8x1xi1> to vector<8x1xi1>
    %349 = vector.broadcast %348 : vector<8x1xi1> to vector<8x128xi1>
    %c40 = arith.constant 40 : index
    %c0_68 = arith.constant 0 : index
    %350 = vector.load %arg10[%c40, %c0_68] : memref<80x512xf32, #tpu.memory_space<vmem>>, vector<8x512xf32>
    %cst_69 = arith.constant dense<0.000000e+00> : vector<8x512xf32>
    %351 = tpu.matmul %313, %7, %cst_69 {dimension_numbers = #tpu.dot_dimension_numbers<[1], [0], [0], [1], [0, 0, 1, 1], [], []>} : vector<8x128xf32>, vector<128x512xf32>, vector<8x512xf32> -> vector<8x512xf32>
    %352 = arith.addf %350, %351 : vector<8x512xf32>
    %353 = vector.extract_strided_slice %352 {offsets = [0, 0], sizes = [8, 128], strides = [1, 1]} : vector<8x512xf32> to vector<8x128xf32>
    %354 = arith.negf %353 : vector<8x128xf32>
    %355 = math.exp %354 : vector<8x128xf32>
    %cst_70 = arith.constant 1.000000e+00 : f32
    %356 = vector.broadcast %cst_70 : f32 to vector<8x128xf32>
    %357 = arith.addf %356, %355 : vector<8x128xf32>
    %358 = arith.divf %356, %357 : vector<8x128xf32>
    %359 = vector.extract_strided_slice %352 {offsets = [0, 128], sizes = [8, 128], strides = [1, 1]} : vector<8x512xf32> to vector<8x128xf32>
    %360 = arith.negf %359 : vector<8x128xf32>
    %361 = math.exp %360 : vector<8x128xf32>
    %cst_71 = arith.constant 1.000000e+00 : f32
    %362 = vector.broadcast %cst_71 : f32 to vector<8x128xf32>
    %363 = arith.addf %362, %361 : vector<8x128xf32>
    %364 = arith.divf %362, %363 : vector<8x128xf32>
    %365 = vector.extract_strided_slice %352 {offsets = [0, 256], sizes = [8, 128], strides = [1, 1]} : vector<8x512xf32> to vector<8x128xf32>
    %366 = math.tanh %365 : vector<8x128xf32>
    %367 = vector.extract_strided_slice %352 {offsets = [0, 384], sizes = [8, 128], strides = [1, 1]} : vector<8x512xf32> to vector<8x128xf32>
    %368 = arith.negf %367 : vector<8x128xf32>
    %369 = math.exp %368 : vector<8x128xf32>
    %cst_72 = arith.constant 1.000000e+00 : f32
    %370 = vector.broadcast %cst_72 : f32 to vector<8x128xf32>
    %371 = arith.addf %370, %369 : vector<8x128xf32>
    %372 = arith.divf %370, %371 : vector<8x128xf32>
    %373 = arith.mulf %364, %314 : vector<8x128xf32>
    %374 = arith.mulf %358, %366 : vector<8x128xf32>
    %375 = arith.addf %373, %374 : vector<8x128xf32>
    %376 = math.tanh %375 : vector<8x128xf32>
    %377 = arith.mulf %372, %376 : vector<8x128xf32>
    %378 = arith.select %349, %377, %313 : vector<8x128xi1>, vector<8x128xf32>
    %379 = arith.select %349, %375, %314 : vector<8x128xi1>, vector<8x128xf32>
    %380 = tpu.concatenate %377, %344 in 1 : vector<8x128xf32>, vector<8x128xf32> -> vector<8x256xf32>
    %cst_73 = arith.constant dense<0.000000e+00> : vector<8x512xf32>
    %381 = tpu.matmul %380, %8, %cst_73 {dimension_numbers = #tpu.dot_dimension_numbers<[1], [0], [0], [1], [0, 0, 1, 1], [], []>} : vector<8x256xf32>, vector<256x512xf32>, vector<8x512xf32> -> vector<8x512xf32>
    %382 = vector.broadcast %9 : vector<1x512xf32> to vector<8x512xf32>
    %383 = arith.addf %381, %382 : vector<8x512xf32>
    %384 = vector.extract_strided_slice %383 {offsets = [0, 0], sizes = [8, 128], strides = [1, 1]} : vector<8x512xf32> to vector<8x128xf32>
    %385 = arith.negf %384 : vector<8x128xf32>
    %386 = math.exp %385 : vector<8x128xf32>
    %cst_74 = arith.constant 1.000000e+00 : f32
    %387 = vector.broadcast %cst_74 : f32 to vector<8x128xf32>
    %388 = arith.addf %387, %386 : vector<8x128xf32>
    %389 = arith.divf %387, %388 : vector<8x128xf32>
    %390 = vector.extract_strided_slice %383 {offsets = [0, 128], sizes = [8, 128], strides = [1, 1]} : vector<8x512xf32> to vector<8x128xf32>
    %391 = arith.negf %390 : vector<8x128xf32>
    %392 = math.exp %391 : vector<8x128xf32>
    %cst_75 = arith.constant 1.000000e+00 : f32
    %393 = vector.broadcast %cst_75 : f32 to vector<8x128xf32>
    %394 = arith.addf %393, %392 : vector<8x128xf32>
    %395 = arith.divf %393, %394 : vector<8x128xf32>
    %396 = vector.extract_strided_slice %383 {offsets = [0, 256], sizes = [8, 128], strides = [1, 1]} : vector<8x512xf32> to vector<8x128xf32>
    %397 = math.tanh %396 : vector<8x128xf32>
    %398 = vector.extract_strided_slice %383 {offsets = [0, 384], sizes = [8, 128], strides = [1, 1]} : vector<8x512xf32> to vector<8x128xf32>
    %399 = arith.negf %398 : vector<8x128xf32>
    %400 = math.exp %399 : vector<8x128xf32>
    %cst_76 = arith.constant 1.000000e+00 : f32
    %401 = vector.broadcast %cst_76 : f32 to vector<8x128xf32>
    %402 = arith.addf %401, %400 : vector<8x128xf32>
    %403 = arith.divf %401, %402 : vector<8x128xf32>
    %404 = arith.mulf %395, %345 : vector<8x128xf32>
    %405 = arith.mulf %389, %397 : vector<8x128xf32>
    %406 = arith.addf %404, %405 : vector<8x128xf32>
    %407 = math.tanh %406 : vector<8x128xf32>
    %408 = arith.mulf %403, %407 : vector<8x128xf32>
    %409 = arith.select %349, %408, %344 : vector<8x128xi1>, vector<8x128xf32>
    %410 = arith.select %349, %406, %345 : vector<8x128xi1>, vector<8x128xf32>
    %c6_i32 = arith.constant 6 : i32
    %411 = vector.broadcast %c6_i32 : i32 to vector<8x1xi32>
    %412 = arith.cmpi sgt, %10, %411 : vector<8x1xi32>
    %413 = vector.shape_cast %412 : vector<8x1xi1> to vector<8x1xi1>
    %414 = vector.broadcast %413 : vector<8x1xi1> to vector<8x128xi1>
    %c48 = arith.constant 48 : index
    %c0_77 = arith.constant 0 : index
    %415 = vector.load %arg10[%c48, %c0_77] : memref<80x512xf32, #tpu.memory_space<vmem>>, vector<8x512xf32>
    %cst_78 = arith.constant dense<0.000000e+00> : vector<8x512xf32>
    %416 = tpu.matmul %378, %7, %cst_78 {dimension_numbers = #tpu.dot_dimension_numbers<[1], [0], [0], [1], [0, 0, 1, 1], [], []>} : vector<8x128xf32>, vector<128x512xf32>, vector<8x512xf32> -> vector<8x512xf32>
    %417 = arith.addf %415, %416 : vector<8x512xf32>
    %418 = vector.extract_strided_slice %417 {offsets = [0, 0], sizes = [8, 128], strides = [1, 1]} : vector<8x512xf32> to vector<8x128xf32>
    %419 = arith.negf %418 : vector<8x128xf32>
    %420 = math.exp %419 : vector<8x128xf32>
    %cst_79 = arith.constant 1.000000e+00 : f32
    %421 = vector.broadcast %cst_79 : f32 to vector<8x128xf32>
    %422 = arith.addf %421, %420 : vector<8x128xf32>
    %423 = arith.divf %421, %422 : vector<8x128xf32>
    %424 = vector.extract_strided_slice %417 {offsets = [0, 128], sizes = [8, 128], strides = [1, 1]} : vector<8x512xf32> to vector<8x128xf32>
    %425 = arith.negf %424 : vector<8x128xf32>
    %426 = math.exp %425 : vector<8x128xf32>
    %cst_80 = arith.constant 1.000000e+00 : f32
    %427 = vector.broadcast %cst_80 : f32 to vector<8x128xf32>
    %428 = arith.addf %427, %426 : vector<8x128xf32>
    %429 = arith.divf %427, %428 : vector<8x128xf32>
    %430 = vector.extract_strided_slice %417 {offsets = [0, 256], sizes = [8, 128], strides = [1, 1]} : vector<8x512xf32> to vector<8x128xf32>
    %431 = math.tanh %430 : vector<8x128xf32>
    %432 = vector.extract_strided_slice %417 {offsets = [0, 384], sizes = [8, 128], strides = [1, 1]} : vector<8x512xf32> to vector<8x128xf32>
    %433 = arith.negf %432 : vector<8x128xf32>
    %434 = math.exp %433 : vector<8x128xf32>
    %cst_81 = arith.constant 1.000000e+00 : f32
    %435 = vector.broadcast %cst_81 : f32 to vector<8x128xf32>
    %436 = arith.addf %435, %434 : vector<8x128xf32>
    %437 = arith.divf %435, %436 : vector<8x128xf32>
    %438 = arith.mulf %429, %379 : vector<8x128xf32>
    %439 = arith.mulf %423, %431 : vector<8x128xf32>
    %440 = arith.addf %438, %439 : vector<8x128xf32>
    %441 = math.tanh %440 : vector<8x128xf32>
    %442 = arith.mulf %437, %441 : vector<8x128xf32>
    %443 = arith.select %414, %442, %378 : vector<8x128xi1>, vector<8x128xf32>
    %444 = arith.select %414, %440, %379 : vector<8x128xi1>, vector<8x128xf32>
    %445 = tpu.concatenate %442, %409 in 1 : vector<8x128xf32>, vector<8x128xf32> -> vector<8x256xf32>
    %cst_82 = arith.constant dense<0.000000e+00> : vector<8x512xf32>
    %446 = tpu.matmul %445, %8, %cst_82 {dimension_numbers = #tpu.dot_dimension_numbers<[1], [0], [0], [1], [0, 0, 1, 1], [], []>} : vector<8x256xf32>, vector<256x512xf32>, vector<8x512xf32> -> vector<8x512xf32>
    %447 = vector.broadcast %9 : vector<1x512xf32> to vector<8x512xf32>
    %448 = arith.addf %446, %447 : vector<8x512xf32>
    %449 = vector.extract_strided_slice %448 {offsets = [0, 0], sizes = [8, 128], strides = [1, 1]} : vector<8x512xf32> to vector<8x128xf32>
    %450 = arith.negf %449 : vector<8x128xf32>
    %451 = math.exp %450 : vector<8x128xf32>
    %cst_83 = arith.constant 1.000000e+00 : f32
    %452 = vector.broadcast %cst_83 : f32 to vector<8x128xf32>
    %453 = arith.addf %452, %451 : vector<8x128xf32>
    %454 = arith.divf %452, %453 : vector<8x128xf32>
    %455 = vector.extract_strided_slice %448 {offsets = [0, 128], sizes = [8, 128], strides = [1, 1]} : vector<8x512xf32> to vector<8x128xf32>
    %456 = arith.negf %455 : vector<8x128xf32>
    %457 = math.exp %456 : vector<8x128xf32>
    %cst_84 = arith.constant 1.000000e+00 : f32
    %458 = vector.broadcast %cst_84 : f32 to vector<8x128xf32>
    %459 = arith.addf %458, %457 : vector<8x128xf32>
    %460 = arith.divf %458, %459 : vector<8x128xf32>
    %461 = vector.extract_strided_slice %448 {offsets = [0, 256], sizes = [8, 128], strides = [1, 1]} : vector<8x512xf32> to vector<8x128xf32>
    %462 = math.tanh %461 : vector<8x128xf32>
    %463 = vector.extract_strided_slice %448 {offsets = [0, 384], sizes = [8, 128], strides = [1, 1]} : vector<8x512xf32> to vector<8x128xf32>
    %464 = arith.negf %463 : vector<8x128xf32>
    %465 = math.exp %464 : vector<8x128xf32>
    %cst_85 = arith.constant 1.000000e+00 : f32
    %466 = vector.broadcast %cst_85 : f32 to vector<8x128xf32>
    %467 = arith.addf %466, %465 : vector<8x128xf32>
    %468 = arith.divf %466, %467 : vector<8x128xf32>
    %469 = arith.mulf %460, %410 : vector<8x128xf32>
    %470 = arith.mulf %454, %462 : vector<8x128xf32>
    %471 = arith.addf %469, %470 : vector<8x128xf32>
    %472 = math.tanh %471 : vector<8x128xf32>
    %473 = arith.mulf %468, %472 : vector<8x128xf32>
    %474 = arith.select %414, %473, %409 : vector<8x128xi1>, vector<8x128xf32>
    %475 = arith.select %414, %471, %410 : vector<8x128xi1>, vector<8x128xf32>
    %c7_i32 = arith.constant 7 : i32
    %476 = vector.broadcast %c7_i32 : i32 to vector<8x1xi32>
    %477 = arith.cmpi sgt, %10, %476 : vector<8x1xi32>
    %478 = vector.shape_cast %477 : vector<8x1xi1> to vector<8x1xi1>
    %479 = vector.broadcast %478 : vector<8x1xi1> to vector<8x128xi1>
    %c56 = arith.constant 56 : index
    %c0_86 = arith.constant 0 : index
    %480 = vector.load %arg10[%c56, %c0_86] : memref<80x512xf32, #tpu.memory_space<vmem>>, vector<8x512xf32>
    %cst_87 = arith.constant dense<0.000000e+00> : vector<8x512xf32>
    %481 = tpu.matmul %443, %7, %cst_87 {dimension_numbers = #tpu.dot_dimension_numbers<[1], [0], [0], [1], [0, 0, 1, 1], [], []>} : vector<8x128xf32>, vector<128x512xf32>, vector<8x512xf32> -> vector<8x512xf32>
    %482 = arith.addf %480, %481 : vector<8x512xf32>
    %483 = vector.extract_strided_slice %482 {offsets = [0, 0], sizes = [8, 128], strides = [1, 1]} : vector<8x512xf32> to vector<8x128xf32>
    %484 = arith.negf %483 : vector<8x128xf32>
    %485 = math.exp %484 : vector<8x128xf32>
    %cst_88 = arith.constant 1.000000e+00 : f32
    %486 = vector.broadcast %cst_88 : f32 to vector<8x128xf32>
    %487 = arith.addf %486, %485 : vector<8x128xf32>
    %488 = arith.divf %486, %487 : vector<8x128xf32>
    %489 = vector.extract_strided_slice %482 {offsets = [0, 128], sizes = [8, 128], strides = [1, 1]} : vector<8x512xf32> to vector<8x128xf32>
    %490 = arith.negf %489 : vector<8x128xf32>
    %491 = math.exp %490 : vector<8x128xf32>
    %cst_89 = arith.constant 1.000000e+00 : f32
    %492 = vector.broadcast %cst_89 : f32 to vector<8x128xf32>
    %493 = arith.addf %492, %491 : vector<8x128xf32>
    %494 = arith.divf %492, %493 : vector<8x128xf32>
    %495 = vector.extract_strided_slice %482 {offsets = [0, 256], sizes = [8, 128], strides = [1, 1]} : vector<8x512xf32> to vector<8x128xf32>
    %496 = math.tanh %495 : vector<8x128xf32>
    %497 = vector.extract_strided_slice %482 {offsets = [0, 384], sizes = [8, 128], strides = [1, 1]} : vector<8x512xf32> to vector<8x128xf32>
    %498 = arith.negf %497 : vector<8x128xf32>
    %499 = math.exp %498 : vector<8x128xf32>
    %cst_90 = arith.constant 1.000000e+00 : f32
    %500 = vector.broadcast %cst_90 : f32 to vector<8x128xf32>
    %501 = arith.addf %500, %499 : vector<8x128xf32>
    %502 = arith.divf %500, %501 : vector<8x128xf32>
    %503 = arith.mulf %494, %444 : vector<8x128xf32>
    %504 = arith.mulf %488, %496 : vector<8x128xf32>
    %505 = arith.addf %503, %504 : vector<8x128xf32>
    %506 = math.tanh %505 : vector<8x128xf32>
    %507 = arith.mulf %502, %506 : vector<8x128xf32>
    %508 = arith.select %479, %507, %443 : vector<8x128xi1>, vector<8x128xf32>
    %509 = arith.select %479, %505, %444 : vector<8x128xi1>, vector<8x128xf32>
    %510 = tpu.concatenate %507, %474 in 1 : vector<8x128xf32>, vector<8x128xf32> -> vector<8x256xf32>
    %cst_91 = arith.constant dense<0.000000e+00> : vector<8x512xf32>
    %511 = tpu.matmul %510, %8, %cst_91 {dimension_numbers = #tpu.dot_dimension_numbers<[1], [0], [0], [1], [0, 0, 1, 1], [], []>} : vector<8x256xf32>, vector<256x512xf32>, vector<8x512xf32> -> vector<8x512xf32>
    %512 = vector.broadcast %9 : vector<1x512xf32> to vector<8x512xf32>
    %513 = arith.addf %511, %512 : vector<8x512xf32>
    %514 = vector.extract_strided_slice %513 {offsets = [0, 0], sizes = [8, 128], strides = [1, 1]} : vector<8x512xf32> to vector<8x128xf32>
    %515 = arith.negf %514 : vector<8x128xf32>
    %516 = math.exp %515 : vector<8x128xf32>
    %cst_92 = arith.constant 1.000000e+00 : f32
    %517 = vector.broadcast %cst_92 : f32 to vector<8x128xf32>
    %518 = arith.addf %517, %516 : vector<8x128xf32>
    %519 = arith.divf %517, %518 : vector<8x128xf32>
    %520 = vector.extract_strided_slice %513 {offsets = [0, 128], sizes = [8, 128], strides = [1, 1]} : vector<8x512xf32> to vector<8x128xf32>
    %521 = arith.negf %520 : vector<8x128xf32>
    %522 = math.exp %521 : vector<8x128xf32>
    %cst_93 = arith.constant 1.000000e+00 : f32
    %523 = vector.broadcast %cst_93 : f32 to vector<8x128xf32>
    %524 = arith.addf %523, %522 : vector<8x128xf32>
    %525 = arith.divf %523, %524 : vector<8x128xf32>
    %526 = vector.extract_strided_slice %513 {offsets = [0, 256], sizes = [8, 128], strides = [1, 1]} : vector<8x512xf32> to vector<8x128xf32>
    %527 = math.tanh %526 : vector<8x128xf32>
    %528 = vector.extract_strided_slice %513 {offsets = [0, 384], sizes = [8, 128], strides = [1, 1]} : vector<8x512xf32> to vector<8x128xf32>
    %529 = arith.negf %528 : vector<8x128xf32>
    %530 = math.exp %529 : vector<8x128xf32>
    %cst_94 = arith.constant 1.000000e+00 : f32
    %531 = vector.broadcast %cst_94 : f32 to vector<8x128xf32>
    %532 = arith.addf %531, %530 : vector<8x128xf32>
    %533 = arith.divf %531, %532 : vector<8x128xf32>
    %534 = arith.mulf %525, %475 : vector<8x128xf32>
    %535 = arith.mulf %519, %527 : vector<8x128xf32>
    %536 = arith.addf %534, %535 : vector<8x128xf32>
    %537 = math.tanh %536 : vector<8x128xf32>
    %538 = arith.mulf %533, %537 : vector<8x128xf32>
    %539 = arith.select %479, %538, %474 : vector<8x128xi1>, vector<8x128xf32>
    %540 = arith.select %479, %536, %475 : vector<8x128xi1>, vector<8x128xf32>
    %c8_i32 = arith.constant 8 : i32
    %541 = vector.broadcast %c8_i32 : i32 to vector<8x1xi32>
    %542 = arith.cmpi sgt, %10, %541 : vector<8x1xi32>
    %543 = vector.shape_cast %542 : vector<8x1xi1> to vector<8x1xi1>
    %544 = vector.broadcast %543 : vector<8x1xi1> to vector<8x128xi1>
    %c64 = arith.constant 64 : index
    %c0_95 = arith.constant 0 : index
    %545 = vector.load %arg10[%c64, %c0_95] : memref<80x512xf32, #tpu.memory_space<vmem>>, vector<8x512xf32>
    %cst_96 = arith.constant dense<0.000000e+00> : vector<8x512xf32>
    %546 = tpu.matmul %508, %7, %cst_96 {dimension_numbers = #tpu.dot_dimension_numbers<[1], [0], [0], [1], [0, 0, 1, 1], [], []>} : vector<8x128xf32>, vector<128x512xf32>, vector<8x512xf32> -> vector<8x512xf32>
    %547 = arith.addf %545, %546 : vector<8x512xf32>
    %548 = vector.extract_strided_slice %547 {offsets = [0, 0], sizes = [8, 128], strides = [1, 1]} : vector<8x512xf32> to vector<8x128xf32>
    %549 = arith.negf %548 : vector<8x128xf32>
    %550 = math.exp %549 : vector<8x128xf32>
    %cst_97 = arith.constant 1.000000e+00 : f32
    %551 = vector.broadcast %cst_97 : f32 to vector<8x128xf32>
    %552 = arith.addf %551, %550 : vector<8x128xf32>
    %553 = arith.divf %551, %552 : vector<8x128xf32>
    %554 = vector.extract_strided_slice %547 {offsets = [0, 128], sizes = [8, 128], strides = [1, 1]} : vector<8x512xf32> to vector<8x128xf32>
    %555 = arith.negf %554 : vector<8x128xf32>
    %556 = math.exp %555 : vector<8x128xf32>
    %cst_98 = arith.constant 1.000000e+00 : f32
    %557 = vector.broadcast %cst_98 : f32 to vector<8x128xf32>
    %558 = arith.addf %557, %556 : vector<8x128xf32>
    %559 = arith.divf %557, %558 : vector<8x128xf32>
    %560 = vector.extract_strided_slice %547 {offsets = [0, 256], sizes = [8, 128], strides = [1, 1]} : vector<8x512xf32> to vector<8x128xf32>
    %561 = math.tanh %560 : vector<8x128xf32>
    %562 = vector.extract_strided_slice %547 {offsets = [0, 384], sizes = [8, 128], strides = [1, 1]} : vector<8x512xf32> to vector<8x128xf32>
    %563 = arith.negf %562 : vector<8x128xf32>
    %564 = math.exp %563 : vector<8x128xf32>
    %cst_99 = arith.constant 1.000000e+00 : f32
    %565 = vector.broadcast %cst_99 : f32 to vector<8x128xf32>
    %566 = arith.addf %565, %564 : vector<8x128xf32>
    %567 = arith.divf %565, %566 : vector<8x128xf32>
    %568 = arith.mulf %559, %509 : vector<8x128xf32>
    %569 = arith.mulf %553, %561 : vector<8x128xf32>
    %570 = arith.addf %568, %569 : vector<8x128xf32>
    %571 = math.tanh %570 : vector<8x128xf32>
    %572 = arith.mulf %567, %571 : vector<8x128xf32>
    %573 = tpu.concatenate %572, %539 in 1 : vector<8x128xf32>, vector<8x128xf32> -> vector<8x256xf32>
    %cst_100 = arith.constant dense<0.000000e+00> : vector<8x512xf32>
    %574 = tpu.matmul %573, %8, %cst_100 {dimension_numbers = #tpu.dot_dimension_numbers<[1], [0], [0], [1], [0, 0, 1, 1], [], []>} : vector<8x256xf32>, vector<256x512xf32>, vector<8x512xf32> -> vector<8x512xf32>
    %575 = vector.broadcast %9 : vector<1x512xf32> to vector<8x512xf32>
    %576 = arith.addf %574, %575 : vector<8x512xf32>
    %577 = vector.extract_strided_slice %576 {offsets = [0, 0], sizes = [8, 128], strides = [1, 1]} : vector<8x512xf32> to vector<8x128xf32>
    %578 = arith.negf %577 : vector<8x128xf32>
    %579 = math.exp %578 : vector<8x128xf32>
    %cst_101 = arith.constant 1.000000e+00 : f32
    %580 = vector.broadcast %cst_101 : f32 to vector<8x128xf32>
    %581 = arith.addf %580, %579 : vector<8x128xf32>
    %582 = arith.divf %580, %581 : vector<8x128xf32>
    %583 = vector.extract_strided_slice %576 {offsets = [0, 128], sizes = [8, 128], strides = [1, 1]} : vector<8x512xf32> to vector<8x128xf32>
    %584 = arith.negf %583 : vector<8x128xf32>
    %585 = math.exp %584 : vector<8x128xf32>
    %cst_102 = arith.constant 1.000000e+00 : f32
    %586 = vector.broadcast %cst_102 : f32 to vector<8x128xf32>
    %587 = arith.addf %586, %585 : vector<8x128xf32>
    %588 = arith.divf %586, %587 : vector<8x128xf32>
    %589 = vector.extract_strided_slice %576 {offsets = [0, 256], sizes = [8, 128], strides = [1, 1]} : vector<8x512xf32> to vector<8x128xf32>
    %590 = math.tanh %589 : vector<8x128xf32>
    %591 = vector.extract_strided_slice %576 {offsets = [0, 384], sizes = [8, 128], strides = [1, 1]} : vector<8x512xf32> to vector<8x128xf32>
    %592 = arith.negf %591 : vector<8x128xf32>
    %593 = math.exp %592 : vector<8x128xf32>
    %cst_103 = arith.constant 1.000000e+00 : f32
    %594 = vector.broadcast %cst_103 : f32 to vector<8x128xf32>
    %595 = arith.addf %594, %593 : vector<8x128xf32>
    %596 = arith.divf %594, %595 : vector<8x128xf32>
    %597 = arith.mulf %588, %540 : vector<8x128xf32>
    %598 = arith.mulf %582, %590 : vector<8x128xf32>
    %599 = arith.addf %597, %598 : vector<8x128xf32>
    %600 = math.tanh %599 : vector<8x128xf32>
    %601 = arith.mulf %596, %600 : vector<8x128xf32>
    %602 = arith.select %544, %601, %539 : vector<8x128xi1>, vector<8x128xf32>
    %603 = tpu.concatenate %81, %148, %215, %602 in 1 : vector<8x128xf32>, vector<8x128xf32>, vector<8x128xf32>, vector<8x128xf32> -> vector<8x512xf32>
    %604 = arith.truncf %603 : vector<8x512xf32> to vector<8x512xbf16>
    %c0_104 = arith.constant 0 : index
    %c0_105 = arith.constant 0 : index
    %605 = vector.load %arg7[%c0_104, %c0_105] : memref<512x128xbf16, #tpu.memory_space<vmem>>, vector<512x128xbf16>
    %cst_106 = arith.constant dense<0.000000e+00> : vector<8x128xf32>
    %606 = tpu.matmul %604, %605, %cst_106 {dimension_numbers = #tpu.dot_dimension_numbers<[1], [0], [0], [1], [0, 0, 1, 1], [], []>} : vector<8x512xbf16>, vector<512x128xbf16>, vector<8x128xf32> -> vector<8x128xf32>
    %c0_107 = arith.constant 0 : index
    %c0_108 = arith.constant 0 : index
    %607 = vector.load %arg8[%c0_107, %c0_108] : memref<1x128xf32, #tpu.memory_space<vmem>>, vector<1x128xf32>
    %608 = vector.broadcast %607 : vector<1x128xf32> to vector<8x128xf32>
    %609 = arith.addf %606, %608 : vector<8x128xf32>
    %cst_109 = arith.constant dense<0xFF800000> : vector<8xf32>
    %610 = vector.multi_reduction <maximumf>, %609, %cst_109 [1] : vector<8x128xf32> to vector<8xf32>
    %611 = vector.shape_cast %610 : vector<8xf32> to vector<8x1xf32>
    %612 = vector.broadcast %611 : vector<8x1xf32> to vector<8x128xf32>
    %613 = arith.subf %609, %612 : vector<8x128xf32>
    %614 = math.exp %613 : vector<8x128xf32>
    %cst_110 = arith.constant dense<0.000000e+00> : vector<8xf32>
    %615 = vector.multi_reduction <add>, %614, %cst_110 [1] : vector<8x128xf32> to vector<8xf32>
    %616 = vector.shape_cast %615 : vector<8xf32> to vector<8x1xf32>
    %617 = math.log %616 : vector<8x1xf32>
    %618 = arith.addf %617, %611 : vector<8x1xf32>
    %619 = vector.broadcast %618 : vector<8x1xf32> to vector<8x128xf32>
    %620 = arith.subf %609, %619 : vector<8x128xf32>
    %c0_111 = arith.constant 0 : index
    %c0_112 = arith.constant 0 : index
    %621 = vector.load %arg9[%c0_111, %c0_112] : memref<8x128xf32, #tpu.memory_space<vmem>>, vector<8x128xf32>
    tpu.vector_store %arg9[%c0_111, %c0_112], %620 {strides = array<i32>} : memref<8x128xf32, #tpu.memory_space<vmem>>, vector<8x128xf32>,
    return
  }
}

</mosaic_0001>

<llo_original>
// kernel: tpu_custom_call.1
$region0: #{tpu_custom_call.1}
  #allocation0 [shape = 'u32[]', space=smem, size = 0x4, offset = 0x4, fixed_abs, tag = 'smem constant byte address 0x4 - core index']
  #allocation1 [shape = 'u32[72,128]{1,0:T(1,128)}', space=vmem, size = 0x9000, scoped, tag = 'internal scratch']
  #allocation2 [shape = 'f32[80,512]{1,0:T(8,128)}', space=vmem, size = 0x28000, scoped, tag = 'scratch operand']
  %s0 = inlined_call_operand.vmem [shape: bf16[80,32], index: 0, kind: input, shape index: {}]
  %s1 = inlined_call_operand.vmem [shape: s32[8,1], index: 1, kind: input, shape index: {}]
  %s2 = inlined_call_operand.vmem [shape: bf16[32,512], index: 2, kind: input, shape index: {}]
  %s3 = inlined_call_operand.hbm [shape: f32[128,512], index: 3, kind: input, shape index: {}]
  %s4 = inlined_call_operand.vmem [shape: f32[1,512], index: 4, kind: input, shape index: {}]
  %s5 = inlined_call_operand.hbm [shape: f32[256,512], index: 5, kind: input, shape index: {}]
  %s6 = inlined_call_operand.hbm [shape: f32[1,512], index: 6, kind: input, shape index: {}]
  %s7 = inlined_call_operand.hbm [shape: bf16[512,128], index: 7, kind: input, shape index: {}]
  %s8 = inlined_call_operand.vmem [shape: f32[1,128], index: 8, kind: input, shape index: {}]
  %s9 = inlined_call_operand.hbm [shape: f32[8,128], index: 9, kind: output, shape index: {}]
  %s10 = sld [smem:[#allocation0]]
  $region62: #{tpu_custom_call.1} parent=0
    _
  %s12 = ssub.s32 1, %s10
  %s13 = scalar_select 0, %s12, %s10
  $region1: #{tpu_custom_call.1} parent=0
    #allocation3 [shape = 'u8[262144]{0}', space=vmem, size = 0x40000, scoped, tag = 'input window, operand 3, single buffered']
    #allocation4 [shape = 's32[1]{0}', space=sflag, size = 0x4, scoped, tag = 'scoped memory for tpu_custom_call.1']
    #allocation5 [shape = 's32[1]{0}', space=sflag, size = 0x4, scoped, tag = 'scoped memory for tpu_custom_call.1']
    #allocation6 [shape = 'u8[524288]{0}', space=vmem, size = 0x80000, scoped, tag = 'input window, operand 5, single buffered']
    #allocation7 [shape = 's32[1]{0}', space=sflag, size = 0x4, scoped, tag = 'scoped memory for tpu_custom_call.1']
    #allocation8 [shape = 'u8[2048]{0}', space=vmem, size = 0x800, scoped, tag = 'input window, operand 6, single buffered']
    #allocation9 [shape = 'u8[131072]{0}', space=vmem, size = 0x20000, scoped, tag = 'input window, operand 7, single buffered']
    #allocation10 [shape = 's32[1]{0}', space=sflag, size = 0x4, scoped, tag = 'scoped memory for tpu_custom_call.1']
    #allocation11 [shape = 'u8[4096]{0}', space=vmem, size = 0x1000, scoped, tag = 'output window, operand 0, single buffered']
    %14 = vsyncpa [#allocation4], 0
    %15 = vsyncpa [#allocation7], 0
    %16 = vsyncpa [#allocation10], 0
    %17 = vsyncpa [#allocation5], 0
    // Predicated region
    $region2: #{tpu_custom_call.1} parent=1 // pred_check
      _
    $region3: #{tpu_custom_call.1} parent=1 // pred_check_branch
      %19 = sbr.rel (0) target = $region5
    $region4: #{tpu_custom_call.1} parent=1 // pred_region
      _
    $region5: #{tpu_custom_call.1} parent=1 // pred_fallthru
      _
    // Predicated region
    $region6: #{tpu_custom_call.1} parent=1 // pred_check
      _
    $region7: #{tpu_custom_call.1} parent=1 // pred_check_branch
      %21 = sbr.rel (0) target = $region9
    $region8: #{tpu_custom_call.1} parent=1 // pred_region
      _
    $region9: #{tpu_custom_call.1} parent=1 // pred_fallthru
      _
    // Predicated region
    $region10: #{tpu_custom_call.1} parent=1 // pred_check
      _
    $region11: #{tpu_custom_call.1} parent=1 // pred_check_branch
      %23 = sbr.rel (0) target = $region13
    $region12: #{tpu_custom_call.1} parent=1 // pred_region
      _
    $region13: #{tpu_custom_call.1} parent=1 // pred_fallthru
      _
    // Predicated region
    $region14: #{tpu_custom_call.1} parent=1 // pred_check
      _
    $region15: #{tpu_custom_call.1} parent=1 // pred_check_branch
      %25 = sbr.rel (0) target = $region17
    $region16: #{tpu_custom_call.1} parent=1 // pred_region
      %27 = vsyncadd [#allocation4], 0
      %s28 = sshll.u32 %s3, 4
      %s29 = int_to_ptr.hbm [resolvable:$true] %s28
      %s30 = sshll.u32 [#allocation3], 4
      %s31 = int_to_ptr.vmem [resolvable:$true] %s30
      %36 = dma.hbm_to_vmem [thread:$0]  %s29, 8192, %s31, [#allocation4], 512, 512, 32
    $region17: #{tpu_custom_call.1} parent=1 // pred_fallthru
      _
    // Predicated region
    $region18: #{tpu_custom_call.1} parent=1 // pred_check
      _
    $region19: #{tpu_custom_call.1} parent=1 // pred_check_branch
      %38 = sbr.rel (0) target = $region21
    $region20: #{tpu_custom_call.1} parent=1 // pred_region
      _
    $region21: #{tpu_custom_call.1} parent=1 // pred_fallthru
      _
    // Predicated region
    $region22: #{tpu_custom_call.1} parent=1 // pred_check
      _
    $region23: #{tpu_custom_call.1} parent=1 // pred_check_branch
      %40 = sbr.rel (0) target = $region25
    $region24: #{tpu_custom_call.1} parent=1 // pred_region
      %42 = vsyncadd [#allocation7], 0
      %s43 = sshll.u32 %s5, 4
      %s44 = int_to_ptr.hbm [resolvable:$true] %s43
      %s45 = sshll.u32 [#allocation6], 4
      %s46 = int_to_ptr.vmem [resolvable:$true] %s45
      %51 = dma.hbm_to_vmem [thread:$0]  %s44, 16384, %s46, [#allocation7], 512, 512, 32
    $region25: #{tpu_custom_call.1} parent=1 // pred_fallthru
      _
    // Predicated region
    $region26: #{tpu_custom_call.1} parent=1 // pred_check
      _
    $region27: #{tpu_custom_call.1} parent=1 // pred_check_branch
      %53 = sbr.rel (0) target = $region29
    $region28: #{tpu_custom_call.1} parent=1 // pred_region
      %55 = vsyncadd [#allocation7], 0
      %s57 = sshll.u32 %s6, 4
      %s58 = int_to_ptr.hbm [resolvable:$true] %s57
      %s59 = sshll.u32 [#allocation8], 4
      %s60 = int_to_ptr.vmem [resolvable:$true] %s59
      %62 = dma.hbm_to_vmem [thread:$0]  %s58, 64, %s60, [#allocation7]
    $region29: #{tpu_custom_call.1} parent=1 // pred_fallthru
      _
    // Predicated region
    $region30: #{tpu_custom_call.1} parent=1 // pred_check
      _
    $region31: #{tpu_custom_call.1} parent=1 // pred_check_branch
      %64 = sbr.rel (0) target = $region33
    $region32: #{tpu_custom_call.1} parent=1 // pred_region
      %66 = vsyncadd [#allocation10], 0
      %s67 = sshll.u32 %s7, 4
      %s68 = int_to_ptr.hbm [resolvable:$true] %s67
      %s69 = sshll.u32 [#allocation9], 4
      %s70 = int_to_ptr.vmem [resolvable:$true] %s69
      %75 = dma.hbm_to_vmem [thread:$0]  %s68, 4096, %s70, [#allocation10], 64, 64, 4
    $region33: #{tpu_custom_call.1} parent=1 // pred_fallthru
      _
    // Predicated region
    $region34: #{tpu_custom_call.1} parent=1 // pred_check
      _
    $region35: #{tpu_custom_call.1} parent=1 // pred_check_branch
      %77 = sbr.rel (0) target = $region37
    $region36: #{tpu_custom_call.1} parent=1 // pred_region
      _
    $region37: #{tpu_custom_call.1} parent=1 // pred_fallthru
      _
    // Predicated region
    $region38: #{tpu_custom_call.1} parent=1 // pred_check
      _
    $region39: #{tpu_custom_call.1} parent=1 // pred_check_branch
      %79 = sbr.rel (0) target = $region41
    $region40: #{tpu_custom_call.1} parent=1 // pred_region
      %81 = dma.done [#allocation4], 8192
    $region41: #{tpu_custom_call.1} parent=1 // pred_fallthru
      _
    // Predicated region
    $region42: #{tpu_custom_call.1} parent=1 // pred_check
      _
    $region43: #{tpu_custom_call.1} parent=1 // pred_check_branch
      %83 = sbr.rel (0) target = $region45
    $region44: #{tpu_custom_call.1} parent=1 // pred_region
      %85 = dma.done [#allocation7], 16384
    $region45: #{tpu_custom_call.1} parent=1 // pred_fallthru
      _
    // Predicated region
    $region46: #{tpu_custom_call.1} parent=1 // pred_check
      _
    $region47: #{tpu_custom_call.1} parent=1 // pred_check_branch
      %87 = sbr.rel (0) target = $region49
    $region48: #{tpu_custom_call.1} parent=1 // pred_region
      %89 = dma.done [#allocation7], 64
    $region49: #{tpu_custom_call.1} parent=1 // pred_fallthru
      _
    // Predicated region
    $region50: #{tpu_custom_call.1} parent=1 // pred_check
      _
    $region51: #{tpu_custom_call.1} parent=1 // pred_check_branch
      %91 = sbr.rel (0) target = $region53
    $region52: #{tpu_custom_call.1} parent=1 // pred_region
      %93 = dma.done [#allocation10], 4096
    $region53: #{tpu_custom_call.1} parent=1 // pred_fallthru
      _
    %v95 = vld [vmem:[%s0] sm:$0xf]
    %v96 = vld [vmem:[%s0 + $0x4] sm:$0xf]
    %v97 = vld [vmem:[%s0 + $0x8] sm:$0xf]
    %v98 = vld [vmem:[%s0 + $0xc] sm:$0xf]
    %v99 = vld [vmem:[%s0 + $0x10] sm:$0xf]
    %v100 = vld [vmem:[%s0 + $0x14] sm:$0xf]
    %v101 = vld [vmem:[%s0 + $0x18] sm:$0xf]
    %v102 = vld [vmem:[%s0 + $0x1c] sm:$0xf]
    %v103 = vld [vmem:[%s0 + $0x20] sm:$0xf]
    %v104 = vld [vmem:[%s0 + $0x24] sm:$0xf]
    %v105 = vld [vmem:[%s2] sm:$0xff]
    %v106 = vld [vmem:[%s2 + $0x8] sm:$0xff]
    %v107 = vld [vmem:[%s2 + $0x10] sm:$0xff]
    %v108 = vld [vmem:[%s2 + $0x18] sm:$0xff]
    %v109 = vld [vmem:[%s2 + $0x20] sm:$0xff]
    %v110 = vld [vmem:[%s2 + $0x28] sm:$0xff]
    %v111 = vld [vmem:[%s2 + $0x30] sm:$0xff]
    %v112 = vld [vmem:[%s2 + $0x38] sm:$0xff]
    %v113 = vld [vmem:[%s4] sm:$0xf]
    %v115 = vperm.slane %v113, 0
    %v116 = vperm.slane %v113, 1
    %v117 = vperm.slane %v113, 2
    %v118 = vperm.slane %v113, 3
    %v133 = vunpack.c.l.b16 %v95
    %v134 = vunpack.c.l.b16 %v96
    %v135 = vunpack.c.l.b16 %v97
    %v136 = vunpack.c.l.b16 %v98
    %v137 = vunpack.c.l.b16 %v99
    %v138 = vunpack.c.l.b16 %v100
    %v139 = vunpack.c.l.b16 %v101
    %v140 = vunpack.c.l.b16 %v102
    %v141 = vunpack.c.l.b16 %v103
    %v142 = vunpack.c.l.b16 %v104
    %v143 = vpack.c.b16 %v134, %v133
    %v144 = vpack.c.b16 %v136, %v135
    %v145 = vpack.c.b16 %v138, %v137
    %v146 = vpack.c.b16 %v140, %v139
    %v147 = vpack.c.b16 %v142, %v141
    %v156 = vunpack.c.l.b16 %v105
    %v157 = vunpack.c.h.b16 %v105
    %v158 = vunpack.c.l.b16 %v106
    %v159 = vunpack.c.h.b16 %v106
    %v160 = vunpack.c.l.b16 %v107
    %v161 = vunpack.c.h.b16 %v107
    %v162 = vunpack.c.l.b16 %v108
    %v163 = vunpack.c.h.b16 %v108
    %v164 = vunpack.c.l.b16 %v109
    %v165 = vunpack.c.h.b16 %v109
    %v166 = vunpack.c.l.b16 %v110
    %v167 = vunpack.c.h.b16 %v110
    %v168 = vunpack.c.l.b16 %v111
    %v169 = vunpack.c.h.b16 %v111
    %v170 = vunpack.c.l.b16 %v112
    %v171 = vunpack.c.h.b16 %v112
    %v172 = vpack.c.b16 %v160, %v156
    %v173 = vpack.c.b16 %v161, %v157
    %v174 = vpack.c.b16 %v162, %v158
    %v175 = vpack.c.b16 %v163, %v159
    %v176 = vpack.c.b16 %v168, %v164
    %v177 = vpack.c.b16 %v169, %v165
    %v178 = vpack.c.b16 %v170, %v166
    %v179 = vpack.c.b16 %v171, %v167
    %vm188 = vcmask 261120
    %v190 = vsel %vm188, %v143, 0
    %v193 = vsel %vm188, %v144, 0
    %v196 = vsel %vm188, %v145, 0
    %v199 = vsel %vm188, %v146, 0
    %v202 = vsel %vm188, %v147, 0
    %204 = vmatpush.bf16.msra.mxu0 0
    %205 = vmatpush.bf16.msra.mxu0 0
    %206 = vmatpush.bf16.msra.mxu0 0
    %207 = vmatpush.bf16.msra.mxu0 0
    %208 = vmatpush.bf16.msra.mxu0 0
    %209 = vmatpush.bf16.msra.mxu0 0
    %210 = vmatpush.bf16.msra.mxu0 %v176
    %211 = vmatpush.bf16.msra.mxu0 %v172
    %212 = vmatmul.bf16.gmra.mxu0 %v190
    %v213 = vpop.f32.mrf.mxu0
    %v214 = vadd.f32 %v115, %v213
    %v215 = vpop.f32.mrf.mxu0
    %v216 = vadd.f32 %v115, %v215
    %217 = vmatmul.bf16.gmra.mxu0 %v193
    %v218 = vpop.f32.mrf.mxu0
    %v219 = vadd.f32 %v115, %v218
    %v220 = vpop.f32.mrf.mxu0
    %v221 = vadd.f32 %v115, %v220
    %222 = vmatmul.bf16.gmra.mxu0 %v196
    %v223 = vpop.f32.mrf.mxu0
    %v224 = vadd.f32 %v115, %v223
    %v225 = vpop.f32.mrf.mxu0
    %v226 = vadd.f32 %v115, %v225
    %227 = vmatmul.bf16.gmra.mxu0 %v199
    %v228 = vpop.f32.mrf.mxu0
    %v229 = vadd.f32 %v115, %v228
    %v230 = vpop.f32.mrf.mxu0
    %v231 = vadd.f32 %v115, %v230
    %232 = vmatmul.bf16.gmra.mxu0 %v202
    %v233 = vpop.f32.mrf.mxu0
    %v234 = vadd.f32 %v115, %v233
    %v235 = vpop.f32.mrf.mxu0
    %v236 = vadd.f32 %v115, %v235
    %237 = vdwg.mxu0
    %238 = vmatpush.bf16.msra.mxu0 0
    %239 = vmatpush.bf16.msra.mxu0 0
    %240 = vmatpush.bf16.msra.mxu0 0
    %241 = vmatpush.bf16.msra.mxu0 0
    %242 = vmatpush.bf16.msra.mxu0 0
    %243 = vmatpush.bf16.msra.mxu0 0
    %244 = vmatpush.bf16.msra.mxu0 %v177
    %245 = vmatpush.bf16.msra.mxu0 %v173
    %246 = vmatmul.bf16.gmra.mxu0 %v190
    %v247 = vpop.f32.mrf.mxu0
    %v248 = vadd.f32 %v116, %v247
    %v249 = vpop.f32.mrf.mxu0
    %v250 = vadd.f32 %v116, %v249
    %251 = vmatmul.bf16.gmra.mxu0 %v193
    %v252 = vpop.f32.mrf.mxu0
    %v253 = vadd.f32 %v116, %v252
    %v254 = vpop.f32.mrf.mxu0
    %v255 = vadd.f32 %v116, %v254
    %256 = vmatmul.bf16.gmra.mxu0 %v196
    %v257 = vpop.f32.mrf.mxu0
    %v258 = vadd.f32 %v116, %v257
    %v259 = vpop.f32.mrf.mxu0
    %v260 = vadd.f32 %v116, %v259
    %261 = vmatmul.bf16.gmra.mxu0 %v199
    %v262 = vpop.f32.mrf.mxu0
    %v263 = vadd.f32 %v116, %v262
    %v264 = vpop.f32.mrf.mxu0
    %v265 = vadd.f32 %v116, %v264
    %266 = vmatmul.bf16.gmra.mxu0 %v202
    %v267 = vpop.f32.mrf.mxu0
    %v268 = vadd.f32 %v116, %v267
    %v269 = vpop.f32.mrf.mxu0
    %v270 = vadd.f32 %v116, %v269
    %271 = vdwg.mxu0
    %272 = vmatpush.bf16.msra.mxu0 0
    %273 = vmatpush.bf16.msra.mxu0 0
    %274 = vmatpush.bf16.msra.mxu0 0
    %275 = vmatpush.bf16.msra.mxu0 0
    %276 = vmatpush.bf16.msra.mxu0 0
    %277 = vmatpush.bf16.msra.mxu0 0
    %278 = vmatpush.bf16.msra.mxu0 %v178
    %279 = vmatpush.bf16.msra.mxu0 %v174
    %280 = vmatmul.bf16.gmra.mxu0 %v190
    %v281 = vpop.f32.mrf.mxu0
    %v282 = vadd.f32 %v117, %v281
    %v283 = vpop.f32.mrf.mxu0
    %v284 = vadd.f32 %v117, %v283
    %285 = vmatmul.bf16.gmra.mxu0 %v193
    %v286 = vpop.f32.mrf.mxu0
    %v287 = vadd.f32 %v117, %v286
    %v288 = vpop.f32.mrf.mxu0
    %v289 = vadd.f32 %v117, %v288
    %290 = vmatmul.bf16.gmra.mxu0 %v196
    %v291 = vpop.f32.mrf.mxu0
    %v292 = vadd.f32 %v117, %v291
    %v293 = vpop.f32.mrf.mxu0
    %v294 = vadd.f32 %v117, %v293
    %295 = vmatmul.bf16.gmra.mxu0 %v199
    %v296 = vpop.f32.mrf.mxu0
    %v297 = vadd.f32 %v117, %v296
    %v298 = vpop.f32.mrf.mxu0
    %v299 = vadd.f32 %v117, %v298
    %300 = vmatmul.bf16.gmra.mxu0 %v202
    %v301 = vpop.f32.mrf.mxu0
    %v302 = vadd.f32 %v117, %v301
    %v303 = vpop.f32.mrf.mxu0
    %v304 = vadd.f32 %v117, %v303
    %305 = vdwg.mxu0
    %306 = vmatpush.bf16.msra.mxu0 0
    %307 = vmatpush.bf16.msra.mxu0 0
    %308 = vmatpush.bf16.msra.mxu0 0
    %309 = vmatpush.bf16.msra.mxu0 0
    %310 = vmatpush.bf16.msra.mxu0 0
    %311 = vmatpush.bf16.msra.mxu0 0
    %312 = vmatpush.bf16.msra.mxu0 %v179
    %313 = vmatpush.bf16.msra.mxu0 %v175
    %314 = vmatmul.bf16.gmra.mxu0 %v190
    %v315 = vpop.f32.mrf.mxu0
    %v316 = vadd.f32 %v118, %v315
    %v317 = vpop.f32.mrf.mxu0
    %v318 = vadd.f32 %v118, %v317
    %319 = vmatmul.bf16.gmra.mxu0 %v193
    %v320 = vpop.f32.mrf.mxu0
    %v321 = vadd.f32 %v118, %v320
    %v322 = vpop.f32.mrf.mxu0
    %v323 = vadd.f32 %v118, %v322
    %324 = vmatmul.bf16.gmra.mxu0 %v196
    %v325 = vpop.f32.mrf.mxu0
    %v326 = vadd.f32 %v118, %v325
    %v327 = vpop.f32.mrf.mxu0
    %v328 = vadd.f32 %v118, %v327
    %329 = vmatmul.bf16.gmra.mxu0 %v199
    %v330 = vpop.f32.mrf.mxu0
    %v331 = vadd.f32 %v118, %v330
    %v332 = vpop.f32.mrf.mxu0
    %v333 = vadd.f32 %v118, %v332
    %334 = vmatmul.bf16.gmra.mxu0 %v202
    %v335 = vpop.f32.mrf.mxu0
    %v336 = vadd.f32 %v118, %v335
    %v337 = vpop.f32.mrf.mxu0
    %v338 = vadd.f32 %v118, %v337
    %339 = vdwg.mxu0
    %340 = vst [vmem:[#allocation2] sm:$0xff] %v214
    %341 = vst [vmem:[#allocation2 + $0x8] sm:$0xff] %v248
    %342 = vst [vmem:[#allocation2 + $0x10] sm:$0xff] %v282
    %343 = vst [vmem:[#allocation2 + $0x18] sm:$0xff] %v316
    %344 = vst [vmem:[#allocation2 + $0x20] sm:$0xff] %v216
    %345 = vst [vmem:[#allocation2 + $0x28] sm:$0xff] %v250
    %346 = vst [vmem:[#allocation2 + $0x30] sm:$0xff] %v284
    %347 = vst [vmem:[#allocation2 + $0x38] sm:$0xff] %v318
    %348 = vst [vmem:[#allocation2 + $0x40] sm:$0xff] %v219
    %349 = vst [vmem:[#allocation2 + $0x48] sm:$0xff] %v253
    %350 = vst [vmem:[#allocation2 + $0x50] sm:$0xff] %v287
    %351 = vst [vmem:[#allocation2 + $0x58] sm:$0xff] %v321
    %352 = vst [vmem:[#allocation2 + $0x60] sm:$0xff] %v221
    %353 = vst [vmem:[#allocation2 + $0x68] sm:$0xff] %v255
    %354 = vst [vmem:[#allocation2 + $0x70] sm:$0xff] %v289
    %355 = vst [vmem:[#allocation2 + $0x78] sm:$0xff] %v323
    %356 = vst [vmem:[#allocation2 + $0x80] sm:$0xff] %v224
    %357 = vst [vmem:[#allocation2 + $0x88] sm:$0xff] %v258
    %358 = vst [vmem:[#allocation2 + $0x90] sm:$0xff] %v292
    %359 = vst [vmem:[#allocation2 + $0x98] sm:$0xff] %v326
    %360 = vst [vmem:[#allocation2 + $0xa0] sm:$0xff] %v226
    %361 = vst [vmem:[#allocation2 + $0xa8] sm:$0xff] %v260
    %362 = vst [vmem:[#allocation2 + $0xb0] sm:$0xff] %v294
    %363 = vst [vmem:[#allocation2 + $0xb8] sm:$0xff] %v328
    %364 = vst [vmem:[#allocation2 + $0xc0] sm:$0xff] %v229
    %365 = vst [vmem:[#allocation2 + $0xc8] sm:$0xff] %v263
    %366 = vst [vmem:[#allocation2 + $0xd0] sm:$0xff] %v297
    %367 = vst [vmem:[#allocation2 + $0xd8] sm:$0xff] %v331
    %368 = vst [vmem:[#allocation2 + $0xe0] sm:$0xff] %v231
    %369 = vst [vmem:[#allocation2 + $0xe8] sm:$0xff] %v265
    %370 = vst [vmem:[#allocation2 + $0xf0] sm:$0xff] %v299
    %371 = vst [vmem:[#allocation2 + $0xf8] sm:$0xff] %v333
    %372 = vst [vmem:[#allocation2 + $0x100] sm:$0xff] %v234
    %373 = vst [vmem:[#allocation2 + $0x108] sm:$0xff] %v268
    %374 = vst [vmem:[#allocation2 + $0x110] sm:$0xff] %v302
    %375 = vst [vmem:[#allocation2 + $0x118] sm:$0xff] %v336
    %376 = vst [vmem:[#allocation2 + $0x120] sm:$0xff] %v236
    %377 = vst [vmem:[#allocation2 + $0x128] sm:$0xff] %v270
    %378 = vst [vmem:[#allocation2 + $0x130] sm:$0xff] %v304
    %379 = vst [vmem:[#allocation2 + $0x138] sm:$0xff] %v338
    %v380 = vld [vmem:[#allocation3] sm:$0xff]
    %v381 = vld [vmem:[#allocation3 + $0x8] sm:$0xff]
    %v382 = vld [vmem:[#allocation3 + $0x10] sm:$0xff]
    %v383 = vld [vmem:[#allocation3 + $0x18] sm:$0xff]
    %v384 = vld [vmem:[#allocation3 + $0x20] sm:$0xff]
    %v385 = vld [vmem:[#allocation3 + $0x28] sm:$0xff]
    %v386 = vld [vmem:[#allocation3 + $0x30] sm:$0xff]
    %v387 = vld [vmem:[#allocation3 + $0x38] sm:$0xff]
    %v388 = vld [vmem:[#allocation3 + $0x40] sm:$0xff]
    %v389 = vld [vmem:[#allocation3 + $0x48] sm:$0xff]
    %v390 = vld [vmem:[#allocation3 + $0x50] sm:$0xff]
    %v391 = vld [vmem:[#allocation3 + $0x58] sm:$0xff]
    %v392 = vld [vmem:[#allocation3 + $0x60] sm:$0xff]
    %v393 = vld [vmem:[#allocation3 + $0x68] sm:$0xff]
    %v394 = vld [vmem:[#allocation3 + $0x70] sm:$0xff]
    %v395 = vld [vmem:[#allocation3 + $0x78] sm:$0xff]
    %v396 = vld [vmem:[#allocation3 + $0x80] sm:$0xff]
    %v397 = vld [vmem:[#allocation3 + $0x88] sm:$0xff]
    %v398 = vld [vmem:[#allocation3 + $0x90] sm:$0xff]
    %v399 = vld [vmem:[#allocation3 + $0x98] sm:$0xff]
    %v400 = vld [vmem:[#allocation3 + $0xa0] sm:$0xff]
    %v401 = vld [vmem:[#allocation3 + $0xa8] sm:$0xff]
    %v402 = vld [vmem:[#allocation3 + $0xb0] sm:$0xff]
    %v403 = vld [vmem:[#allocation3 + $0xb8] sm:$0xff]
    %v404 = vld [vmem:[#allocation3 + $0xc0] sm:$0xff]
    %v405 = vld [vmem:[#allocation3 + $0xc8] sm:$0xff]
    %v406 = vld [vmem:[#allocation3 + $0xd0] sm:$0xff]
    %v407 = vld [vmem:[#allocation3 + $0xd8] sm:$0xff]
    %v408 = vld [vmem:[#allocation3 + $0xe0] sm:$0xff]
    %v409 = vld [vmem:[#allocation3 + $0xe8] sm:$0xff]
    %v410 = vld [vmem:[#allocation3 + $0xf0] sm:$0xff]
    %v411 = vld [vmem:[#allocation3 + $0xf8] sm:$0xff]
    %v412 = vld [vmem:[#allocation3 + $0x100] sm:$0xff]
    %v413 = vld [vmem:[#allocation3 + $0x108] sm:$0xff]
    %v414 = vld [vmem:[#allocation3 + $0x110] sm:$0xff]
    %v415 = vld [vmem:[#allocation3 + $0x118] sm:$0xff]
    %v416 = vld [vmem:[#allocation3 + $0x120] sm:$0xff]
    %v417 = vld [vmem:[#allocation3 + $0x128] sm:$0xff]
    %v418 = vld [vmem:[#allocation3 + $0x130] sm:$0xff]
    %v419 = vld [vmem:[#allocation3 + $0x138] sm:$0xff]
    %v420 = vld [vmem:[#allocation3 + $0x140] sm:$0xff]
    %v421 = vld [vmem:[#allocation3 + $0x148] sm:$0xff]
    %v422 = vld [vmem:[#allocation3 + $0x150] sm:$0xff]
    %v423 = vld [vmem:[#allocation3 + $0x158] sm:$0xff]
    %v424 = vld [vmem:[#allocation3 + $0x160] sm:$0xff]
    %v425 = vld [vmem:[#allocation3 + $0x168] sm:$0xff]
    %v426 = vld [vmem:[#allocation3 + $0x170] sm:$0xff]
    %v427 = vld [vmem:[#allocation3 + $0x178] sm:$0xff]
    %v428 = vld [vmem:[#allocation3 + $0x180] sm:$0xff]
    %v429 = vld [vmem:[#allocation3 + $0x188] sm:$0xff]
    %v430 = vld [vmem:[#allocation3 + $0x190] sm:$0xff]
    %v431 = vld [vmem:[#allocation3 + $0x198] sm:$0xff]
    %v432 = vld [vmem:[#allocation3 + $0x1a0] sm:$0xff]
    %v433 = vld [vmem:[#allocation3 + $0x1a8] sm:$0xff]
    %v434 = vld [vmem:[#allocation3 + $0x1b0] sm:$0xff]
    %v435 = vld [vmem:[#allocation3 + $0x1b8] sm:$0xff]
    %v436 = vld [vmem:[#allocation3 + $0x1c0] sm:$0xff]
    %v437 = vld [vmem:[#allocation3 + $0x1c8] sm:$0xff]
    %v438 = vld [vmem:[#allocation3 + $0x1d0] sm:$0xff]
    %v439 = vld [vmem:[#allocation3 + $0x1d8] sm:$0xff]
    %v440 = vld [vmem:[#allocation3 + $0x1e0] sm:$0xff]
    %v441 = vld [vmem:[#allocation3 + $0x1e8] sm:$0xff]
    %v442 = vld [vmem:[#allocation3 + $0x1f0] sm:$0xff]
    %v443 = vld [vmem:[#allocation3 + $0x1f8] sm:$0xff]
    %v444 = vld [vmem:[#allocation6] sm:$0xff]
    %v445 = vld [vmem:[#allocation6 + $0x8] sm:$0xff]
    %v446 = vld [vmem:[#allocation6 + $0x10] sm:$0xff]
    %v447 = vld [vmem:[#allocation6 + $0x18] sm:$0xff]
    %v448 = vld [vmem:[#allocation6 + $0x20] sm:$0xff]
    %v449 = vld [vmem:[#allocation6 + $0x28] sm:$0xff]
    %v450 = vld [vmem:[#allocation6 + $0x30] sm:$0xff]
    %v451 = vld [vmem:[#allocation6 + $0x38] sm:$0xff]
    %v452 = vld [vmem:[#allocation6 + $0x40] sm:$0xff]
    %v453 = vld [vmem:[#allocation6 + $0x48] sm:$0xff]
    %v454 = vld [vmem:[#allocation6 + $0x50] sm:$0xff]
    %v455 = vld [vmem:[#allocation6 + $0x58] sm:$0xff]
    %v456 = vld [vmem:[#allocation6 + $0x60] sm:$0xff]
    %v457 = vld [vmem:[#allocation6 + $0x68] sm:$0xff]
    %v458 = vld [vmem:[#allocation6 + $0x70] sm:$0xff]
    %v459 = vld [vmem:[#allocation6 + $0x78] sm:$0xff]
    %v460 = vld [vmem:[#allocation6 + $0x80] sm:$0xff]
    %v461 = vld [vmem:[#allocation6 + $0x88] sm:$0xff]
    %v462 = vld [vmem:[#allocation6 + $0x90] sm:$0xff]
    %v463 = vld [vmem:[#allocation6 + $0x98] sm:$0xff]
    %v464 = vld [vmem:[#allocation6 + $0xa0] sm:$0xff]
    %v465 = vld [vmem:[#allocation6 + $0xa8] sm:$0xff]
    %v466 = vld [vmem:[#allocation6 + $0xb0] sm:$0xff]
    %v467 = vld [vmem:[#allocation6 + $0xb8] sm:$0xff]
    %v468 = vld [vmem:[#allocation6 + $0xc0] sm:$0xff]
    %v469 = vld [vmem:[#allocation6 + $0xc8] sm:$0xff]
    %v470 = vld [vmem:[#allocation6 + $0xd0] sm:$0xff]
    %v471 = vld [vmem:[#allocation6 + $0xd8] sm:$0xff]
    %v472 = vld [vmem:[#allocation6 + $0xe0] sm:$0xff]
    %v473 = vld [vmem:[#allocation6 + $0xe8] sm:$0xff]
    %v474 = vld [vmem:[#allocation6 + $0xf0] sm:$0xff]
    %v475 = vld [vmem:[#allocation6 + $0xf8] sm:$0xff]
    %v476 = vld [vmem:[#allocation6 + $0x100] sm:$0xff]
    %v477 = vld [vmem:[#allocation6 + $0x108] sm:$0xff]
    %v478 = vld [vmem:[#allocation6 + $0x110] sm:$0xff]
    %v479 = vld [vmem:[#allocation6 + $0x118] sm:$0xff]
    %v480 = vld [vmem:[#allocation6 + $0x120] sm:$0xff]
    %v481 = vld [vmem:[#allocation6 + $0x128] sm:$0xff]
    %v482 = vld [vmem:[#allocation6 + $0x130] sm:$0xff]
    %v483 = vld [vmem:[#allocation6 + $0x138] sm:$0xff]
    %v484 = vld [vmem:[#allocation6 + $0x140] sm:$0xff]
    %v485 = vld [vmem:[#allocation6 + $0x148] sm:$0xff]
    %v486 = vld [vmem:[#allocation6 + $0x150] sm:$0xff]
    %v487 = vld [vmem:[#allocation6 + $0x158] sm:$0xff]
    %v488 = vld [vmem:[#allocation6 + $0x160] sm:$0xff]
    %v489 = vld [vmem:[#allocation6 + $0x168] sm:$0xff]
    %v490 = vld [vmem:[#allocation6 + $0x170] sm:$0xff]
    %v491 = vld [vmem:[#allocation6 + $0x178] sm:$0xff]
    %v492 = vld [vmem:[#allocation6 + $0x180] sm:$0xff]
    %v493 = vld [vmem:[#allocation6 + $0x188] sm:$0xff]
    %v494 = vld [vmem:[#allocation6 + $0x190] sm:$0xff]
    %v495 = vld [vmem:[#allocation6 + $0x198] sm:$0xff]
    %v496 = vld [vmem:[#allocation6 + $0x1a0] sm:$0xff]
    %v497 = vld [vmem:[#allocation6 + $0x1a8] sm:$0xff]
    %v498 = vld [vmem:[#allocation6 + $0x1b0] sm:$0xff]
    %v499 = vld [vmem:[#allocation6 + $0x1b8] sm:$0xff]
    %v500 = vld [vmem:[#allocation6 + $0x1c0] sm:$0xff]
    %v501 = vld [vmem:[#allocation6 + $0x1c8] sm:$0xff]
    %v502 = vld [vmem:[#allocation6 + $0x1d0] sm:$0xff]
    %v503 = vld [vmem:[#allocation6 + $0x1d8] sm:$0xff]
    %v504 = vld [vmem:[#allocation6 + $0x1e0] sm:$0xff]
    %v505 = vld [vmem:[#allocation6 + $0x1e8] sm:$0xff]
    %v506 = vld [vmem:[#allocation6 + $0x1f0] sm:$0xff]
    %v507 = vld [vmem:[#allocation6 + $0x1f8] sm:$0xff]
    %v508 = vld [vmem:[#allocation6 + $0x200] sm:$0xff]
    %v509 = vld [vmem:[#allocation6 + $0x208] sm:$0xff]
    %v510 = vld [vmem:[#allocation6 + $0x210] sm:$0xff]
    %v511 = vld [vmem:[#allocation6 + $0x218] sm:$0xff]
    %v512 = vld [vmem:[#allocation6 + $0x220] sm:$0xff]
    %v513 = vld [vmem:[#allocation6 + $0x228] sm:$0xff]
    %v514 = vld [vmem:[#allocation6 + $0x230] sm:$0xff]
    %v515 = vld [vmem:[#allocation6 + $0x238] sm:$0xff]
    %v516 = vld [vmem:[#allocation6 + $0x240] sm:$0xff]
    %v517 = vld [vmem:[#allocation6 + $0x248] sm:$0xff]
    %v518 = vld [vmem:[#allocation6 + $0x250] sm:$0xff]
    %v519 = vld [vmem:[#allocation6 + $0x258] sm:$0xff]
    %v520 = vld [vmem:[#allocation6 + $0x260] sm:$0xff]
    %v521 = vld [vmem:[#allocation6 + $0x268] sm:$0xff]
    %v522 = vld [vmem:[#allocation6 + $0x270] sm:$0xff]
    %v523 = vld [vmem:[#allocation6 + $0x278] sm:$0xff]
    %v524 = vld [vmem:[#allocation6 + $0x280] sm:$0xff]
    %v525 = vld [vmem:[#allocation6 + $0x288] sm:$0xff]
    %v526 = vld [vmem:[#allocation6 + $0x290] sm:$0xff]
    %v527 = vld [vmem:[#allocation6 + $0x298] sm:$0xff]
    %v528 = vld [vmem:[#allocation6 + $0x2a0] sm:$0xff]
    %v529 = vld [vmem:[#allocation6 + $0x2a8] sm:$0xff]
    %v530 = vld [vmem:[#allocation6 + $0x2b0] sm:$0xff]
    %v531 = vld [vmem:[#allocation6 + $0x2b8] sm:$0xff]
    %v532 = vld [vmem:[#allocation6 + $0x2c0] sm:$0xff]
    %v533 = vld [vmem:[#allocation6 + $0x2c8] sm:$0xff]
    %v534 = vld [vmem:[#allocation6 + $0x2d0] sm:$0xff]
    %v535 = vld [vmem:[#allocation6 + $0x2d8] sm:$0xff]
    %v536 = vld [vmem:[#allocation6 + $0x2e0] sm:$0xff]
    %v537 = vld [vmem:[#allocation6 + $0x2e8] sm:$0xff]
    %v538 = vld [vmem:[#allocation6 + $0x2f0] sm:$0xff]
    %v539 = vld [vmem:[#allocation6 + $0x2f8] sm:$0xff]
    %v540 = vld [vmem:[#allocation6 + $0x300] sm:$0xff]
    %v541 = vld [vmem:[#allocation6 + $0x308] sm:$0xff]
    %v542 = vld [vmem:[#allocation6 + $0x310] sm:$0xff]
    %v543 = vld [vmem:[#allocation6 + $0x318] sm:$0xff]
    %v544 = vld [vmem:[#allocation6 + $0x320] sm:$0xff]
    %v545 = vld [vmem:[#allocation6 + $0x328] sm:$0xff]
    %v546 = vld [vmem:[#allocation6 + $0x330] sm:$0xff]
    %v547 = vld [vmem:[#allocation6 + $0x338] sm:$0xff]
    %v548 = vld [vmem:[#allocation6 + $0x340] sm:$0xff]
    %v549 = vld [vmem:[#allocation6 + $0x348] sm:$0xff]
    %v550 = vld [vmem:[#allocation6 + $0x350] sm:$0xff]
    %v551 = vld [vmem:[#allocation6 + $0x358] sm:$0xff]
    %v552 = vld [vmem:[#allocation6 + $0x360] sm:$0xff]
    %v553 = vld [vmem:[#allocation6 + $0x368] sm:$0xff]
    %v554 = vld [vmem:[#allocation6 + $0x370] sm:$0xff]
    %v555 = vld [vmem:[#allocation6 + $0x378] sm:$0xff]
    %v556 = vld [vmem:[#allocation6 + $0x380] sm:$0xff]
    %v557 = vld [vmem:[#allocation6 + $0x388] sm:$0xff]
    %v558 = vld [vmem:[#allocation6 + $0x390] sm:$0xff]
    %v559 = vld [vmem:[#allocation6 + $0x398] sm:$0xff]
    %v560 = vld [vmem:[#allocation6 + $0x3a0] sm:$0xff]
    %v561 = vld [vmem:[#allocation6 + $0x3a8] sm:$0xff]
    %v562 = vld [vmem:[#allocation6 + $0x3b0] sm:$0xff]
    %v563 = vld [vmem:[#allocation6 + $0x3b8] sm:$0xff]
    %v564 = vld [vmem:[#allocation6 + $0x3c0] sm:$0xff]
    %v565 = vld [vmem:[#allocation6 + $0x3c8] sm:$0xff]
    %v566 = vld [vmem:[#allocation6 + $0x3d0] sm:$0xff]
    %v567 = vld [vmem:[#allocation6 + $0x3d8] sm:$0xff]
    %v568 = vld [vmem:[#allocation6 + $0x3e0] sm:$0xff]
    %v569 = vld [vmem:[#allocation6 + $0x3e8] sm:$0xff]
    %v570 = vld [vmem:[#allocation6 + $0x3f0] sm:$0xff]
    %v571 = vld [vmem:[#allocation6 + $0x3f8] sm:$0xff]
    %v572 = vld [vmem:[#allocation8] sm:$0xf]
    %v573 = vld [vmem:[%s1] sm:$0xff]
    %vm574 = vcmp.gt.s32.totalorder %v573, 0
    %v575 = vsel %vm574, 1, 0
    %576 = vset.pattern.permute.xlu0 0
    %577 = vperm.xlu0 %576, %v575
    %v578 = vpop.permute.xlu0 %577
    %vm579 = vcmp.eq.s32.totalorder %v578, 1
    %v580 = vld [vmem:[#allocation2] sm:$0xff]
    %v581 = vld [vmem:[#allocation2 + $0x8] sm:$0xff]
    %v582 = vld [vmem:[#allocation2 + $0x10] sm:$0xff]
    %v583 = vld [vmem:[#allocation2 + $0x18] sm:$0xff]
    %584 = vmatpush.msra.mxu0 %v440
    %585 = vmatpush.msra.mxu0 %v436
    %586 = vmatpush.msra.mxu0 %v432
    %587 = vmatpush.msra.mxu0 %v428
    %588 = vmatpush.msra.mxu0 %v424
    %589 = vmatpush.msra.mxu0 %v420
    %590 = vmatpush.msra.mxu0 %v416
    %591 = vmatpush.msra.mxu0 %v412
    %592 = vmatpush.msra.mxu0 %v408
    %593 = vmatpush.msra.mxu0 %v404
    %594 = vmatpush.msra.mxu0 %v400
    %595 = vmatpush.msra.mxu0 %v396
    %596 = vmatpush.msra.mxu0 %v392
    %597 = vmatpush.msra.mxu0 %v388
    %598 = vmatpush.msra.mxu0 %v384
    %599 = vmatpush.msra.mxu0 %v380
    %600 = vmatmul.f32.gmra.mxu0 0.0
    %v601 = vpop.f32.mrf.mxu0
    %v602 = vadd.f32 0.0, %v601
    %603 = vdwg.mxu0
    %604 = vmatpush.msra.mxu0 %v441
    %605 = vmatpush.msra.mxu0 %v437
    %606 = vmatpush.msra.mxu0 %v433
    %607 = vmatpush.msra.mxu0 %v429
    %608 = vmatpush.msra.mxu0 %v425
    %609 = vmatpush.msra.mxu0 %v421
    %610 = vmatpush.msra.mxu0 %v417
    %611 = vmatpush.msra.mxu0 %v413
    %612 = vmatpush.msra.mxu0 %v409
    %613 = vmatpush.msra.mxu0 %v405
    %614 = vmatpush.msra.mxu0 %v401
    %615 = vmatpush.msra.mxu0 %v397
    %616 = vmatpush.msra.mxu0 %v393
    %617 = vmatpush.msra.mxu0 %v389
    %618 = vmatpush.msra.mxu0 %v385
    %619 = vmatpush.msra.mxu0 %v381
    %620 = vmatmul.f32.gmra.mxu0 0.0
    %v621 = vpop.f32.mrf.mxu0
    %v622 = vadd.f32 0.0, %v621
    %623 = vdwg.mxu0
    %624 = vmatpush.msra.mxu0 %v442
    %625 = vmatpush.msra.mxu0 %v438
    %626 = vmatpush.msra.mxu0 %v434
    %627 = vmatpush.msra.mxu0 %v430
    %628 = vmatpush.msra.mxu0 %v426
    %629 = vmatpush.msra.mxu0 %v422
    %630 = vmatpush.msra.mxu0 %v418
    %631 = vmatpush.msra.mxu0 %v414
    %632 = vmatpush.msra.mxu0 %v410
    %633 = vmatpush.msra.mxu0 %v406
    %634 = vmatpush.msra.mxu0 %v402
    %635 = vmatpush.msra.mxu0 %v398
    %636 = vmatpush.msra.mxu0 %v394
    %637 = vmatpush.msra.mxu0 %v390
    %638 = vmatpush.msra.mxu0 %v386
    %639 = vmatpush.msra.mxu0 %v382
    %640 = vmatmul.f32.gmra.mxu0 0.0
    %v641 = vpop.f32.mrf.mxu0
    %v642 = vadd.f32 0.0, %v641
    %643 = vdwg.mxu0
    %644 = vmatpush.msra.mxu0 %v443
    %645 = vmatpush.msra.mxu0 %v439
    %646 = vmatpush.msra.mxu0 %v435
    %647 = vmatpush.msra.mxu0 %v431
    %648 = vmatpush.msra.mxu0 %v427
    %649 = vmatpush.msra.mxu0 %v423
    %650 = vmatpush.msra.mxu0 %v419
    %651 = vmatpush.msra.mxu0 %v415
    %652 = vmatpush.msra.mxu0 %v411
    %653 = vmatpush.msra.mxu0 %v407
    %654 = vmatpush.msra.mxu0 %v403
    %655 = vmatpush.msra.mxu0 %v399
    %656 = vmatpush.msra.mxu0 %v395
    %657 = vmatpush.msra.mxu0 %v391
    %658 = vmatpush.msra.mxu0 %v387
    %659 = vmatpush.msra.mxu0 %v383
    %660 = vmatmul.f32.gmra.mxu0 0.0
    %v661 = vpop.f32.mrf.mxu0
    %v662 = vadd.f32 0.0, %v661
    %663 = vdwg.mxu0
    %v664 = vadd.f32 %v580, %v602
    %v665 = vadd.f32 %v581, %v622
    %v666 = vadd.f32 %v582, %v642
    %v667 = vadd.f32 %v583, %v662
    %v668 = vxor.u32 %v664, 2147483648
    %v669 = vmul.f32 %v668, 1.442695
    %v670 = vpow.pop %v669
    %v671 = vadd.f32 %v670, 1.0
    %v672 = vrcp.pop %v671
    %v673 = vmul.f32 %v671, %v672
    %v674 = vsub.f32 1.0, %v673
    %v675 = vmul.f32 %v672, %v674
    %v676 = vadd.f32 %v672, %v675
    %vm677 = vweird.f32 %v671
    %vm678 = vweird.f32 %v672
    %vm679 = vmor %vm677, %vm678
    %v680 = vsel %vm679, %v672, %v676
    %v681 = vand.u32 2147483647, %v671
    %vm682 = vcmp.eq.f32.partialorder %v681, 8.507059e+37
    %v683 = vand.u32 %v671, 2147483648
    %v684 = vor.u32 1.1754944e-38, %v683
    %v685 = vsel %vm682, %v684, %v680
    %v686 = vmul.f32 1.0, %v685
    %v687 = vxor.u32 %v665, 2147483648
    %v688 = vmul.f32 %v687, 1.442695
    %v689 = vpow.pop %v688
    %v690 = vadd.f32 %v689, 1.0
    %v691 = vrcp.pop %v690
    %v692 = vmul.f32 %v690, %v691
    %v693 = vsub.f32 1.0, %v692
    %v694 = vmul.f32 %v691, %v693
    %v695 = vadd.f32 %v691, %v694
    %vm696 = vweird.f32 %v690
    %vm697 = vweird.f32 %v691
    %vm698 = vmor %vm696, %vm697
    %v699 = vsel %vm698, %v691, %v695
    %v700 = vand.u32 2147483647, %v690
    %vm701 = vcmp.eq.f32.partialorder %v700, 8.507059e+37
    %v702 = vand.u32 %v690, 2147483648
    %v703 = vor.u32 1.1754944e-38, %v702
    %v704 = vsel %vm701, %v703, %v699
    %v705 = vmul.f32 1.0, %v704
    %v706 = vtanh.pop %v666
    %v707 = vxor.u32 %v667, 2147483648
    %v708 = vmul.f32 %v707, 1.442695
    %v709 = vpow.pop %v708
    %v710 = vadd.f32 %v709, 1.0
    %v711 = vrcp.pop %v710
    %v712 = vmul.f32 %v710, %v711
    %v713 = vsub.f32 1.0, %v712
    %v714 = vmul.f32 %v711, %v713
    %v715 = vadd.f32 %v711, %v714
    %vm716 = vweird.f32 %v710
    %vm717 = vweird.f32 %v711
    %vm718 = vmor %vm716, %vm717
    %v719 = vsel %vm718, %v711, %v715
    %v720 = vand.u32 2147483647, %v710
    %vm721 = vcmp.eq.f32.partialorder %v720, 8.507059e+37
    %v722 = vand.u32 %v710, 2147483648
    %v723 = vor.u32 1.1754944e-38, %v722
    %v724 = vsel %vm721, %v723, %v719
    %v725 = vmul.f32 1.0, %v724
    %v726 = vmul.f32 %v705, 0.0
    %v727 = vmul.f32 %v686, %v706
    %v728 = vadd.f32 %v726, %v727
    %v729 = vtanh.pop %v728
    %v730 = vmul.f32 %v725, %v729
    %v731 = vsel %vm579, %v730, 0.0
    %v732 = vsel %vm579, %v728, 0.0
    %v734 = vperm.slane %v572, 0
    %v735 = vperm.slane %v572, 1
    %v736 = vperm.slane %v572, 2
    %v737 = vperm.slane %v572, 3
    %742 = vmatpush.msra.mxu0 %v504
    %743 = vmatpush.msra.mxu0 %v500
    %744 = vmatpush.msra.mxu0 %v496
    %745 = vmatpush.msra.mxu0 %v492
    %746 = vmatpush.msra.mxu0 %v488
    %747 = vmatpush.msra.mxu0 %v484
    %748 = vmatpush.msra.mxu0 %v480
    %749 = vmatpush.msra.mxu0 %v476
    %750 = vmatpush.msra.mxu0 %v472
    %751 = vmatpush.msra.mxu0 %v468
    %752 = vmatpush.msra.mxu0 %v464
    %753 = vmatpush.msra.mxu0 %v460
    %754 = vmatpush.msra.mxu0 %v456
    %755 = vmatpush.msra.mxu0 %v452
    %756 = vmatpush.msra.mxu0 %v448
    %757 = vmatpush.msra.mxu0 %v444
    %758 = vmatmul.f32.gmra.mxu0 %v730
    %v759 = vpop.f32.mrf.mxu0
    %v760 = vadd.f32 %v734, %v759
    %761 = vdwg.mxu0
    %762 = vmatpush.msra.mxu0 %v568
    %763 = vmatpush.msra.mxu0 %v564
    %764 = vmatpush.msra.mxu0 %v560
    %765 = vmatpush.msra.mxu0 %v556
    %766 = vmatpush.msra.mxu0 %v552
    %767 = vmatpush.msra.mxu0 %v548
    %768 = vmatpush.msra.mxu0 %v544
    %769 = vmatpush.msra.mxu0 %v540
    %770 = vmatpush.msra.mxu0 %v536
    %771 = vmatpush.msra.mxu0 %v532
    %772 = vmatpush.msra.mxu0 %v528
    %773 = vmatpush.msra.mxu0 %v524
    %774 = vmatpush.msra.mxu0 %v520
    %775 = vmatpush.msra.mxu0 %v516
    %776 = vmatpush.msra.mxu0 %v512
    %777 = vmatpush.msra.mxu0 %v508
    %778 = vmatmul.f32.gmra.mxu0 0.0
    %v779 = vpop.f32.mrf.mxu0
    %v780 = vadd.f32 %v760, %v779
    %781 = vdwg.mxu0
    %782 = vmatpush.msra.mxu0 %v505
    %783 = vmatpush.msra.mxu0 %v501
    %784 = vmatpush.msra.mxu0 %v497
    %785 = vmatpush.msra.mxu0 %v493
    %786 = vmatpush.msra.mxu0 %v489
    %787 = vmatpush.msra.mxu0 %v485
    %788 = vmatpush.msra.mxu0 %v481
    %789 = vmatpush.msra.mxu0 %v477
    %790 = vmatpush.msra.mxu0 %v473
    %791 = vmatpush.msra.mxu0 %v469
    %792 = vmatpush.msra.mxu0 %v465
    %793 = vmatpush.msra.mxu0 %v461
    %794 = vmatpush.msra.mxu0 %v457
    %795 = vmatpush.msra.mxu0 %v453
    %796 = vmatpush.msra.mxu0 %v449
    %797 = vmatpush.msra.mxu0 %v445
    %798 = vmatmul.f32.gmra.mxu0 %v730
    %v799 = vpop.f32.mrf.mxu0
    %v800 = vadd.f32 %v735, %v799
    %801 = vdwg.mxu0
    %802 = vmatpush.msra.mxu0 %v569
    %803 = vmatpush.msra.mxu0 %v565
    %804 = vmatpush.msra.mxu0 %v561
    %805 = vmatpush.msra.mxu0 %v557
    %806 = vmatpush.msra.mxu0 %v553
    %807 = vmatpush.msra.mxu0 %v549
    %808 = vmatpush.msra.mxu0 %v545
    %809 = vmatpush.msra.mxu0 %v541
    %810 = vmatpush.msra.mxu0 %v537
    %811 = vmatpush.msra.mxu0 %v533
    %812 = vmatpush.msra.mxu0 %v529
    %813 = vmatpush.msra.mxu0 %v525
    %814 = vmatpush.msra.mxu0 %v521
    %815 = vmatpush.msra.mxu0 %v517
    %816 = vmatpush.msra.mxu0 %v513
    %817 = vmatpush.msra.mxu0 %v509
    %818 = vmatmul.f32.gmra.mxu0 0.0
    %v819 = vpop.f32.mrf.mxu0
    %v820 = vadd.f32 %v800, %v819
    %821 = vdwg.mxu0
    %822 = vmatpush.msra.mxu0 %v506
    %823 = vmatpush.msra.mxu0 %v502
    %824 = vmatpush.msra.mxu0 %v498
    %825 = vmatpush.msra.mxu0 %v494
    %826 = vmatpush.msra.mxu0 %v490
    %827 = vmatpush.msra.mxu0 %v486
    %828 = vmatpush.msra.mxu0 %v482
    %829 = vmatpush.msra.mxu0 %v478
    %830 = vmatpush.msra.mxu0 %v474
    %831 = vmatpush.msra.mxu0 %v470
    %832 = vmatpush.msra.mxu0 %v466
    %833 = vmatpush.msra.mxu0 %v462
    %834 = vmatpush.msra.mxu0 %v458
    %835 = vmatpush.msra.mxu0 %v454
    %836 = vmatpush.msra.mxu0 %v450
    %837 = vmatpush.msra.mxu0 %v446
    %838 = vmatmul.f32.gmra.mxu0 %v730
    %v839 = vpop.f32.mrf.mxu0
    %v840 = vadd.f32 %v736, %v839
    %841 = vdwg.mxu0
    %842 = vmatpush.msra.mxu0 %v570
    %843 = vmatpush.msra.mxu0 %v566
    %844 = vmatpush.msra.mxu0 %v562
    %845 = vmatpush.msra.mxu0 %v558
    %846 = vmatpush.msra.mxu0 %v554
    %847 = vmatpush.msra.mxu0 %v550
    %848 = vmatpush.msra.mxu0 %v546
    %849 = vmatpush.msra.mxu0 %v542
    %850 = vmatpush.msra.mxu0 %v538
    %851 = vmatpush.msra.mxu0 %v534
    %852 = vmatpush.msra.mxu0 %v530
    %853 = vmatpush.msra.mxu0 %v526
    %854 = vmatpush.msra.mxu0 %v522
    %855 = vmatpush.msra.mxu0 %v518
    %856 = vmatpush.msra.mxu0 %v514
    %857 = vmatpush.msra.mxu0 %v510
    %858 = vmatmul.f32.gmra.mxu0 0.0
    %v859 = vpop.f32.mrf.mxu0
    %v860 = vadd.f32 %v840, %v859
    %861 = vdwg.mxu0
    %862 = vmatpush.msra.mxu0 %v507
    %863 = vmatpush.msra.mxu0 %v503
    %864 = vmatpush.msra.mxu0 %v499
    %865 = vmatpush.msra.mxu0 %v495
    %866 = vmatpush.msra.mxu0 %v491
    %867 = vmatpush.msra.mxu0 %v487
    %868 = vmatpush.msra.mxu0 %v483
    %869 = vmatpush.msra.mxu0 %v479
    %870 = vmatpush.msra.mxu0 %v475
    %871 = vmatpush.msra.mxu0 %v471
    %872 = vmatpush.msra.mxu0 %v467
    %873 = vmatpush.msra.mxu0 %v463
    %874 = vmatpush.msra.mxu0 %v459
    %875 = vmatpush.msra.mxu0 %v455
    %876 = vmatpush.msra.mxu0 %v451
    %877 = vmatpush.msra.mxu0 %v447
    %878 = vmatmul.f32.gmra.mxu0 %v730
    %v879 = vpop.f32.mrf.mxu0
    %v880 = vadd.f32 %v737, %v879
    %881 = vdwg.mxu0
    %882 = vmatpush.msra.mxu0 %v571
    %883 = vmatpush.msra.mxu0 %v567
    %884 = vmatpush.msra.mxu0 %v563
    %885 = vmatpush.msra.mxu0 %v559
    %886 = vmatpush.msra.mxu0 %v555
    %887 = vmatpush.msra.mxu0 %v551
    %888 = vmatpush.msra.mxu0 %v547
    %889 = vmatpush.msra.mxu0 %v543
    %890 = vmatpush.msra.mxu0 %v539
    %891 = vmatpush.msra.mxu0 %v535
    %892 = vmatpush.msra.mxu0 %v531
    %893 = vmatpush.msra.mxu0 %v527
    %894 = vmatpush.msra.mxu0 %v523
    %895 = vmatpush.msra.mxu0 %v519
    %896 = vmatpush.msra.mxu0 %v515
    %897 = vmatpush.msra.mxu0 %v511
    %898 = vmatmul.f32.gmra.mxu0 0.0
    %v899 = vpop.f32.mrf.mxu0
    %v900 = vadd.f32 %v880, %v899
    %901 = vdwg.mxu0
    %v902 = vxor.u32 %v780, 2147483648
    %v903 = vmul.f32 %v902, 1.442695
    %v904 = vpow.pop %v903
    %v905 = vadd.f32 %v904, 1.0
    %v906 = vrcp.pop %v905
    %v907 = vmul.f32 %v905, %v906
    %v908 = vsub.f32 1.0, %v907
    %v909 = vmul.f32 %v906, %v908
    %v910 = vadd.f32 %v906, %v909
    %vm911 = vweird.f32 %v905
    %vm912 = vweird.f32 %v906
    %vm913 = vmor %vm911, %vm912
    %v914 = vsel %vm913, %v906, %v910
    %v915 = vand.u32 2147483647, %v905
    %vm916 = vcmp.eq.f32.partialorder %v915, 8.507059e+37
    %v917 = vand.u32 %v905, 2147483648
    %v918 = vor.u32 1.1754944e-38, %v917
    %v919 = vsel %vm916, %v918, %v914
    %v920 = vmul.f32 1.0, %v919
    %v921 = vxor.u32 %v820, 2147483648
    %v922 = vmul.f32 %v921, 1.442695
    %v923 = vpow.pop %v922
    %v924 = vadd.f32 %v923, 1.0
    %v925 = vrcp.pop %v924
    %v926 = vmul.f32 %v924, %v925
    %v927 = vsub.f32 1.0, %v926
    %v928 = vmul.f32 %v925, %v927
    %v929 = vadd.f32 %v925, %v928
    %vm930 = vweird.f32 %v924
    %vm931 = vweird.f32 %v925
    %vm932 = vmor %vm930, %vm931
    %v933 = vsel %vm932, %v925, %v929
    %v934 = vand.u32 2147483647, %v924
    %vm935 = vcmp.eq.f32.partialorder %v934, 8.507059e+37
    %v936 = vand.u32 %v924, 2147483648
    %v937 = vor.u32 1.1754944e-38, %v936
    %v938 = vsel %vm935, %v937, %v933
    %v939 = vmul.f32 1.0, %v938
    %v940 = vtanh.pop %v860
    %v941 = vxor.u32 %v900, 2147483648
    %v942 = vmul.f32 %v941, 1.442695
    %v943 = vpow.pop %v942
    %v944 = vadd.f32 %v943, 1.0
    %v945 = vrcp.pop %v944
    %v946 = vmul.f32 %v944, %v945
    %v947 = vsub.f32 1.0, %v946
    %v948 = vmul.f32 %v945, %v947
    %v949 = vadd.f32 %v945, %v948
    %vm950 = vweird.f32 %v944
    %vm951 = vweird.f32 %v945
    %vm952 = vmor %vm950, %vm951
    %v953 = vsel %vm952, %v945, %v949
    %v954 = vand.u32 2147483647, %v944
    %vm955 = vcmp.eq.f32.partialorder %v954, 8.507059e+37
    %v956 = vand.u32 %v944, 2147483648
    %v957 = vor.u32 1.1754944e-38, %v956
    %v958 = vsel %vm955, %v957, %v953
    %v959 = vmul.f32 1.0, %v958
    %v960 = vmul.f32 %v939, 0.0
    %v961 = vmul.f32 %v920, %v940
    %v962 = vadd.f32 %v960, %v961
    %v963 = vtanh.pop %v962
    %v964 = vmul.f32 %v959, %v963
    %v965 = vsel %vm579, %v964, 0.0
    %v966 = vsel %vm579, %v962, 0.0
    %vm967 = vcmp.gt.s32.totalorder %v573, 1
    %v968 = vsel %vm967, 1, 0
    %969 = vset.pattern.permute.xlu0 0
    %970 = vperm.xlu0 %969, %v968
    %v971 = vpop.permute.xlu0 %970
    %vm972 = vcmp.eq.s32.totalorder %v971, 1
    %v973 = vld [vmem:[#allocation2 + $0x20] sm:$0xff]
    %v974 = vld [vmem:[#allocation2 + $0x28] sm:$0xff]
    %v975 = vld [vmem:[#allocation2 + $0x30] sm:$0xff]
    %v976 = vld [vmem:[#allocation2 + $0x38] sm:$0xff]
    %977 = vmatpush.msra.mxu0 %v440
    %978 = vmatpush.msra.mxu0 %v436
    %979 = vmatpush.msra.mxu0 %v432
    %980 = vmatpush.msra.mxu0 %v428
    %981 = vmatpush.msra.mxu0 %v424
    %982 = vmatpush.msra.mxu0 %v420
    %983 = vmatpush.msra.mxu0 %v416
    %984 = vmatpush.msra.mxu0 %v412
    %985 = vmatpush.msra.mxu0 %v408
    %986 = vmatpush.msra.mxu0 %v404
    %987 = vmatpush.msra.mxu0 %v400
    %988 = vmatpush.msra.mxu0 %v396
    %989 = vmatpush.msra.mxu0 %v392
    %990 = vmatpush.msra.mxu0 %v388
    %991 = vmatpush.msra.mxu0 %v384
    %992 = vmatpush.msra.mxu0 %v380
    %993 = vmatmul.f32.gmra.mxu0 %v731
    %v994 = vpop.f32.mrf.mxu0
    %v995 = vadd.f32 0.0, %v994
    %996 = vdwg.mxu0
    %997 = vmatpush.msra.mxu0 %v441
    %998 = vmatpush.msra.mxu0 %v437
    %999 = vmatpush.msra.mxu0 %v433
    %1000 = vmatpush.msra.mxu0 %v429
    %1001 = vmatpush.msra.mxu0 %v425
    %1002 = vmatpush.msra.mxu0 %v421
    %1003 = vmatpush.msra.mxu0 %v417
    %1004 = vmatpush.msra.mxu0 %v413
    %1005 = vmatpush.msra.mxu0 %v409
    %1006 = vmatpush.msra.mxu0 %v405
    %1007 = vmatpush.msra.mxu0 %v401
    %1008 = vmatpush.msra.mxu0 %v397
    %1009 = vmatpush.msra.mxu0 %v393
    %1010 = vmatpush.msra.mxu0 %v389
    %1011 = vmatpush.msra.mxu0 %v385
    %1012 = vmatpush.msra.mxu0 %v381
    %1013 = vmatmul.f32.gmra.mxu0 %v731
    %v1014 = vpop.f32.mrf.mxu0
    %v1015 = vadd.f32 0.0, %v1014
    %1016 = vdwg.mxu0
    %1017 = vmatpush.msra.mxu0 %v442
    %1018 = vmatpush.msra.mxu0 %v438
    %1019 = vmatpush.msra.mxu0 %v434
    %1020 = vmatpush.msra.mxu0 %v430
    %1021 = vmatpush.msra.mxu0 %v426
    %1022 = vmatpush.msra.mxu0 %v422
    %1023 = vmatpush.msra.mxu0 %v418
    %1024 = vmatpush.msra.mxu0 %v414
    %1025 = vmatpush.msra.mxu0 %v410
    %1026 = vmatpush.msra.mxu0 %v406
    %1027 = vmatpush.msra.mxu0 %v402
    %1028 = vmatpush.msra.mxu0 %v398
    %1029 = vmatpush.msra.mxu0 %v394
    %1030 = vmatpush.msra.mxu0 %v390
    %1031 = vmatpush.msra.mxu0 %v386
    %1032 = vmatpush.msra.mxu0 %v382
    %1033 = vmatmul.f32.gmra.mxu0 %v731
    %v1034 = vpop.f32.mrf.mxu0
    %v1035 = vadd.f32 0.0, %v1034
    %1036 = vdwg.mxu0
    %1037 = vmatpush.msra.mxu0 %v443
    %1038 = vmatpush.msra.mxu0 %v439
    %1039 = vmatpush.msra.mxu0 %v435
    %1040 = vmatpush.msra.mxu0 %v431
    %1041 = vmatpush.msra.mxu0 %v427
    %1042 = vmatpush.msra.mxu0 %v423
    %1043 = vmatpush.msra.mxu0 %v419
    %1044 = vmatpush.msra.mxu0 %v415
    %1045 = vmatpush.msra.mxu0 %v411
    %1046 = vmatpush.msra.mxu0 %v407
    %1047 = vmatpush.msra.mxu0 %v403
    %1048 = vmatpush.msra.mxu0 %v399
    %1049 = vmatpush.msra.mxu0 %v395
    %1050 = vmatpush.msra.mxu0 %v391
    %1051 = vmatpush.msra.mxu0 %v387
    %1052 = vmatpush.msra.mxu0 %v383
    %1053 = vmatmul.f32.gmra.mxu0 %v731
    %v1054 = vpop.f32.mrf.mxu0
    %v1055 = vadd.f32 0.0, %v1054
    %1056 = vdwg.mxu0
    %v1057 = vadd.f32 %v973, %v995
    %v1058 = vadd.f32 %v974, %v1015
    %v1059 = vadd.f32 %v975, %v1035
    %v1060 = vadd.f32 %v976, %v1055
    %v1061 = vxor.u32 %v1057, 2147483648
    %v1062 = vmul.f32 %v1061, 1.442695
    %v1063 = vpow.pop %v1062
    %v1064 = vadd.f32 %v1063, 1.0
    %v1065 = vrcp.pop %v1064
    %v1066 = vmul.f32 %v1064, %v1065
    %v1067 = vsub.f32 1.0, %v1066
    %v1068 = vmul.f32 %v1065, %v1067
    %v1069 = vadd.f32 %v1065, %v1068
    %vm1070 = vweird.f32 %v1064
    %vm1071 = vweird.f32 %v1065
    %vm1072 = vmor %vm1070, %vm1071
    %v1073 = vsel %vm1072, %v1065, %v1069
    %v1074 = vand.u32 2147483647, %v1064
    %vm1075 = vcmp.eq.f32.partialorder %v1074, 8.507059e+37
    %v1076 = vand.u32 %v1064, 2147483648
    %v1077 = vor.u32 1.1754944e-38, %v1076
    %v1078 = vsel %vm1075, %v1077, %v1073
    %v1079 = vmul.f32 1.0, %v1078
    %v1080 = vxor.u32 %v1058, 2147483648
    %v1081 = vmul.f32 %v1080, 1.442695
    %v1082 = vpow.pop %v1081
    %v1083 = vadd.f32 %v1082, 1.0
    %v1084 = vrcp.pop %v1083
    %v1085 = vmul.f32 %v1083, %v1084
    %v1086 = vsub.f32 1.0, %v1085
    %v1087 = vmul.f32 %v1084, %v1086
    %v1088 = vadd.f32 %v1084, %v1087
    %vm1089 = vweird.f32 %v1083
    %vm1090 = vweird.f32 %v1084
    %vm1091 = vmor %vm1089, %vm1090
    %v1092 = vsel %vm1091, %v1084, %v1088
    %v1093 = vand.u32 2147483647, %v1083
    %vm1094 = vcmp.eq.f32.partialorder %v1093, 8.507059e+37
    %v1095 = vand.u32 %v1083, 2147483648
    %v1096 = vor.u32 1.1754944e-38, %v1095
    %v1097 = vsel %vm1094, %v1096, %v1092
    %v1098 = vmul.f32 1.0, %v1097
    %v1099 = vtanh.pop %v1059
    %v1100 = vxor.u32 %v1060, 2147483648
    %v1101 = vmul.f32 %v1100, 1.442695
    %v1102 = vpow.pop %v1101
    %v1103 = vadd.f32 %v1102, 1.0
    %v1104 = vrcp.pop %v1103
    %v1105 = vmul.f32 %v1103, %v1104
    %v1106 = vsub.f32 1.0, %v1105
    %v1107 = vmul.f32 %v1104, %v1106
    %v1108 = vadd.f32 %v1104, %v1107
    %vm1109 = vweird.f32 %v1103
    %vm1110 = vweird.f32 %v1104
    %vm1111 = vmor %vm1109, %vm1110
    %v1112 = vsel %vm1111, %v1104, %v1108
    %v1113 = vand.u32 2147483647, %v1103
    %vm1114 = vcmp.eq.f32.partialorder %v1113, 8.507059e+37
    %v1115 = vand.u32 %v1103, 2147483648
    %v1116 = vor.u32 1.1754944e-38, %v1115
    %v1117 = vsel %vm1114, %v1116, %v1112
    %v1118 = vmul.f32 1.0, %v1117
    %v1119 = vmul.f32 %v1098, %v732
    %v1120 = vmul.f32 %v1079, %v1099
    %v1121 = vadd.f32 %v1119, %v1120
    %v1122 = vtanh.pop %v1121
    %v1123 = vmul.f32 %v1118, %v1122
    %v1124 = vsel %vm972, %v1123, %v731
    %v1125 = vsel %vm972, %v1121, %v732
    %1126 = vmatpush.msra.mxu0 %v504
    %1127 = vmatpush.msra.mxu0 %v500
    %1128 = vmatpush.msra.mxu0 %v496
    %1129 = vmatpush.msra.mxu0 %v492
    %1130 = vmatpush.msra.mxu0 %v488
    %1131 = vmatpush.msra.mxu0 %v484
    %1132 = vmatpush.msra.mxu0 %v480
    %1133 = vmatpush.msra.mxu0 %v476
    %1134 = vmatpush.msra.mxu0 %v472
    %1135 = vmatpush.msra.mxu0 %v468
    %1136 = vmatpush.msra.mxu0 %v464
    %1137 = vmatpush.msra.mxu0 %v460
    %1138 = vmatpush.msra.mxu0 %v456
    %1139 = vmatpush.msra.mxu0 %v452
    %1140 = vmatpush.msra.mxu0 %v448
    %1141 = vmatpush.msra.mxu0 %v444
    %1142 = vmatmul.f32.gmra.mxu0 %v1123
    %v1143 = vpop.f32.mrf.mxu0
    %v1144 = vadd.f32 %v734, %v1143
    %1145 = vdwg.mxu0
    %1146 = vmatpush.msra.mxu0 %v568
    %1147 = vmatpush.msra.mxu0 %v564
    %1148 = vmatpush.msra.mxu0 %v560
    %1149 = vmatpush.msra.mxu0 %v556
    %1150 = vmatpush.msra.mxu0 %v552
    %1151 = vmatpush.msra.mxu0 %v548
    %1152 = vmatpush.msra.mxu0 %v544
    %1153 = vmatpush.msra.mxu0 %v540
    %1154 = vmatpush.msra.mxu0 %v536
    %1155 = vmatpush.msra.mxu0 %v532
    %1156 = vmatpush.msra.mxu0 %v528
    %1157 = vmatpush.msra.mxu0 %v524
    %1158 = vmatpush.msra.mxu0 %v520
    %1159 = vmatpush.msra.mxu0 %v516
    %1160 = vmatpush.msra.mxu0 %v512
    %1161 = vmatpush.msra.mxu0 %v508
    %1162 = vmatmul.f32.gmra.mxu0 %v965
    %v1163 = vpop.f32.mrf.mxu0
    %v1164 = vadd.f32 %v1144, %v1163
    %1165 = vdwg.mxu0
    %1166 = vmatpush.msra.mxu0 %v505
    %1167 = vmatpush.msra.mxu0 %v501
    %1168 = vmatpush.msra.mxu0 %v497
    %1169 = vmatpush.msra.mxu0 %v493
    %1170 = vmatpush.msra.mxu0 %v489
    %1171 = vmatpush.msra.mxu0 %v485
    %1172 = vmatpush.msra.mxu0 %v481
    %1173 = vmatpush.msra.mxu0 %v477
    %1174 = vmatpush.msra.mxu0 %v473
    %1175 = vmatpush.msra.mxu0 %v469
    %1176 = vmatpush.msra.mxu0 %v465
    %1177 = vmatpush.msra.mxu0 %v461
    %1178 = vmatpush.msra.mxu0 %v457
    %1179 = vmatpush.msra.mxu0 %v453
    %1180 = vmatpush.msra.mxu0 %v449
    %1181 = vmatpush.msra.mxu0 %v445
    %1182 = vmatmul.f32.gmra.mxu0 %v1123
    %v1183 = vpop.f32.mrf.mxu0
    %v1184 = vadd.f32 %v735, %v1183
    %1185 = vdwg.mxu0
    %1186 = vmatpush.msra.mxu0 %v569
    %1187 = vmatpush.msra.mxu0 %v565
    %1188 = vmatpush.msra.mxu0 %v561
    %1189 = vmatpush.msra.mxu0 %v557
    %1190 = vmatpush.msra.mxu0 %v553
    %1191 = vmatpush.msra.mxu0 %v549
    %1192 = vmatpush.msra.mxu0 %v545
    %1193 = vmatpush.msra.mxu0 %v541
    %1194 = vmatpush.msra.mxu0 %v537
    %1195 = vmatpush.msra.mxu0 %v533
    %1196 = vmatpush.msra.mxu0 %v529
    %1197 = vmatpush.msra.mxu0 %v525
    %1198 = vmatpush.msra.mxu0 %v521
    %1199 = vmatpush.msra.mxu0 %v517
    %1200 = vmatpush.msra.mxu0 %v513
    %1201 = vmatpush.msra.mxu0 %v509
    %1202 = vmatmul.f32.gmra.mxu0 %v965
    %v1203 = vpop.f32.mrf.mxu0
    %v1204 = vadd.f32 %v1184, %v1203
    %1205 = vdwg.mxu0
    %1206 = vmatpush.msra.mxu0 %v506
    %1207 = vmatpush.msra.mxu0 %v502
    %1208 = vmatpush.msra.mxu0 %v498
    %1209 = vmatpush.msra.mxu0 %v494
    %1210 = vmatpush.msra.mxu0 %v490
    %1211 = vmatpush.msra.mxu0 %v486
    %1212 = vmatpush.msra.mxu0 %v482
    %1213 = vmatpush.msra.mxu0 %v478
    %1214 = vmatpush.msra.mxu0 %v474
    %1215 = vmatpush.msra.mxu0 %v470
    %1216 = vmatpush.msra.mxu0 %v466
    %1217 = vmatpush.msra.mxu0 %v462
    %1218 = vmatpush.msra.mxu0 %v458
    %1219 = vmatpush.msra.mxu0 %v454
    %1220 = vmatpush.msra.mxu0 %v450
    %1221 = vmatpush.msra.mxu0 %v446
    %1222 = vmatmul.f32.gmra.mxu0 %v1123
    %v1223 = vpop.f32.mrf.mxu0
    %v1224 = vadd.f32 %v736, %v1223
    %1225 = vdwg.mxu0
    %1226 = vmatpush.msra.mxu0 %v570
    %1227 = vmatpush.msra.mxu0 %v566
    %1228 = vmatpush.msra.mxu0 %v562
    %1229 = vmatpush.msra.mxu0 %v558
    %1230 = vmatpush.msra.mxu0 %v554
    %1231 = vmatpush.msra.mxu0 %v550
    %1232 = vmatpush.msra.mxu0 %v546
    %1233 = vmatpush.msra.mxu0 %v542
    %1234 = vmatpush.msra.mxu0 %v538
    %1235 = vmatpush.msra.mxu0 %v534
    %1236 = vmatpush.msra.mxu0 %v530
    %1237 = vmatpush.msra.mxu0 %v526
    %1238 = vmatpush.msra.mxu0 %v522
    %1239 = vmatpush.msra.mxu0 %v518
    %1240 = vmatpush.msra.mxu0 %v514
    %1241 = vmatpush.msra.mxu0 %v510
    %1242 = vmatmul.f32.gmra.mxu0 %v965
    %v1243 = vpop.f32.mrf.mxu0
    %v1244 = vadd.f32 %v1224, %v1243
    %1245 = vdwg.mxu0
    %1246 = vmatpush.msra.mxu0 %v507
    %1247 = vmatpush.msra.mxu0 %v503
    %1248 = vmatpush.msra.mxu0 %v499
    %1249 = vmatpush.msra.mxu0 %v495
    %1250 = vmatpush.msra.mxu0 %v491
    %1251 = vmatpush.msra.mxu0 %v487
    %1252 = vmatpush.msra.mxu0 %v483
    %1253 = vmatpush.msra.mxu0 %v479
    %1254 = vmatpush.msra.mxu0 %v475
    %1255 = vmatpush.msra.mxu0 %v471
    %1256 = vmatpush.msra.mxu0 %v467
    %1257 = vmatpush.msra.mxu0 %v463
    %1258 = vmatpush.msra.mxu0 %v459
    %1259 = vmatpush.msra.mxu0 %v455
    %1260 = vmatpush.msra.mxu0 %v451
    %1261 = vmatpush.msra.mxu0 %v447
    %1262 = vmatmul.f32.gmra.mxu0 %v1123
    %v1263 = vpop.f32.mrf.mxu0
    %v1264 = vadd.f32 %v737, %v1263
    %1265 = vdwg.mxu0
    %1266 = vmatpush.msra.mxu0 %v571
    %1267 = vmatpush.msra.mxu0 %v567
    %1268 = vmatpush.msra.mxu0 %v563
    %1269 = vmatpush.msra.mxu0 %v559
    %1270 = vmatpush.msra.mxu0 %v555
    %1271 = vmatpush.msra.mxu0 %v551
    %1272 = vmatpush.msra.mxu0 %v547
    %1273 = vmatpush.msra.mxu0 %v543
    %1274 = vmatpush.msra.mxu0 %v539
    %1275 = vmatpush.msra.mxu0 %v535
    %1276 = vmatpush.msra.mxu0 %v531
    %1277 = vmatpush.msra.mxu0 %v527
    %1278 = vmatpush.msra.mxu0 %v523
    %1279 = vmatpush.msra.mxu0 %v519
    %1280 = vmatpush.msra.mxu0 %v515
    %1281 = vmatpush.msra.mxu0 %v511
    %1282 = vmatmul.f32.gmra.mxu0 %v965
    %v1283 = vpop.f32.mrf.mxu0
    %v1284 = vadd.f32 %v1264, %v1283
    %1285 = vdwg.mxu0
    %v1286 = vxor.u32 %v1164, 2147483648
    %v1287 = vmul.f32 %v1286, 1.442695
    %v1288 = vpow.pop %v1287
    %v1289 = vadd.f32 %v1288, 1.0
    %v1290 = vrcp.pop %v1289
    %v1291 = vmul.f32 %v1289, %v1290
    %v1292 = vsub.f32 1.0, %v1291
    %v1293 = vmul.f32 %v1290, %v1292
    %v1294 = vadd.f32 %v1290, %v1293
    %vm1295 = vweird.f32 %v1289
    %vm1296 = vweird.f32 %v1290
    %vm1297 = vmor %vm1295, %vm1296
    %v1298 = vsel %vm1297, %v1290, %v1294
    %v1299 = vand.u32 2147483647, %v1289
    %vm1300 = vcmp.eq.f32.partialorder %v1299, 8.507059e+37
    %v1301 = vand.u32 %v1289, 2147483648
    %v1302 = vor.u32 1.1754944e-38, %v1301
    %v1303 = vsel %vm1300, %v1302, %v1298
    %v1304 = vmul.f32 1.0, %v1303
    %v1305 = vxor.u32 %v1204, 2147483648
    %v1306 = vmul.f32 %v1305, 1.442695
    %v1307 = vpow.pop %v1306
    %v1308 = vadd.f32 %v1307, 1.0
    %v1309 = vrcp.pop %v1308
    %v1310 = vmul.f32 %v1308, %v1309
    %v1311 = vsub.f32 1.0, %v1310
    %v1312 = vmul.f32 %v1309, %v1311
    %v1313 = vadd.f32 %v1309, %v1312
    %vm1314 = vweird.f32 %v1308
    %vm1315 = vweird.f32 %v1309
    %vm1316 = vmor %vm1314, %vm1315
    %v1317 = vsel %vm1316, %v1309, %v1313
    %v1318 = vand.u32 2147483647, %v1308
    %vm1319 = vcmp.eq.f32.partialorder %v1318, 8.507059e+37
    %v1320 = vand.u32 %v1308, 2147483648
    %v1321 = vor.u32 1.1754944e-38, %v1320
    %v1322 = vsel %vm1319, %v1321, %v1317
    %v1323 = vmul.f32 1.0, %v1322
    %v1324 = vtanh.pop %v1244
    %v1325 = vxor.u32 %v1284, 2147483648
    %v1326 = vmul.f32 %v1325, 1.442695
    %v1327 = vpow.pop %v1326
    %v1328 = vadd.f32 %v1327, 1.0
    %v1329 = vrcp.pop %v1328
    %v1330 = vmul.f32 %v1328, %v1329
    %v1331 = vsub.f32 1.0, %v1330
    %v1332 = vmul.f32 %v1329, %v1331
    %v1333 = vadd.f32 %v1329, %v1332
    %vm1334 = vweird.f32 %v1328
    %vm1335 = vweird.f32 %v1329
    %vm1336 = vmor %vm1334, %vm1335
    %v1337 = vsel %vm1336, %v1329, %v1333
    %v1338 = vand.u32 2147483647, %v1328
    %vm1339 = vcmp.eq.f32.partialorder %v1338, 8.507059e+37
    %v1340 = vand.u32 %v1328, 2147483648
    %v1341 = vor.u32 1.1754944e-38, %v1340
    %v1342 = vsel %vm1339, %v1341, %v1337
    %v1343 = vmul.f32 1.0, %v1342
    %v1344 = vmul.f32 %v1323, %v966
    %v1345 = vmul.f32 %v1304, %v1324
    %v1346 = vadd.f32 %v1344, %v1345
    %v1347 = vtanh.pop %v1346
    %v1348 = vmul.f32 %v1343, %v1347
    %v1349 = vsel %vm972, %v1348, %v965
    %v1350 = vsel %vm972, %v1346, %v966
    %v1351 = vsel %vm972, %v1348, 0.0
    %vm1352 = vcmp.gt.s32.totalorder %v573, 2
    %v1353 = vsel %vm1352, 1, 0
    %1354 = vset.pattern.permute.xlu0 0
    %1355 = vperm.xlu0 %1354, %v1353
    %v1356 = vpop.permute.xlu0 %1355
    %vm1357 = vcmp.eq.s32.totalorder %v1356, 1
    %v1358 = vld [vmem:[#allocation2 + $0x40] sm:$0xff]
    %v1359 = vld [vmem:[#allocation2 + $0x48] sm:$0xff]
    %v1360 = vld [vmem:[#allocation2 + $0x50] sm:$0xff]
    %v1361 = vld [vmem:[#allocation2 + $0x58] sm:$0xff]
    %1362 = vmatpush.msra.mxu0 %v440
    %1363 = vmatpush.msra.mxu0 %v436
    %1364 = vmatpush.msra.mxu0 %v432
    %1365 = vmatpush.msra.mxu0 %v428
    %1366 = vmatpush.msra.mxu0 %v424
    %1367 = vmatpush.msra.mxu0 %v420
    %1368 = vmatpush.msra.mxu0 %v416
    %1369 = vmatpush.msra.mxu0 %v412
    %1370 = vmatpush.msra.mxu0 %v408
    %1371 = vmatpush.msra.mxu0 %v404
    %1372 = vmatpush.msra.mxu0 %v400
    %1373 = vmatpush.msra.mxu0 %v396
    %1374 = vmatpush.msra.mxu0 %v392
    %1375 = vmatpush.msra.mxu0 %v388
    %1376 = vmatpush.msra.mxu0 %v384
    %1377 = vmatpush.msra.mxu0 %v380
    %1378 = vmatmul.f32.gmra.mxu0 %v1124
    %v1379 = vpop.f32.mrf.mxu0
    %v1380 = vadd.f32 0.0, %v1379
    %1381 = vdwg.mxu0
    %1382 = vmatpush.msra.mxu0 %v441
    %1383 = vmatpush.msra.mxu0 %v437
    %1384 = vmatpush.msra.mxu0 %v433
    %1385 = vmatpush.msra.mxu0 %v429
    %1386 = vmatpush.msra.mxu0 %v425
    %1387 = vmatpush.msra.mxu0 %v421
    %1388 = vmatpush.msra.mxu0 %v417
    %1389 = vmatpush.msra.mxu0 %v413
    %1390 = vmatpush.msra.mxu0 %v409
    %1391 = vmatpush.msra.mxu0 %v405
    %1392 = vmatpush.msra.mxu0 %v401
    %1393 = vmatpush.msra.mxu0 %v397
    %1394 = vmatpush.msra.mxu0 %v393
    %1395 = vmatpush.msra.mxu0 %v389
    %1396 = vmatpush.msra.mxu0 %v385
    %1397 = vmatpush.msra.mxu0 %v381
    %1398 = vmatmul.f32.gmra.mxu0 %v1124
    %v1399 = vpop.f32.mrf.mxu0
    %v1400 = vadd.f32 0.0, %v1399
    %1401 = vdwg.mxu0
    %1402 = vmatpush.msra.mxu0 %v442
    %1403 = vmatpush.msra.mxu0 %v438
    %1404 = vmatpush.msra.mxu0 %v434
    %1405 = vmatpush.msra.mxu0 %v430
    %1406 = vmatpush.msra.mxu0 %v426
    %1407 = vmatpush.msra.mxu0 %v422
    %1408 = vmatpush.msra.mxu0 %v418
    %1409 = vmatpush.msra.mxu0 %v414
    %1410 = vmatpush.msra.mxu0 %v410
    %1411 = vmatpush.msra.mxu0 %v406
    %1412 = vmatpush.msra.mxu0 %v402
    %1413 = vmatpush.msra.mxu0 %v398
    %1414 = vmatpush.msra.mxu0 %v394
    %1415 = vmatpush.msra.mxu0 %v390
    %1416 = vmatpush.msra.mxu0 %v386
    %1417 = vmatpush.msra.mxu0 %v382
    %1418 = vmatmul.f32.gmra.mxu0 %v1124
    %v1419 = vpop.f32.mrf.mxu0
    %v1420 = vadd.f32 0.0, %v1419
    %1421 = vdwg.mxu0
    %1422 = vmatpush.msra.mxu0 %v443
    %1423 = vmatpush.msra.mxu0 %v439
    %1424 = vmatpush.msra.mxu0 %v435
    %1425 = vmatpush.msra.mxu0 %v431
    %1426 = vmatpush.msra.mxu0 %v427
    %1427 = vmatpush.msra.mxu0 %v423
    %1428 = vmatpush.msra.mxu0 %v419
    %1429 = vmatpush.msra.mxu0 %v415
    %1430 = vmatpush.msra.mxu0 %v411
    %1431 = vmatpush.msra.mxu0 %v407
    %1432 = vmatpush.msra.mxu0 %v403
    %1433 = vmatpush.msra.mxu0 %v399
    %1434 = vmatpush.msra.mxu0 %v395
    %1435 = vmatpush.msra.mxu0 %v391
    %1436 = vmatpush.msra.mxu0 %v387
    %1437 = vmatpush.msra.mxu0 %v383
    %1438 = vmatmul.f32.gmra.mxu0 %v1124
    %v1439 = vpop.f32.mrf.mxu0
    %v1440 = vadd.f32 0.0, %v1439
    %1441 = vdwg.mxu0
    %v1442 = vadd.f32 %v1358, %v1380
    %v1443 = vadd.f32 %v1359, %v1400
    %v1444 = vadd.f32 %v1360, %v1420
    %v1445 = vadd.f32 %v1361, %v1440
    %v1446 = vxor.u32 %v1442, 2147483648
    %v1447 = vmul.f32 %v1446, 1.442695
    %v1448 = vpow.pop %v1447
    %v1449 = vadd.f32 %v1448, 1.0
    %v1450 = vrcp.pop %v1449
    %v1451 = vmul.f32 %v1449, %v1450
    %v1452 = vsub.f32 1.0, %v1451
    %v1453 = vmul.f32 %v1450, %v1452
    %v1454 = vadd.f32 %v1450, %v1453
    %vm1455 = vweird.f32 %v1449
    %vm1456 = vweird.f32 %v1450
    %vm1457 = vmor %vm1455, %vm1456
    %v1458 = vsel %vm1457, %v1450, %v1454
    %v1459 = vand.u32 2147483647, %v1449
    %vm1460 = vcmp.eq.f32.partialorder %v1459, 8.507059e+37
    %v1461 = vand.u32 %v1449, 2147483648
    %v1462 = vor.u32 1.1754944e-38, %v1461
    %v1463 = vsel %vm1460, %v1462, %v1458
    %v1464 = vmul.f32 1.0, %v1463
    %v1465 = vxor.u32 %v1443, 2147483648
    %v1466 = vmul.f32 %v1465, 1.442695
    %v1467 = vpow.pop %v1466
    %v1468 = vadd.f32 %v1467, 1.0
    %v1469 = vrcp.pop %v1468
    %v1470 = vmul.f32 %v1468, %v1469
    %v1471 = vsub.f32 1.0, %v1470
    %v1472 = vmul.f32 %v1469, %v1471
    %v1473 = vadd.f32 %v1469, %v1472
    %vm1474 = vweird.f32 %v1468
    %vm1475 = vweird.f32 %v1469
    %vm1476 = vmor %vm1474, %vm1475
    %v1477 = vsel %vm1476, %v1469, %v1473
    %v1478 = vand.u32 2147483647, %v1468
    %vm1479 = vcmp.eq.f32.partialorder %v1478, 8.507059e+37
    %v1480 = vand.u32 %v1468, 2147483648
    %v1481 = vor.u32 1.1754944e-38, %v1480
    %v1482 = vsel %vm1479, %v1481, %v1477
    %v1483 = vmul.f32 1.0, %v1482
    %v1484 = vtanh.pop %v1444
    %v1485 = vxor.u32 %v1445, 2147483648
    %v1486 = vmul.f32 %v1485, 1.442695
    %v1487 = vpow.pop %v1486
    %v1488 = vadd.f32 %v1487, 1.0
    %v1489 = vrcp.pop %v1488
    %v1490 = vmul.f32 %v1488, %v1489
    %v1491 = vsub.f32 1.0, %v1490
    %v1492 = vmul.f32 %v1489, %v1491
    %v1493 = vadd.f32 %v1489, %v1492
    %vm1494 = vweird.f32 %v1488
    %vm1495 = vweird.f32 %v1489
    %vm1496 = vmor %vm1494, %vm1495
    %v1497 = vsel %vm1496, %v1489, %v1493
    %v1498 = vand.u32 2147483647, %v1488
    %vm1499 = vcmp.eq.f32.partialorder %v1498, 8.507059e+37
    %v1500 = vand.u32 %v1488, 2147483648
    %v1501 = vor.u32 1.1754944e-38, %v1500
    %v1502 = vsel %vm1499, %v1501, %v1497
    %v1503 = vmul.f32 1.0, %v1502
    %v1504 = vmul.f32 %v1483, %v1125
    %v1505 = vmul.f32 %v1464, %v1484
    %v1506 = vadd.f32 %v1504, %v1505
    %v1507 = vtanh.pop %v1506
    %v1508 = vmul.f32 %v1503, %v1507
    %v1509 = vsel %vm1357, %v1508, %v1124
    %v1510 = vsel %vm1357, %v1506, %v1125
    %1511 = vmatpush.msra.mxu0 %v504
    %1512 = vmatpush.msra.mxu0 %v500
    %1513 = vmatpush.msra.mxu0 %v496
    %1514 = vmatpush.msra.mxu0 %v492
    %1515 = vmatpush.msra.mxu0 %v488
    %1516 = vmatpush.msra.mxu0 %v484
    %1517 = vmatpush.msra.mxu0 %v480
    %1518 = vmatpush.msra.mxu0 %v476
    %1519 = vmatpush.msra.mxu0 %v472
    %1520 = vmatpush.msra.mxu0 %v468
    %1521 = vmatpush.msra.mxu0 %v464
    %1522 = vmatpush.msra.mxu0 %v460
    %1523 = vmatpush.msra.mxu0 %v456
    %1524 = vmatpush.msra.mxu0 %v452
    %1525 = vmatpush.msra.mxu0 %v448
    %1526 = vmatpush.msra.mxu0 %v444
    %1527 = vmatmul.f32.gmra.mxu0 %v1508
    %v1528 = vpop.f32.mrf.mxu0
    %v1529 = vadd.f32 %v734, %v1528
    %1530 = vdwg.mxu0
    %1531 = vmatpush.msra.mxu0 %v568
    %1532 = vmatpush.msra.mxu0 %v564
    %1533 = vmatpush.msra.mxu0 %v560
    %1534 = vmatpush.msra.mxu0 %v556
    %1535 = vmatpush.msra.mxu0 %v552
    %1536 = vmatpush.msra.mxu0 %v548
    %1537 = vmatpush.msra.mxu0 %v544
    %1538 = vmatpush.msra.mxu0 %v540
    %1539 = vmatpush.msra.mxu0 %v536
    %1540 = vmatpush.msra.mxu0 %v532
    %1541 = vmatpush.msra.mxu0 %v528
    %1542 = vmatpush.msra.mxu0 %v524
    %1543 = vmatpush.msra.mxu0 %v520
    %1544 = vmatpush.msra.mxu0 %v516
    %1545 = vmatpush.msra.mxu0 %v512
    %1546 = vmatpush.msra.mxu0 %v508
    %1547 = vmatmul.f32.gmra.mxu0 %v1349
    %v1548 = vpop.f32.mrf.mxu0
    %v1549 = vadd.f32 %v1529, %v1548
    %1550 = vdwg.mxu0
    %1551 = vmatpush.msra.mxu0 %v505
    %1552 = vmatpush.msra.mxu0 %v501
    %1553 = vmatpush.msra.mxu0 %v497
    %1554 = vmatpush.msra.mxu0 %v493
    %1555 = vmatpush.msra.mxu0 %v489
    %1556 = vmatpush.msra.mxu0 %v485
    %1557 = vmatpush.msra.mxu0 %v481
    %1558 = vmatpush.msra.mxu0 %v477
    %1559 = vmatpush.msra.mxu0 %v473
    %1560 = vmatpush.msra.mxu0 %v469
    %1561 = vmatpush.msra.mxu0 %v465
    %1562 = vmatpush.msra.mxu0 %v461
    %1563 = vmatpush.msra.mxu0 %v457
    %1564 = vmatpush.msra.mxu0 %v453
    %1565 = vmatpush.msra.mxu0 %v449
    %1566 = vmatpush.msra.mxu0 %v445
    %1567 = vmatmul.f32.gmra.mxu0 %v1508
    %v1568 = vpop.f32.mrf.mxu0
    %v1569 = vadd.f32 %v735, %v1568
    %1570 = vdwg.mxu0
    %1571 = vmatpush.msra.mxu0 %v569
    %1572 = vmatpush.msra.mxu0 %v565
    %1573 = vmatpush.msra.mxu0 %v561
    %1574 = vmatpush.msra.mxu0 %v557
    %1575 = vmatpush.msra.mxu0 %v553
    %1576 = vmatpush.msra.mxu0 %v549
    %1577 = vmatpush.msra.mxu0 %v545
    %1578 = vmatpush.msra.mxu0 %v541
    %1579 = vmatpush.msra.mxu0 %v537
    %1580 = vmatpush.msra.mxu0 %v533
    %1581 = vmatpush.msra.mxu0 %v529
    %1582 = vmatpush.msra.mxu0 %v525
    %1583 = vmatpush.msra.mxu0 %v521
    %1584 = vmatpush.msra.mxu0 %v517
    %1585 = vmatpush.msra.mxu0 %v513
    %1586 = vmatpush.msra.mxu0 %v509
    %1587 = vmatmul.f32.gmra.mxu0 %v1349
    %v1588 = vpop.f32.mrf.mxu0
    %v1589 = vadd.f32 %v1569, %v1588
    %1590 = vdwg.mxu0
    %1591 = vmatpush.msra.mxu0 %v506
    %1592 = vmatpush.msra.mxu0 %v502
    %1593 = vmatpush.msra.mxu0 %v498
    %1594 = vmatpush.msra.mxu0 %v494
    %1595 = vmatpush.msra.mxu0 %v490
    %1596 = vmatpush.msra.mxu0 %v486
    %1597 = vmatpush.msra.mxu0 %v482
    %1598 = vmatpush.msra.mxu0 %v478
    %1599 = vmatpush.msra.mxu0 %v474
    %1600 = vmatpush.msra.mxu0 %v470
    %1601 = vmatpush.msra.mxu0 %v466
    %1602 = vmatpush.msra.mxu0 %v462
    %1603 = vmatpush.msra.mxu0 %v458
    %1604 = vmatpush.msra.mxu0 %v454
    %1605 = vmatpush.msra.mxu0 %v450
    %1606 = vmatpush.msra.mxu0 %v446
    %1607 = vmatmul.f32.gmra.mxu0 %v1508
    %v1608 = vpop.f32.mrf.mxu0
    %v1609 = vadd.f32 %v736, %v1608
    %1610 = vdwg.mxu0
    %1611 = vmatpush.msra.mxu0 %v570
    %1612 = vmatpush.msra.mxu0 %v566
    %1613 = vmatpush.msra.mxu0 %v562
    %1614 = vmatpush.msra.mxu0 %v558
    %1615 = vmatpush.msra.mxu0 %v554
    %1616 = vmatpush.msra.mxu0 %v550
    %1617 = vmatpush.msra.mxu0 %v546
    %1618 = vmatpush.msra.mxu0 %v542
    %1619 = vmatpush.msra.mxu0 %v538
    %1620 = vmatpush.msra.mxu0 %v534
    %1621 = vmatpush.msra.mxu0 %v530
    %1622 = vmatpush.msra.mxu0 %v526
    %1623 = vmatpush.msra.mxu0 %v522
    %1624 = vmatpush.msra.mxu0 %v518
    %1625 = vmatpush.msra.mxu0 %v514
    %1626 = vmatpush.msra.mxu0 %v510
    %1627 = vmatmul.f32.gmra.mxu0 %v1349
    %v1628 = vpop.f32.mrf.mxu0
    %v1629 = vadd.f32 %v1609, %v1628
    %1630 = vdwg.mxu0
    %1631 = vmatpush.msra.mxu0 %v507
    %1632 = vmatpush.msra.mxu0 %v503
    %1633 = vmatpush.msra.mxu0 %v499
    %1634 = vmatpush.msra.mxu0 %v495
    %1635 = vmatpush.msra.mxu0 %v491
    %1636 = vmatpush.msra.mxu0 %v487
    %1637 = vmatpush.msra.mxu0 %v483
    %1638 = vmatpush.msra.mxu0 %v479
    %1639 = vmatpush.msra.mxu0 %v475
    %1640 = vmatpush.msra.mxu0 %v471
    %1641 = vmatpush.msra.mxu0 %v467
    %1642 = vmatpush.msra.mxu0 %v463
    %1643 = vmatpush.msra.mxu0 %v459
    %1644 = vmatpush.msra.mxu0 %v455
    %1645 = vmatpush.msra.mxu0 %v451
    %1646 = vmatpush.msra.mxu0 %v447
    %1647 = vmatmul.f32.gmra.mxu0 %v1508
    %v1648 = vpop.f32.mrf.mxu0
    %v1649 = vadd.f32 %v737, %v1648
    %1650 = vdwg.mxu0
    %1651 = vmatpush.msra.mxu0 %v571
    %1652 = vmatpush.msra.mxu0 %v567
    %1653 = vmatpush.msra.mxu0 %v563
    %1654 = vmatpush.msra.mxu0 %v559
    %1655 = vmatpush.msra.mxu0 %v555
    %1656 = vmatpush.msra.mxu0 %v551
    %1657 = vmatpush.msra.mxu0 %v547
    %1658 = vmatpush.msra.mxu0 %v543
    %1659 = vmatpush.msra.mxu0 %v539
    %1660 = vmatpush.msra.mxu0 %v535
    %1661 = vmatpush.msra.mxu0 %v531
    %1662 = vmatpush.msra.mxu0 %v527
    %1663 = vmatpush.msra.mxu0 %v523
    %1664 = vmatpush.msra.mxu0 %v519
    %1665 = vmatpush.msra.mxu0 %v515
    %1666 = vmatpush.msra.mxu0 %v511
    %1667 = vmatmul.f32.gmra.mxu0 %v1349
    %v1668 = vpop.f32.mrf.mxu0
    %v1669 = vadd.f32 %v1649, %v1668
    %1670 = vdwg.mxu0
    %v1671 = vxor.u32 %v1549, 2147483648
    %v1672 = vmul.f32 %v1671, 1.442695
    %v1673 = vpow.pop %v1672
    %v1674 = vadd.f32 %v1673, 1.0
    %v1675 = vrcp.pop %v1674
    %v1676 = vmul.f32 %v1674, %v1675
    %v1677 = vsub.f32 1.0, %v1676
    %v1678 = vmul.f32 %v1675, %v1677
    %v1679 = vadd.f32 %v1675, %v1678
    %vm1680 = vweird.f32 %v1674
    %vm1681 = vweird.f32 %v1675
    %vm1682 = vmor %vm1680, %vm1681
    %v1683 = vsel %vm1682, %v1675, %v1679
    %v1684 = vand.u32 2147483647, %v1674
    %vm1685 = vcmp.eq.f32.partialorder %v1684, 8.507059e+37
    %v1686 = vand.u32 %v1674, 2147483648
    %v1687 = vor.u32 1.1754944e-38, %v1686
    %v1688 = vsel %vm1685, %v1687, %v1683
    %v1689 = vmul.f32 1.0, %v1688
    %v1690 = vxor.u32 %v1589, 2147483648
    %v1691 = vmul.f32 %v1690, 1.442695
    %v1692 = vpow.pop %v1691
    %v1693 = vadd.f32 %v1692, 1.0
    %v1694 = vrcp.pop %v1693
    %v1695 = vmul.f32 %v1693, %v1694
    %v1696 = vsub.f32 1.0, %v1695
    %v1697 = vmul.f32 %v1694, %v1696
    %v1698 = vadd.f32 %v1694, %v1697
    %vm1699 = vweird.f32 %v1693
    %vm1700 = vweird.f32 %v1694
    %vm1701 = vmor %vm1699, %vm1700
    %v1702 = vsel %vm1701, %v1694, %v1698
    %v1703 = vand.u32 2147483647, %v1693
    %vm1704 = vcmp.eq.f32.partialorder %v1703, 8.507059e+37
    %v1705 = vand.u32 %v1693, 2147483648
    %v1706 = vor.u32 1.1754944e-38, %v1705
    %v1707 = vsel %vm1704, %v1706, %v1702
    %v1708 = vmul.f32 1.0, %v1707
    %v1709 = vtanh.pop %v1629
    %v1710 = vxor.u32 %v1669, 2147483648
    %v1711 = vmul.f32 %v1710, 1.442695
    %v1712 = vpow.pop %v1711
    %v1713 = vadd.f32 %v1712, 1.0
    %v1714 = vrcp.pop %v1713
    %v1715 = vmul.f32 %v1713, %v1714
    %v1716 = vsub.f32 1.0, %v1715
    %v1717 = vmul.f32 %v1714, %v1716
    %v1718 = vadd.f32 %v1714, %v1717
    %vm1719 = vweird.f32 %v1713
    %vm1720 = vweird.f32 %v1714
    %vm1721 = vmor %vm1719, %vm1720
    %v1722 = vsel %vm1721, %v1714, %v1718
    %v1723 = vand.u32 2147483647, %v1713
    %vm1724 = vcmp.eq.f32.partialorder %v1723, 8.507059e+37
    %v1725 = vand.u32 %v1713, 2147483648
    %v1726 = vor.u32 1.1754944e-38, %v1725
    %v1727 = vsel %vm1724, %v1726, %v1722
    %v1728 = vmul.f32 1.0, %v1727
    %v1729 = vmul.f32 %v1708, %v1350
    %v1730 = vmul.f32 %v1689, %v1709
    %v1731 = vadd.f32 %v1729, %v1730
    %v1732 = vtanh.pop %v1731
    %v1733 = vmul.f32 %v1728, %v1732
    %v1734 = vsel %vm1357, %v1733, %v1349
    %v1735 = vsel %vm1357, %v1731, %v1350
    %v1736 = vsel %vm1357, %v1733, 0.0
    %vm1737 = vcmp.gt.s32.totalorder %v573, 3
    %v1738 = vsel %vm1737, 1, 0
    %1739 = vset.pattern.permute.xlu0 0
    %1740 = vperm.xlu0 %1739, %v1738
    %v1741 = vpop.permute.xlu0 %1740
    %vm1742 = vcmp.eq.s32.totalorder %v1741, 1
    %v1743 = vld [vmem:[#allocation2 + $0x60] sm:$0xff]
    %v1744 = vld [vmem:[#allocation2 + $0x68] sm:$0xff]
    %v1745 = vld [vmem:[#allocation2 + $0x70] sm:$0xff]
    %v1746 = vld [vmem:[#allocation2 + $0x78] sm:$0xff]
    %1747 = vmatpush.msra.mxu0 %v440
    %1748 = vmatpush.msra.mxu0 %v436
    %1749 = vmatpush.msra.mxu0 %v432
    %1750 = vmatpush.msra.mxu0 %v428
    %1751 = vmatpush.msra.mxu0 %v424
    %1752 = vmatpush.msra.mxu0 %v420
    %1753 = vmatpush.msra.mxu0 %v416
    %1754 = vmatpush.msra.mxu0 %v412
    %1755 = vmatpush.msra.mxu0 %v408
    %1756 = vmatpush.msra.mxu0 %v404
    %1757 = vmatpush.msra.mxu0 %v400
    %1758 = vmatpush.msra.mxu0 %v396
    %1759 = vmatpush.msra.mxu0 %v392
    %1760 = vmatpush.msra.mxu0 %v388
    %1761 = vmatpush.msra.mxu0 %v384
    %1762 = vmatpush.msra.mxu0 %v380
    %1763 = vmatmul.f32.gmra.mxu0 %v1509
    %v1764 = vpop.f32.mrf.mxu0
    %v1765 = vadd.f32 0.0, %v1764
    %1766 = vdwg.mxu0
    %1767 = vmatpush.msra.mxu0 %v441
    %1768 = vmatpush.msra.mxu0 %v437
    %1769 = vmatpush.msra.mxu0 %v433
    %1770 = vmatpush.msra.mxu0 %v429
    %1771 = vmatpush.msra.mxu0 %v425
    %1772 = vmatpush.msra.mxu0 %v421
    %1773 = vmatpush.msra.mxu0 %v417
    %1774 = vmatpush.msra.mxu0 %v413
    %1775 = vmatpush.msra.mxu0 %v409
    %1776 = vmatpush.msra.mxu0 %v405
    %1777 = vmatpush.msra.mxu0 %v401
    %1778 = vmatpush.msra.mxu0 %v397
    %1779 = vmatpush.msra.mxu0 %v393
    %1780 = vmatpush.msra.mxu0 %v389
    %1781 = vmatpush.msra.mxu0 %v385
    %1782 = vmatpush.msra.mxu0 %v381
    %1783 = vmatmul.f32.gmra.mxu0 %v1509
    %v1784 = vpop.f32.mrf.mxu0
    %v1785 = vadd.f32 0.0, %v1784
    %1786 = vdwg.mxu0
    %1787 = vmatpush.msra.mxu0 %v442
    %1788 = vmatpush.msra.mxu0 %v438
    %1789 = vmatpush.msra.mxu0 %v434
    %1790 = vmatpush.msra.mxu0 %v430
    %1791 = vmatpush.msra.mxu0 %v426
    %1792 = vmatpush.msra.mxu0 %v422
    %1793 = vmatpush.msra.mxu0 %v418
    %1794 = vmatpush.msra.mxu0 %v414
    %1795 = vmatpush.msra.mxu0 %v410
    %1796 = vmatpush.msra.mxu0 %v406
    %1797 = vmatpush.msra.mxu0 %v402
    %1798 = vmatpush.msra.mxu0 %v398
    %1799 = vmatpush.msra.mxu0 %v394
    %1800 = vmatpush.msra.mxu0 %v390
    %1801 = vmatpush.msra.mxu0 %v386
    %1802 = vmatpush.msra.mxu0 %v382
    %1803 = vmatmul.f32.gmra.mxu0 %v1509
    %v1804 = vpop.f32.mrf.mxu0
    %v1805 = vadd.f32 0.0, %v1804
    %1806 = vdwg.mxu0
    %1807 = vmatpush.msra.mxu0 %v443
    %1808 = vmatpush.msra.mxu0 %v439
    %1809 = vmatpush.msra.mxu0 %v435
    %1810 = vmatpush.msra.mxu0 %v431
    %1811 = vmatpush.msra.mxu0 %v427
    %1812 = vmatpush.msra.mxu0 %v423
    %1813 = vmatpush.msra.mxu0 %v419
    %1814 = vmatpush.msra.mxu0 %v415
    %1815 = vmatpush.msra.mxu0 %v411
    %1816 = vmatpush.msra.mxu0 %v407
    %1817 = vmatpush.msra.mxu0 %v403
    %1818 = vmatpush.msra.mxu0 %v399
    %1819 = vmatpush.msra.mxu0 %v395
    %1820 = vmatpush.msra.mxu0 %v391
    %1821 = vmatpush.msra.mxu0 %v387
    %1822 = vmatpush.msra.mxu0 %v383
    %1823 = vmatmul.f32.gmra.mxu0 %v1509
    %v1824 = vpop.f32.mrf.mxu0
    %v1825 = vadd.f32 0.0, %v1824
    %1826 = vdwg.mxu0
    %v1827 = vadd.f32 %v1743, %v1765
    %v1828 = vadd.f32 %v1744, %v1785
    %v1829 = vadd.f32 %v1745, %v1805
    %v1830 = vadd.f32 %v1746, %v1825
    %v1831 = vxor.u32 %v1827, 2147483648
    %v1832 = vmul.f32 %v1831, 1.442695
    %v1833 = vpow.pop %v1832
    %v1834 = vadd.f32 %v1833, 1.0
    %v1835 = vrcp.pop %v1834
    %v1836 = vmul.f32 %v1834, %v1835
    %v1837 = vsub.f32 1.0, %v1836
    %v1838 = vmul.f32 %v1835, %v1837
    %v1839 = vadd.f32 %v1835, %v1838
    %vm1840 = vweird.f32 %v1834
    %vm1841 = vweird.f32 %v1835
    %vm1842 = vmor %vm1840, %vm1841
    %v1843 = vsel %vm1842, %v1835, %v1839
    %v1844 = vand.u32 2147483647, %v1834
    %vm1845 = vcmp.eq.f32.partialorder %v1844, 8.507059e+37
    %v1846 = vand.u32 %v1834, 2147483648
    %v1847 = vor.u32 1.1754944e-38, %v1846
    %v1848 = vsel %vm1845, %v1847, %v1843
    %v1849 = vmul.f32 1.0, %v1848
    %v1850 = vxor.u32 %v1828, 2147483648
    %v1851 = vmul.f32 %v1850, 1.442695
    %v1852 = vpow.pop %v1851
    %v1853 = vadd.f32 %v1852, 1.0
    %v1854 = vrcp.pop %v1853
    %v1855 = vmul.f32 %v1853, %v1854
    %v1856 = vsub.f32 1.0, %v1855
    %v1857 = vmul.f32 %v1854, %v1856
    %v1858 = vadd.f32 %v1854, %v1857
    %vm1859 = vweird.f32 %v1853
    %vm1860 = vweird.f32 %v1854
    %vm1861 = vmor %vm1859, %vm1860
    %v1862 = vsel %vm1861, %v1854, %v1858
    %v1863 = vand.u32 2147483647, %v1853
    %vm1864 = vcmp.eq.f32.partialorder %v1863, 8.507059e+37
    %v1865 = vand.u32 %v1853, 2147483648
    %v1866 = vor.u32 1.1754944e-38, %v1865
    %v1867 = vsel %vm1864, %v1866, %v1862
    %v1868 = vmul.f32 1.0, %v1867
    %v1869 = vtanh.pop %v1829
    %v1870 = vxor.u32 %v1830, 2147483648
    %v1871 = vmul.f32 %v1870, 1.442695
    %v1872 = vpow.pop %v1871
    %v1873 = vadd.f32 %v1872, 1.0
    %v1874 = vrcp.pop %v1873
    %v1875 = vmul.f32 %v1873, %v1874
    %v1876 = vsub.f32 1.0, %v1875
    %v1877 = vmul.f32 %v1874, %v1876
    %v1878 = vadd.f32 %v1874, %v1877
    %vm1879 = vweird.f32 %v1873
    %vm1880 = vweird.f32 %v1874
    %vm1881 = vmor %vm1879, %vm1880
    %v1882 = vsel %vm1881, %v1874, %v1878
    %v1883 = vand.u32 2147483647, %v1873
    %vm1884 = vcmp.eq.f32.partialorder %v1883, 8.507059e+37
    %v1885 = vand.u32 %v1873, 2147483648
    %v1886 = vor.u32 1.1754944e-38, %v1885
    %v1887 = vsel %vm1884, %v1886, %v1882
    %v1888 = vmul.f32 1.0, %v1887
    %v1889 = vmul.f32 %v1868, %v1510
    %v1890 = vmul.f32 %v1849, %v1869
    %v1891 = vadd.f32 %v1889, %v1890
    %v1892 = vtanh.pop %v1891
    %v1893 = vmul.f32 %v1888, %v1892
    %v1894 = vsel %vm1742, %v1893, %v1509
    %v1895 = vsel %vm1742, %v1891, %v1510
    %1896 = vmatpush.msra.mxu0 %v504
    %1897 = vmatpush.msra.mxu0 %v500
    %1898 = vmatpush.msra.mxu0 %v496
    %1899 = vmatpush.msra.mxu0 %v492
    %1900 = vmatpush.msra.mxu0 %v488
    %1901 = vmatpush.msra.mxu0 %v484
    %1902 = vmatpush.msra.mxu0 %v480
    %1903 = vmatpush.msra.mxu0 %v476
    %1904 = vmatpush.msra.mxu0 %v472
    %1905 = vmatpush.msra.mxu0 %v468
    %1906 = vmatpush.msra.mxu0 %v464
    %1907 = vmatpush.msra.mxu0 %v460
    %1908 = vmatpush.msra.mxu0 %v456
    %1909 = vmatpush.msra.mxu0 %v452
    %1910 = vmatpush.msra.mxu0 %v448
    %1911 = vmatpush.msra.mxu0 %v444
    %1912 = vmatmul.f32.gmra.mxu0 %v1893
    %v1913 = vpop.f32.mrf.mxu0
    %v1914 = vadd.f32 %v734, %v1913
    %1915 = vdwg.mxu0
    %1916 = vmatpush.msra.mxu0 %v568
    %1917 = vmatpush.msra.mxu0 %v564
    %1918 = vmatpush.msra.mxu0 %v560
    %1919 = vmatpush.msra.mxu0 %v556
    %1920 = vmatpush.msra.mxu0 %v552
    %1921 = vmatpush.msra.mxu0 %v548
    %1922 = vmatpush.msra.mxu0 %v544
    %1923 = vmatpush.msra.mxu0 %v540
    %1924 = vmatpush.msra.mxu0 %v536
    %1925 = vmatpush.msra.mxu0 %v532
    %1926 = vmatpush.msra.mxu0 %v528
    %1927 = vmatpush.msra.mxu0 %v524
    %1928 = vmatpush.msra.mxu0 %v520
    %1929 = vmatpush.msra.mxu0 %v516
    %1930 = vmatpush.msra.mxu0 %v512
    %1931 = vmatpush.msra.mxu0 %v508
    %1932 = vmatmul.f32.gmra.mxu0 %v1734
    %v1933 = vpop.f32.mrf.mxu0
    %v1934 = vadd.f32 %v1914, %v1933
    %1935 = vdwg.mxu0
    %1936 = vmatpush.msra.mxu0 %v505
    %1937 = vmatpush.msra.mxu0 %v501
    %1938 = vmatpush.msra.mxu0 %v497
    %1939 = vmatpush.msra.mxu0 %v493
    %1940 = vmatpush.msra.mxu0 %v489
    %1941 = vmatpush.msra.mxu0 %v485
    %1942 = vmatpush.msra.mxu0 %v481
    %1943 = vmatpush.msra.mxu0 %v477
    %1944 = vmatpush.msra.mxu0 %v473
    %1945 = vmatpush.msra.mxu0 %v469
    %1946 = vmatpush.msra.mxu0 %v465
    %1947 = vmatpush.msra.mxu0 %v461
    %1948 = vmatpush.msra.mxu0 %v457
    %1949 = vmatpush.msra.mxu0 %v453
    %1950 = vmatpush.msra.mxu0 %v449
    %1951 = vmatpush.msra.mxu0 %v445
    %1952 = vmatmul.f32.gmra.mxu0 %v1893
    %v1953 = vpop.f32.mrf.mxu0
    %v1954 = vadd.f32 %v735, %v1953
    %1955 = vdwg.mxu0
    %1956 = vmatpush.msra.mxu0 %v569
    %1957 = vmatpush.msra.mxu0 %v565
    %1958 = vmatpush.msra.mxu0 %v561
    %1959 = vmatpush.msra.mxu0 %v557
    %1960 = vmatpush.msra.mxu0 %v553
    %1961 = vmatpush.msra.mxu0 %v549
    %1962 = vmatpush.msra.mxu0 %v545
    %1963 = vmatpush.msra.mxu0 %v541
    %1964 = vmatpush.msra.mxu0 %v537
    %1965 = vmatpush.msra.mxu0 %v533
    %1966 = vmatpush.msra.mxu0 %v529
    %1967 = vmatpush.msra.mxu0 %v525
    %1968 = vmatpush.msra.mxu0 %v521
    %1969 = vmatpush.msra.mxu0 %v517
    %1970 = vmatpush.msra.mxu0 %v513
    %1971 = vmatpush.msra.mxu0 %v509
    %1972 = vmatmul.f32.gmra.mxu0 %v1734
    %v1973 = vpop.f32.mrf.mxu0
    %v1974 = vadd.f32 %v1954, %v1973
    %1975 = vdwg.mxu0
    %1976 = vmatpush.msra.mxu0 %v506
    %1977 = vmatpush.msra.mxu0 %v502
    %1978 = vmatpush.msra.mxu0 %v498
    %1979 = vmatpush.msra.mxu0 %v494
    %1980 = vmatpush.msra.mxu0 %v490
    %1981 = vmatpush.msra.mxu0 %v486
    %1982 = vmatpush.msra.mxu0 %v482
    %1983 = vmatpush.msra.mxu0 %v478
    %1984 = vmatpush.msra.mxu0 %v474
    %1985 = vmatpush.msra.mxu0 %v470
    %1986 = vmatpush.msra.mxu0 %v466
    %1987 = vmatpush.msra.mxu0 %v462
    %1988 = vmatpush.msra.mxu0 %v458
    %1989 = vmatpush.msra.mxu0 %v454
    %1990 = vmatpush.msra.mxu0 %v450
    %1991 = vmatpush.msra.mxu0 %v446
    %1992 = vmatmul.f32.gmra.mxu0 %v1893
    %v1993 = vpop.f32.mrf.mxu0
    %v1994 = vadd.f32 %v736, %v1993
    %1995 = vdwg.mxu0
    %1996 = vmatpush.msra.mxu0 %v570
    %1997 = vmatpush.msra.mxu0 %v566
    %1998 = vmatpush.msra.mxu0 %v562
    %1999 = vmatpush.msra.mxu0 %v558
    %2000 = vmatpush.msra.mxu0 %v554
    %2001 = vmatpush.msra.mxu0 %v550
    %2002 = vmatpush.msra.mxu0 %v546
    %2003 = vmatpush.msra.mxu0 %v542
    %2004 = vmatpush.msra.mxu0 %v538
    %2005 = vmatpush.msra.mxu0 %v534
    %2006 = vmatpush.msra.mxu0 %v530
    %2007 = vmatpush.msra.mxu0 %v526
    %2008 = vmatpush.msra.mxu0 %v522
    %2009 = vmatpush.msra.mxu0 %v518
    %2010 = vmatpush.msra.mxu0 %v514
    %2011 = vmatpush.msra.mxu0 %v510
    %2012 = vmatmul.f32.gmra.mxu0 %v1734
    %v2013 = vpop.f32.mrf.mxu0
    %v2014 = vadd.f32 %v1994, %v2013
    %2015 = vdwg.mxu0
    %2016 = vmatpush.msra.mxu0 %v507
    %2017 = vmatpush.msra.mxu0 %v503
    %2018 = vmatpush.msra.mxu0 %v499
    %2019 = vmatpush.msra.mxu0 %v495
    %2020 = vmatpush.msra.mxu0 %v491
    %2021 = vmatpush.msra.mxu0 %v487
    %2022 = vmatpush.msra.mxu0 %v483
    %2023 = vmatpush.msra.mxu0 %v479
    %2024 = vmatpush.msra.mxu0 %v475
    %2025 = vmatpush.msra.mxu0 %v471
    %2026 = vmatpush.msra.mxu0 %v467
    %2027 = vmatpush.msra.mxu0 %v463
    %2028 = vmatpush.msra.mxu0 %v459
    %2029 = vmatpush.msra.mxu0 %v455
    %2030 = vmatpush.msra.mxu0 %v451
    %2031 = vmatpush.msra.mxu0 %v447
    %2032 = vmatmul.f32.gmra.mxu0 %v1893
    %v2033 = vpop.f32.mrf.mxu0
    %v2034 = vadd.f32 %v737, %v2033
    %2035 = vdwg.mxu0
    %2036 = vmatpush.msra.mxu0 %v571
    %2037 = vmatpush.msra.mxu0 %v567
    %2038 = vmatpush.msra.mxu0 %v563
    %2039 = vmatpush.msra.mxu0 %v559
    %2040 = vmatpush.msra.mxu0 %v555
    %2041 = vmatpush.msra.mxu0 %v551
    %2042 = vmatpush.msra.mxu0 %v547
    %2043 = vmatpush.msra.mxu0 %v543
    %2044 = vmatpush.msra.mxu0 %v539
    %2045 = vmatpush.msra.mxu0 %v535
    %2046 = vmatpush.msra.mxu0 %v531
    %2047 = vmatpush.msra.mxu0 %v527
    %2048 = vmatpush.msra.mxu0 %v523
    %2049 = vmatpush.msra.mxu0 %v519
    %2050 = vmatpush.msra.mxu0 %v515
    %2051 = vmatpush.msra.mxu0 %v511
    %2052 = vmatmul.f32.gmra.mxu0 %v1734
    %v2053 = vpop.f32.mrf.mxu0
    %v2054 = vadd.f32 %v2034, %v2053
    %2055 = vdwg.mxu0
    %v2056 = vxor.u32 %v1934, 2147483648
    %v2057 = vmul.f32 %v2056, 1.442695
    %v2058 = vpow.pop %v2057
    %v2059 = vadd.f32 %v2058, 1.0
    %v2060 = vrcp.pop %v2059
    %v2061 = vmul.f32 %v2059, %v2060
    %v2062 = vsub.f32 1.0, %v2061
    %v2063 = vmul.f32 %v2060, %v2062
    %v2064 = vadd.f32 %v2060, %v2063
    %vm2065 = vweird.f32 %v2059
    %vm2066 = vweird.f32 %v2060
    %vm2067 = vmor %vm2065, %vm2066
    %v2068 = vsel %vm2067, %v2060, %v2064
    %v2069 = vand.u32 2147483647, %v2059
    %vm2070 = vcmp.eq.f32.partialorder %v2069, 8.507059e+37
    %v2071 = vand.u32 %v2059, 2147483648
    %v2072 = vor.u32 1.1754944e-38, %v2071
    %v2073 = vsel %vm2070, %v2072, %v2068
    %v2074 = vmul.f32 1.0, %v2073
    %v2075 = vxor.u32 %v1974, 2147483648
    %v2076 = vmul.f32 %v2075, 1.442695
    %v2077 = vpow.pop %v2076
    %v2078 = vadd.f32 %v2077, 1.0
    %v2079 = vrcp.pop %v2078
    %v2080 = vmul.f32 %v2078, %v2079
    %v2081 = vsub.f32 1.0, %v2080
    %v2082 = vmul.f32 %v2079, %v2081
    %v2083 = vadd.f32 %v2079, %v2082
    %vm2084 = vweird.f32 %v2078
    %vm2085 = vweird.f32 %v2079
    %vm2086 = vmor %vm2084, %vm2085
    %v2087 = vsel %vm2086, %v2079, %v2083
    %v2088 = vand.u32 2147483647, %v2078
    %vm2089 = vcmp.eq.f32.partialorder %v2088, 8.507059e+37
    %v2090 = vand.u32 %v2078, 2147483648
    %v2091 = vor.u32 1.1754944e-38, %v2090
    %v2092 = vsel %vm2089, %v2091, %v2087
    %v2093 = vmul.f32 1.0, %v2092
    %v2094 = vtanh.pop %v2014
    %v2095 = vxor.u32 %v2054, 2147483648
    %v2096 = vmul.f32 %v2095, 1.442695
    %v2097 = vpow.pop %v2096
    %v2098 = vadd.f32 %v2097, 1.0
    %v2099 = vrcp.pop %v2098
    %v2100 = vmul.f32 %v2098, %v2099
    %v2101 = vsub.f32 1.0, %v2100
    %v2102 = vmul.f32 %v2099, %v2101
    %v2103 = vadd.f32 %v2099, %v2102
    %vm2104 = vweird.f32 %v2098
    %vm2105 = vweird.f32 %v2099
    %vm2106 = vmor %vm2104, %vm2105
    %v2107 = vsel %vm2106, %v2099, %v2103
    %v2108 = vand.u32 2147483647, %v2098
    %vm2109 = vcmp.eq.f32.partialorder %v2108, 8.507059e+37
    %v2110 = vand.u32 %v2098, 2147483648
    %v2111 = vor.u32 1.1754944e-38, %v2110
    %v2112 = vsel %vm2109, %v2111, %v2107
    %v2113 = vmul.f32 1.0, %v2112
    %v2114 = vmul.f32 %v2093, %v1735
    %v2115 = vmul.f32 %v2074, %v2094
    %v2116 = vadd.f32 %v2114, %v2115
    %v2117 = vtanh.pop %v2116
    %v2118 = vmul.f32 %v2113, %v2117
    %v2119 = vsel %vm1742, %v2118, %v1734
    %v2120 = vsel %vm1742, %v2116, %v1735
    %vm2121 = vcmp.gt.s32.totalorder %v573, 4
    %v2122 = vsel %vm2121, 1, 0
    %2123 = vset.pattern.permute.xlu0 0
    %2124 = vperm.xlu0 %2123, %v2122
    %v2125 = vpop.permute.xlu0 %2124
    %vm2126 = vcmp.eq.s32.totalorder %v2125, 1
    %v2127 = vld [vmem:[#allocation2 + $0x80] sm:$0xff]
    %v2128 = vld [vmem:[#allocation2 + $0x88] sm:$0xff]
    %v2129 = vld [vmem:[#allocation2 + $0x90] sm:$0xff]
    %v2130 = vld [vmem:[#allocation2 + $0x98] sm:$0xff]
    %2131 = vmatpush.msra.mxu0 %v440
    %2132 = vmatpush.msra.mxu0 %v436
    %2133 = vmatpush.msra.mxu0 %v432
    %2134 = vmatpush.msra.mxu0 %v428
    %2135 = vmatpush.msra.mxu0 %v424
    %2136 = vmatpush.msra.mxu0 %v420
    %2137 = vmatpush.msra.mxu0 %v416
    %2138 = vmatpush.msra.mxu0 %v412
    %2139 = vmatpush.msra.mxu0 %v408
    %2140 = vmatpush.msra.mxu0 %v404
    %2141 = vmatpush.msra.mxu0 %v400
    %2142 = vmatpush.msra.mxu0 %v396
    %2143 = vmatpush.msra.mxu0 %v392
    %2144 = vmatpush.msra.mxu0 %v388
    %2145 = vmatpush.msra.mxu0 %v384
    %2146 = vmatpush.msra.mxu0 %v380
    %2147 = vmatmul.f32.gmra.mxu0 %v1894
    %v2148 = vpop.f32.mrf.mxu0
    %v2149 = vadd.f32 0.0, %v2148
    %2150 = vdwg.mxu0
    %2151 = vmatpush.msra.mxu0 %v441
    %2152 = vmatpush.msra.mxu0 %v437
    %2153 = vmatpush.msra.mxu0 %v433
    %2154 = vmatpush.msra.mxu0 %v429
    %2155 = vmatpush.msra.mxu0 %v425
    %2156 = vmatpush.msra.mxu0 %v421
    %2157 = vmatpush.msra.mxu0 %v417
    %2158 = vmatpush.msra.mxu0 %v413
    %2159 = vmatpush.msra.mxu0 %v409
    %2160 = vmatpush.msra.mxu0 %v405
    %2161 = vmatpush.msra.mxu0 %v401
    %2162 = vmatpush.msra.mxu0 %v397
    %2163 = vmatpush.msra.mxu0 %v393
    %2164 = vmatpush.msra.mxu0 %v389
    %2165 = vmatpush.msra.mxu0 %v385
    %2166 = vmatpush.msra.mxu0 %v381
    %2167 = vmatmul.f32.gmra.mxu0 %v1894
    %v2168 = vpop.f32.mrf.mxu0
    %v2169 = vadd.f32 0.0, %v2168
    %2170 = vdwg.mxu0
    %2171 = vmatpush.msra.mxu0 %v442
    %2172 = vmatpush.msra.mxu0 %v438
    %2173 = vmatpush.msra.mxu0 %v434
    %2174 = vmatpush.msra.mxu0 %v430
    %2175 = vmatpush.msra.mxu0 %v426
    %2176 = vmatpush.msra.mxu0 %v422
    %2177 = vmatpush.msra.mxu0 %v418
    %2178 = vmatpush.msra.mxu0 %v414
    %2179 = vmatpush.msra.mxu0 %v410
    %2180 = vmatpush.msra.mxu0 %v406
    %2181 = vmatpush.msra.mxu0 %v402
    %2182 = vmatpush.msra.mxu0 %v398
    %2183 = vmatpush.msra.mxu0 %v394
    %2184 = vmatpush.msra.mxu0 %v390
    %2185 = vmatpush.msra.mxu0 %v386
    %2186 = vmatpush.msra.mxu0 %v382
    %2187 = vmatmul.f32.gmra.mxu0 %v1894
    %v2188 = vpop.f32.mrf.mxu0
    %v2189 = vadd.f32 0.0, %v2188
    %2190 = vdwg.mxu0
    %2191 = vmatpush.msra.mxu0 %v443
    %2192 = vmatpush.msra.mxu0 %v439
    %2193 = vmatpush.msra.mxu0 %v435
    %2194 = vmatpush.msra.mxu0 %v431
    %2195 = vmatpush.msra.mxu0 %v427
    %2196 = vmatpush.msra.mxu0 %v423
    %2197 = vmatpush.msra.mxu0 %v419
    %2198 = vmatpush.msra.mxu0 %v415
    %2199 = vmatpush.msra.mxu0 %v411
    %2200 = vmatpush.msra.mxu0 %v407
    %2201 = vmatpush.msra.mxu0 %v403
    %2202 = vmatpush.msra.mxu0 %v399
    %2203 = vmatpush.msra.mxu0 %v395
    %2204 = vmatpush.msra.mxu0 %v391
    %2205 = vmatpush.msra.mxu0 %v387
    %2206 = vmatpush.msra.mxu0 %v383
    %2207 = vmatmul.f32.gmra.mxu0 %v1894
    %v2208 = vpop.f32.mrf.mxu0
    %v2209 = vadd.f32 0.0, %v2208
    %2210 = vdwg.mxu0
    %v2211 = vadd.f32 %v2127, %v2149
    %v2212 = vadd.f32 %v2128, %v2169
    %v2213 = vadd.f32 %v2129, %v2189
    %v2214 = vadd.f32 %v2130, %v2209
    %v2215 = vxor.u32 %v2211, 2147483648
    %v2216 = vmul.f32 %v2215, 1.442695
    %v2217 = vpow.pop %v2216
    %v2218 = vadd.f32 %v2217, 1.0
    %v2219 = vrcp.pop %v2218
    %v2220 = vmul.f32 %v2218, %v2219
    %v2221 = vsub.f32 1.0, %v2220
    %v2222 = vmul.f32 %v2219, %v2221
    %v2223 = vadd.f32 %v2219, %v2222
    %vm2224 = vweird.f32 %v2218
    %vm2225 = vweird.f32 %v2219
    %vm2226 = vmor %vm2224, %vm2225
    %v2227 = vsel %vm2226, %v2219, %v2223
    %v2228 = vand.u32 2147483647, %v2218
    %vm2229 = vcmp.eq.f32.partialorder %v2228, 8.507059e+37
    %v2230 = vand.u32 %v2218, 2147483648
    %v2231 = vor.u32 1.1754944e-38, %v2230
    %v2232 = vsel %vm2229, %v2231, %v2227
    %v2233 = vmul.f32 1.0, %v2232
    %v2234 = vxor.u32 %v2212, 2147483648
    %v2235 = vmul.f32 %v2234, 1.442695
    %v2236 = vpow.pop %v2235
    %v2237 = vadd.f32 %v2236, 1.0
    %v2238 = vrcp.pop %v2237
    %v2239 = vmul.f32 %v2237, %v2238
    %v2240 = vsub.f32 1.0, %v2239
    %v2241 = vmul.f32 %v2238, %v2240
    %v2242 = vadd.f32 %v2238, %v2241
    %vm2243 = vweird.f32 %v2237
    %vm2244 = vweird.f32 %v2238
    %vm2245 = vmor %vm2243, %vm2244
    %v2246 = vsel %vm2245, %v2238, %v2242
    %v2247 = vand.u32 2147483647, %v2237
    %vm2248 = vcmp.eq.f32.partialorder %v2247, 8.507059e+37
    %v2249 = vand.u32 %v2237, 2147483648
    %v2250 = vor.u32 1.1754944e-38, %v2249
    %v2251 = vsel %vm2248, %v2250, %v2246
    %v2252 = vmul.f32 1.0, %v2251
    %v2253 = vtanh.pop %v2213
    %v2254 = vxor.u32 %v2214, 2147483648
    %v2255 = vmul.f32 %v2254, 1.442695
    %v2256 = vpow.pop %v2255
    %v2257 = vadd.f32 %v2256, 1.0
    %v2258 = vrcp.pop %v2257
    %v2259 = vmul.f32 %v2257, %v2258
    %v2260 = vsub.f32 1.0, %v2259
    %v2261 = vmul.f32 %v2258, %v2260
    %v2262 = vadd.f32 %v2258, %v2261
    %vm2263 = vweird.f32 %v2257
    %vm2264 = vweird.f32 %v2258
    %vm2265 = vmor %vm2263, %vm2264
    %v2266 = vsel %vm2265, %v2258, %v2262
    %v2267 = vand.u32 2147483647, %v2257
    %vm2268 = vcmp.eq.f32.partialorder %v2267, 8.507059e+37
    %v2269 = vand.u32 %v2257, 2147483648
    %v2270 = vor.u32 1.1754944e-38, %v2269
    %v2271 = vsel %vm2268, %v2270, %v2266
    %v2272 = vmul.f32 1.0, %v2271
    %v2273 = vmul.f32 %v2252, %v1895
    %v2274 = vmul.f32 %v2233, %v2253
    %v2275 = vadd.f32 %v2273, %v2274
    %v2276 = vtanh.pop %v2275
    %v2277 = vmul.f32 %v2272, %v2276
    %v2278 = vsel %vm2126, %v2277, %v1894
    %v2279 = vsel %vm2126, %v2275, %v1895
    %2280 = vmatpush.msra.mxu0 %v504
    %2281 = vmatpush.msra.mxu0 %v500
    %2282 = vmatpush.msra.mxu0 %v496
    %2283 = vmatpush.msra.mxu0 %v492
    %2284 = vmatpush.msra.mxu0 %v488
    %2285 = vmatpush.msra.mxu0 %v484
    %2286 = vmatpush.msra.mxu0 %v480
    %2287 = vmatpush.msra.mxu0 %v476
    %2288 = vmatpush.msra.mxu0 %v472
    %2289 = vmatpush.msra.mxu0 %v468
    %2290 = vmatpush.msra.mxu0 %v464
    %2291 = vmatpush.msra.mxu0 %v460
    %2292 = vmatpush.msra.mxu0 %v456
    %2293 = vmatpush.msra.mxu0 %v452
    %2294 = vmatpush.msra.mxu0 %v448
    %2295 = vmatpush.msra.mxu0 %v444
    %2296 = vmatmul.f32.gmra.mxu0 %v2277
    %v2297 = vpop.f32.mrf.mxu0
    %v2298 = vadd.f32 %v734, %v2297
    %2299 = vdwg.mxu0
    %2300 = vmatpush.msra.mxu0 %v568
    %2301 = vmatpush.msra.mxu0 %v564
    %2302 = vmatpush.msra.mxu0 %v560
    %2303 = vmatpush.msra.mxu0 %v556
    %2304 = vmatpush.msra.mxu0 %v552
    %2305 = vmatpush.msra.mxu0 %v548
    %2306 = vmatpush.msra.mxu0 %v544
    %2307 = vmatpush.msra.mxu0 %v540
    %2308 = vmatpush.msra.mxu0 %v536
    %2309 = vmatpush.msra.mxu0 %v532
    %2310 = vmatpush.msra.mxu0 %v528
    %2311 = vmatpush.msra.mxu0 %v524
    %2312 = vmatpush.msra.mxu0 %v520
    %2313 = vmatpush.msra.mxu0 %v516
    %2314 = vmatpush.msra.mxu0 %v512
    %2315 = vmatpush.msra.mxu0 %v508
    %2316 = vmatmul.f32.gmra.mxu0 %v2119
    %v2317 = vpop.f32.mrf.mxu0
    %v2318 = vadd.f32 %v2298, %v2317
    %2319 = vdwg.mxu0
    %2320 = vmatpush.msra.mxu0 %v505
    %2321 = vmatpush.msra.mxu0 %v501
    %2322 = vmatpush.msra.mxu0 %v497
    %2323 = vmatpush.msra.mxu0 %v493
    %2324 = vmatpush.msra.mxu0 %v489
    %2325 = vmatpush.msra.mxu0 %v485
    %2326 = vmatpush.msra.mxu0 %v481
    %2327 = vmatpush.msra.mxu0 %v477
    %2328 = vmatpush.msra.mxu0 %v473
    %2329 = vmatpush.msra.mxu0 %v469
    %2330 = vmatpush.msra.mxu0 %v465
    %2331 = vmatpush.msra.mxu0 %v461
    %2332 = vmatpush.msra.mxu0 %v457
    %2333 = vmatpush.msra.mxu0 %v453
    %2334 = vmatpush.msra.mxu0 %v449
    %2335 = vmatpush.msra.mxu0 %v445
    %2336 = vmatmul.f32.gmra.mxu0 %v2277
    %v2337 = vpop.f32.mrf.mxu0
    %v2338 = vadd.f32 %v735, %v2337
    %2339 = vdwg.mxu0
    %2340 = vmatpush.msra.mxu0 %v569
    %2341 = vmatpush.msra.mxu0 %v565
    %2342 = vmatpush.msra.mxu0 %v561
    %2343 = vmatpush.msra.mxu0 %v557
    %2344 = vmatpush.msra.mxu0 %v553
    %2345 = vmatpush.msra.mxu0 %v549
    %2346 = vmatpush.msra.mxu0 %v545
    %2347 = vmatpush.msra.mxu0 %v541
    %2348 = vmatpush.msra.mxu0 %v537
    %2349 = vmatpush.msra.mxu0 %v533
    %2350 = vmatpush.msra.mxu0 %v529
    %2351 = vmatpush.msra.mxu0 %v525
    %2352 = vmatpush.msra.mxu0 %v521
    %2353 = vmatpush.msra.mxu0 %v517
    %2354 = vmatpush.msra.mxu0 %v513
    %2355 = vmatpush.msra.mxu0 %v509
    %2356 = vmatmul.f32.gmra.mxu0 %v2119
    %v2357 = vpop.f32.mrf.mxu0
    %v2358 = vadd.f32 %v2338, %v2357
    %2359 = vdwg.mxu0
    %2360 = vmatpush.msra.mxu0 %v506
    %2361 = vmatpush.msra.mxu0 %v502
    %2362 = vmatpush.msra.mxu0 %v498
    %2363 = vmatpush.msra.mxu0 %v494
    %2364 = vmatpush.msra.mxu0 %v490
    %2365 = vmatpush.msra.mxu0 %v486
    %2366 = vmatpush.msra.mxu0 %v482
    %2367 = vmatpush.msra.mxu0 %v478
    %2368 = vmatpush.msra.mxu0 %v474
    %2369 = vmatpush.msra.mxu0 %v470
    %2370 = vmatpush.msra.mxu0 %v466
    %2371 = vmatpush.msra.mxu0 %v462
    %2372 = vmatpush.msra.mxu0 %v458
    %2373 = vmatpush.msra.mxu0 %v454
    %2374 = vmatpush.msra.mxu0 %v450
    %2375 = vmatpush.msra.mxu0 %v446
    %2376 = vmatmul.f32.gmra.mxu0 %v2277
    %v2377 = vpop.f32.mrf.mxu0
    %v2378 = vadd.f32 %v736, %v2377
    %2379 = vdwg.mxu0
    %2380 = vmatpush.msra.mxu0 %v570
    %2381 = vmatpush.msra.mxu0 %v566
    %2382 = vmatpush.msra.mxu0 %v562
    %2383 = vmatpush.msra.mxu0 %v558
    %2384 = vmatpush.msra.mxu0 %v554
    %2385 = vmatpush.msra.mxu0 %v550
    %2386 = vmatpush.msra.mxu0 %v546
    %2387 = vmatpush.msra.mxu0 %v542
    %2388 = vmatpush.msra.mxu0 %v538
    %2389 = vmatpush.msra.mxu0 %v534
    %2390 = vmatpush.msra.mxu0 %v530
    %2391 = vmatpush.msra.mxu0 %v526
    %2392 = vmatpush.msra.mxu0 %v522
    %2393 = vmatpush.msra.mxu0 %v518
    %2394 = vmatpush.msra.mxu0 %v514
    %2395 = vmatpush.msra.mxu0 %v510
    %2396 = vmatmul.f32.gmra.mxu0 %v2119
    %v2397 = vpop.f32.mrf.mxu0
    %v2398 = vadd.f32 %v2378, %v2397
    %2399 = vdwg.mxu0
    %2400 = vmatpush.msra.mxu0 %v507
    %2401 = vmatpush.msra.mxu0 %v503
    %2402 = vmatpush.msra.mxu0 %v499
    %2403 = vmatpush.msra.mxu0 %v495
    %2404 = vmatpush.msra.mxu0 %v491
    %2405 = vmatpush.msra.mxu0 %v487
    %2406 = vmatpush.msra.mxu0 %v483
    %2407 = vmatpush.msra.mxu0 %v479
    %2408 = vmatpush.msra.mxu0 %v475
    %2409 = vmatpush.msra.mxu0 %v471
    %2410 = vmatpush.msra.mxu0 %v467
    %2411 = vmatpush.msra.mxu0 %v463
    %2412 = vmatpush.msra.mxu0 %v459
    %2413 = vmatpush.msra.mxu0 %v455
    %2414 = vmatpush.msra.mxu0 %v451
    %2415 = vmatpush.msra.mxu0 %v447
    %2416 = vmatmul.f32.gmra.mxu0 %v2277
    %v2417 = vpop.f32.mrf.mxu0
    %v2418 = vadd.f32 %v737, %v2417
    %2419 = vdwg.mxu0
    %2420 = vmatpush.msra.mxu0 %v571
    %2421 = vmatpush.msra.mxu0 %v567
    %2422 = vmatpush.msra.mxu0 %v563
    %2423 = vmatpush.msra.mxu0 %v559
    %2424 = vmatpush.msra.mxu0 %v555
    %2425 = vmatpush.msra.mxu0 %v551
    %2426 = vmatpush.msra.mxu0 %v547
    %2427 = vmatpush.msra.mxu0 %v543
    %2428 = vmatpush.msra.mxu0 %v539
    %2429 = vmatpush.msra.mxu0 %v535
    %2430 = vmatpush.msra.mxu0 %v531
    %2431 = vmatpush.msra.mxu0 %v527
    %2432 = vmatpush.msra.mxu0 %v523
    %2433 = vmatpush.msra.mxu0 %v519
    %2434 = vmatpush.msra.mxu0 %v515
    %2435 = vmatpush.msra.mxu0 %v511
    %2436 = vmatmul.f32.gmra.mxu0 %v2119
    %v2437 = vpop.f32.mrf.mxu0
    %v2438 = vadd.f32 %v2418, %v2437
    %2439 = vdwg.mxu0
    %v2440 = vxor.u32 %v2318, 2147483648
    %v2441 = vmul.f32 %v2440, 1.442695
    %v2442 = vpow.pop %v2441
    %v2443 = vadd.f32 %v2442, 1.0
    %v2444 = vrcp.pop %v2443
    %v2445 = vmul.f32 %v2443, %v2444
    %v2446 = vsub.f32 1.0, %v2445
    %v2447 = vmul.f32 %v2444, %v2446
    %v2448 = vadd.f32 %v2444, %v2447
    %vm2449 = vweird.f32 %v2443
    %vm2450 = vweird.f32 %v2444
    %vm2451 = vmor %vm2449, %vm2450
    %v2452 = vsel %vm2451, %v2444, %v2448
    %v2453 = vand.u32 2147483647, %v2443
    %vm2454 = vcmp.eq.f32.partialorder %v2453, 8.507059e+37
    %v2455 = vand.u32 %v2443, 2147483648
    %v2456 = vor.u32 1.1754944e-38, %v2455
    %v2457 = vsel %vm2454, %v2456, %v2452
    %v2458 = vmul.f32 1.0, %v2457
    %v2459 = vxor.u32 %v2358, 2147483648
    %v2460 = vmul.f32 %v2459, 1.442695
    %v2461 = vpow.pop %v2460
    %v2462 = vadd.f32 %v2461, 1.0
    %v2463 = vrcp.pop %v2462
    %v2464 = vmul.f32 %v2462, %v2463
    %v2465 = vsub.f32 1.0, %v2464
    %v2466 = vmul.f32 %v2463, %v2465
    %v2467 = vadd.f32 %v2463, %v2466
    %vm2468 = vweird.f32 %v2462
    %vm2469 = vweird.f32 %v2463
    %vm2470 = vmor %vm2468, %vm2469
    %v2471 = vsel %vm2470, %v2463, %v2467
    %v2472 = vand.u32 2147483647, %v2462
    %vm2473 = vcmp.eq.f32.partialorder %v2472, 8.507059e+37
    %v2474 = vand.u32 %v2462, 2147483648
    %v2475 = vor.u32 1.1754944e-38, %v2474
    %v2476 = vsel %vm2473, %v2475, %v2471
    %v2477 = vmul.f32 1.0, %v2476
    %v2478 = vtanh.pop %v2398
    %v2479 = vxor.u32 %v2438, 2147483648
    %v2480 = vmul.f32 %v2479, 1.442695
    %v2481 = vpow.pop %v2480
    %v2482 = vadd.f32 %v2481, 1.0
    %v2483 = vrcp.pop %v2482
    %v2484 = vmul.f32 %v2482, %v2483
    %v2485 = vsub.f32 1.0, %v2484
    %v2486 = vmul.f32 %v2483, %v2485
    %v2487 = vadd.f32 %v2483, %v2486
    %vm2488 = vweird.f32 %v2482
    %vm2489 = vweird.f32 %v2483
    %vm2490 = vmor %vm2488, %vm2489
    %v2491 = vsel %vm2490, %v2483, %v2487
    %v2492 = vand.u32 2147483647, %v2482
    %vm2493 = vcmp.eq.f32.partialorder %v2492, 8.507059e+37
    %v2494 = vand.u32 %v2482, 2147483648
    %v2495 = vor.u32 1.1754944e-38, %v2494
    %v2496 = vsel %vm2493, %v2495, %v2491
    %v2497 = vmul.f32 1.0, %v2496
    %v2498 = vmul.f32 %v2477, %v2120
    %v2499 = vmul.f32 %v2458, %v2478
    %v2500 = vadd.f32 %v2498, %v2499
    %v2501 = vtanh.pop %v2500
    %v2502 = vmul.f32 %v2497, %v2501
    %v2503 = vsel %vm2126, %v2502, %v2119
    %v2504 = vsel %vm2126, %v2500, %v2120
    %vm2505 = vcmp.gt.s32.totalorder %v573, 5
    %v2506 = vsel %vm2505, 1, 0
    %2507 = vset.pattern.permute.xlu0 0
    %2508 = vperm.xlu0 %2507, %v2506
    %v2509 = vpop.permute.xlu0 %2508
    %vm2510 = vcmp.eq.s32.totalorder %v2509, 1
    %v2511 = vld [vmem:[#allocation2 + $0xa0] sm:$0xff]
    %v2512 = vld [vmem:[#allocation2 + $0xa8] sm:$0xff]
    %v2513 = vld [vmem:[#allocation2 + $0xb0] sm:$0xff]
    %v2514 = vld [vmem:[#allocation2 + $0xb8] sm:$0xff]
    %2515 = vmatpush.msra.mxu0 %v440
    %2516 = vmatpush.msra.mxu0 %v436
    %2517 = vmatpush.msra.mxu0 %v432
    %2518 = vmatpush.msra.mxu0 %v428
    %2519 = vmatpush.msra.mxu0 %v424
    %2520 = vmatpush.msra.mxu0 %v420
    %2521 = vmatpush.msra.mxu0 %v416
    %2522 = vmatpush.msra.mxu0 %v412
    %2523 = vmatpush.msra.mxu0 %v408
    %2524 = vmatpush.msra.mxu0 %v404
    %2525 = vmatpush.msra.mxu0 %v400
    %2526 = vmatpush.msra.mxu0 %v396
    %2527 = vmatpush.msra.mxu0 %v392
    %2528 = vmatpush.msra.mxu0 %v388
    %2529 = vmatpush.msra.mxu0 %v384
    %2530 = vmatpush.msra.mxu0 %v380
    %2531 = vmatmul.f32.gmra.mxu0 %v2278
    %v2532 = vpop.f32.mrf.mxu0
    %v2533 = vadd.f32 0.0, %v2532
    %2534 = vdwg.mxu0
    %2535 = vmatpush.msra.mxu0 %v441
    %2536 = vmatpush.msra.mxu0 %v437
    %2537 = vmatpush.msra.mxu0 %v433
    %2538 = vmatpush.msra.mxu0 %v429
    %2539 = vmatpush.msra.mxu0 %v425
    %2540 = vmatpush.msra.mxu0 %v421
    %2541 = vmatpush.msra.mxu0 %v417
    %2542 = vmatpush.msra.mxu0 %v413
    %2543 = vmatpush.msra.mxu0 %v409
    %2544 = vmatpush.msra.mxu0 %v405
    %2545 = vmatpush.msra.mxu0 %v401
    %2546 = vmatpush.msra.mxu0 %v397
    %2547 = vmatpush.msra.mxu0 %v393
    %2548 = vmatpush.msra.mxu0 %v389
    %2549 = vmatpush.msra.mxu0 %v385
    %2550 = vmatpush.msra.mxu0 %v381
    %2551 = vmatmul.f32.gmra.mxu0 %v2278
    %v2552 = vpop.f32.mrf.mxu0
    %v2553 = vadd.f32 0.0, %v2552
    %2554 = vdwg.mxu0
    %2555 = vmatpush.msra.mxu0 %v442
    %2556 = vmatpush.msra.mxu0 %v438
    %2557 = vmatpush.msra.mxu0 %v434
    %2558 = vmatpush.msra.mxu0 %v430
    %2559 = vmatpush.msra.mxu0 %v426
    %2560 = vmatpush.msra.mxu0 %v422
    %2561 = vmatpush.msra.mxu0 %v418
    %2562 = vmatpush.msra.mxu0 %v414
    %2563 = vmatpush.msra.mxu0 %v410
    %2564 = vmatpush.msra.mxu0 %v406
    %2565 = vmatpush.msra.mxu0 %v402
    %2566 = vmatpush.msra.mxu0 %v398
    %2567 = vmatpush.msra.mxu0 %v394
    %2568 = vmatpush.msra.mxu0 %v390
    %2569 = vmatpush.msra.mxu0 %v386
    %2570 = vmatpush.msra.mxu0 %v382
    %2571 = vmatmul.f32.gmra.mxu0 %v2278
    %v2572 = vpop.f32.mrf.mxu0
    %v2573 = vadd.f32 0.0, %v2572
    %2574 = vdwg.mxu0
    %2575 = vmatpush.msra.mxu0 %v443
    %2576 = vmatpush.msra.mxu0 %v439
    %2577 = vmatpush.msra.mxu0 %v435
    %2578 = vmatpush.msra.mxu0 %v431
    %2579 = vmatpush.msra.mxu0 %v427
    %2580 = vmatpush.msra.mxu0 %v423
    %2581 = vmatpush.msra.mxu0 %v419
    %2582 = vmatpush.msra.mxu0 %v415
    %2583 = vmatpush.msra.mxu0 %v411
    %2584 = vmatpush.msra.mxu0 %v407
    %2585 = vmatpush.msra.mxu0 %v403
    %2586 = vmatpush.msra.mxu0 %v399
    %2587 = vmatpush.msra.mxu0 %v395
    %2588 = vmatpush.msra.mxu0 %v391
    %2589 = vmatpush.msra.mxu0 %v387
    %2590 = vmatpush.msra.mxu0 %v383
    %2591 = vmatmul.f32.gmra.mxu0 %v2278
    %v2592 = vpop.f32.mrf.mxu0
    %v2593 = vadd.f32 0.0, %v2592
    %2594 = vdwg.mxu0
    %v2595 = vadd.f32 %v2511, %v2533
    %v2596 = vadd.f32 %v2512, %v2553
    %v2597 = vadd.f32 %v2513, %v2573
    %v2598 = vadd.f32 %v2514, %v2593
    %v2599 = vxor.u32 %v2595, 2147483648
    %v2600 = vmul.f32 %v2599, 1.442695
    %v2601 = vpow.pop %v2600
    %v2602 = vadd.f32 %v2601, 1.0
    %v2603 = vrcp.pop %v2602
    %v2604 = vmul.f32 %v2602, %v2603
    %v2605 = vsub.f32 1.0, %v2604
    %v2606 = vmul.f32 %v2603, %v2605
    %v2607 = vadd.f32 %v2603, %v2606
    %vm2608 = vweird.f32 %v2602
    %vm2609 = vweird.f32 %v2603
    %vm2610 = vmor %vm2608, %vm2609
    %v2611 = vsel %vm2610, %v2603, %v2607
    %v2612 = vand.u32 2147483647, %v2602
    %vm2613 = vcmp.eq.f32.partialorder %v2612, 8.507059e+37
    %v2614 = vand.u32 %v2602, 2147483648
    %v2615 = vor.u32 1.1754944e-38, %v2614
    %v2616 = vsel %vm2613, %v2615, %v2611
    %v2617 = vmul.f32 1.0, %v2616
    %v2618 = vxor.u32 %v2596, 2147483648
    %v2619 = vmul.f32 %v2618, 1.442695
    %v2620 = vpow.pop %v2619
    %v2621 = vadd.f32 %v2620, 1.0
    %v2622 = vrcp.pop %v2621
    %v2623 = vmul.f32 %v2621, %v2622
    %v2624 = vsub.f32 1.0, %v2623
    %v2625 = vmul.f32 %v2622, %v2624
    %v2626 = vadd.f32 %v2622, %v2625
    %vm2627 = vweird.f32 %v2621
    %vm2628 = vweird.f32 %v2622
    %vm2629 = vmor %vm2627, %vm2628
    %v2630 = vsel %vm2629, %v2622, %v2626
    %v2631 = vand.u32 2147483647, %v2621
    %vm2632 = vcmp.eq.f32.partialorder %v2631, 8.507059e+37
    %v2633 = vand.u32 %v2621, 2147483648
    %v2634 = vor.u32 1.1754944e-38, %v2633
    %v2635 = vsel %vm2632, %v2634, %v2630
    %v2636 = vmul.f32 1.0, %v2635
    %v2637 = vtanh.pop %v2597
    %v2638 = vxor.u32 %v2598, 2147483648
    %v2639 = vmul.f32 %v2638, 1.442695
    %v2640 = vpow.pop %v2639
    %v2641 = vadd.f32 %v2640, 1.0
    %v2642 = vrcp.pop %v2641
    %v2643 = vmul.f32 %v2641, %v2642
    %v2644 = vsub.f32 1.0, %v2643
    %v2645 = vmul.f32 %v2642, %v2644
    %v2646 = vadd.f32 %v2642, %v2645
    %vm2647 = vweird.f32 %v2641
    %vm2648 = vweird.f32 %v2642
    %vm2649 = vmor %vm2647, %vm2648
    %v2650 = vsel %vm2649, %v2642, %v2646
    %v2651 = vand.u32 2147483647, %v2641
    %vm2652 = vcmp.eq.f32.partialorder %v2651, 8.507059e+37
    %v2653 = vand.u32 %v2641, 2147483648
    %v2654 = vor.u32 1.1754944e-38, %v2653
    %v2655 = vsel %vm2652, %v2654, %v2650
    %v2656 = vmul.f32 1.0, %v2655
    %v2657 = vmul.f32 %v2636, %v2279
    %v2658 = vmul.f32 %v2617, %v2637
    %v2659 = vadd.f32 %v2657, %v2658
    %v2660 = vtanh.pop %v2659
    %v2661 = vmul.f32 %v2656, %v2660
    %v2662 = vsel %vm2510, %v2661, %v2278
    %v2663 = vsel %vm2510, %v2659, %v2279
    %2664 = vmatpush.msra.mxu0 %v504
    %2665 = vmatpush.msra.mxu0 %v500
    %2666 = vmatpush.msra.mxu0 %v496
    %2667 = vmatpush.msra.mxu0 %v492
    %2668 = vmatpush.msra.mxu0 %v488
    %2669 = vmatpush.msra.mxu0 %v484
    %2670 = vmatpush.msra.mxu0 %v480
    %2671 = vmatpush.msra.mxu0 %v476
    %2672 = vmatpush.msra.mxu0 %v472
    %2673 = vmatpush.msra.mxu0 %v468
    %2674 = vmatpush.msra.mxu0 %v464
    %2675 = vmatpush.msra.mxu0 %v460
    %2676 = vmatpush.msra.mxu0 %v456
    %2677 = vmatpush.msra.mxu0 %v452
    %2678 = vmatpush.msra.mxu0 %v448
    %2679 = vmatpush.msra.mxu0 %v444
    %2680 = vmatmul.f32.gmra.mxu0 %v2661
    %v2681 = vpop.f32.mrf.mxu0
    %v2682 = vadd.f32 %v734, %v2681
    %2683 = vdwg.mxu0
    %2684 = vmatpush.msra.mxu0 %v568
    %2685 = vmatpush.msra.mxu0 %v564
    %2686 = vmatpush.msra.mxu0 %v560
    %2687 = vmatpush.msra.mxu0 %v556
    %2688 = vmatpush.msra.mxu0 %v552
    %2689 = vmatpush.msra.mxu0 %v548
    %2690 = vmatpush.msra.mxu0 %v544
    %2691 = vmatpush.msra.mxu0 %v540
    %2692 = vmatpush.msra.mxu0 %v536
    %2693 = vmatpush.msra.mxu0 %v532
    %2694 = vmatpush.msra.mxu0 %v528
    %2695 = vmatpush.msra.mxu0 %v524
    %2696 = vmatpush.msra.mxu0 %v520
    %2697 = vmatpush.msra.mxu0 %v516
    %2698 = vmatpush.msra.mxu0 %v512
    %2699 = vmatpush.msra.mxu0 %v508
    %2700 = vmatmul.f32.gmra.mxu0 %v2503
    %v2701 = vpop.f32.mrf.mxu0
    %v2702 = vadd.f32 %v2682, %v2701
    %2703 = vdwg.mxu0
    %2704 = vmatpush.msra.mxu0 %v505
    %2705 = vmatpush.msra.mxu0 %v501
    %2706 = vmatpush.msra.mxu0 %v497
    %2707 = vmatpush.msra.mxu0 %v493
    %2708 = vmatpush.msra.mxu0 %v489
    %2709 = vmatpush.msra.mxu0 %v485
    %2710 = vmatpush.msra.mxu0 %v481
    %2711 = vmatpush.msra.mxu0 %v477
    %2712 = vmatpush.msra.mxu0 %v473
    %2713 = vmatpush.msra.mxu0 %v469
    %2714 = vmatpush.msra.mxu0 %v465
    %2715 = vmatpush.msra.mxu0 %v461
    %2716 = vmatpush.msra.mxu0 %v457
    %2717 = vmatpush.msra.mxu0 %v453
    %2718 = vmatpush.msra.mxu0 %v449
    %2719 = vmatpush.msra.mxu0 %v445
    %2720 = vmatmul.f32.gmra.mxu0 %v2661
    %v2721 = vpop.f32.mrf.mxu0
    %v2722 = vadd.f32 %v735, %v2721
    %2723 = vdwg.mxu0
    %2724 = vmatpush.msra.mxu0 %v569
    %2725 = vmatpush.msra.mxu0 %v565
    %2726 = vmatpush.msra.mxu0 %v561
    %2727 = vmatpush.msra.mxu0 %v557
    %2728 = vmatpush.msra.mxu0 %v553
    %2729 = vmatpush.msra.mxu0 %v549
    %2730 = vmatpush.msra.mxu0 %v545
    %2731 = vmatpush.msra.mxu0 %v541
    %2732 = vmatpush.msra.mxu0 %v537
    %2733 = vmatpush.msra.mxu0 %v533
    %2734 = vmatpush.msra.mxu0 %v529
    %2735 = vmatpush.msra.mxu0 %v525
    %2736 = vmatpush.msra.mxu0 %v521
    %2737 = vmatpush.msra.mxu0 %v517
    %2738 = vmatpush.msra.mxu0 %v513
    %2739 = vmatpush.msra.mxu0 %v509
    %2740 = vmatmul.f32.gmra.mxu0 %v2503
    %v2741 = vpop.f32.mrf.mxu0
    %v2742 = vadd.f32 %v2722, %v2741
    %2743 = vdwg.mxu0
    %2744 = vmatpush.msra.mxu0 %v506
    %2745 = vmatpush.msra.mxu0 %v502
    %2746 = vmatpush.msra.mxu0 %v498
    %2747 = vmatpush.msra.mxu0 %v494
    %2748 = vmatpush.msra.mxu0 %v490
    %2749 = vmatpush.msra.mxu0 %v486
    %2750 = vmatpush.msra.mxu0 %v482
    %2751 = vmatpush.msra.mxu0 %v478
    %2752 = vmatpush.msra.mxu0 %v474
    %2753 = vmatpush.msra.mxu0 %v470
    %2754 = vmatpush.msra.mxu0 %v466
    %2755 = vmatpush.msra.mxu0 %v462
    %2756 = vmatpush.msra.mxu0 %v458
    %2757 = vmatpush.msra.mxu0 %v454
    %2758 = vmatpush.msra.mxu0 %v450
    %2759 = vmatpush.msra.mxu0 %v446
    %2760 = vmatmul.f32.gmra.mxu0 %v2661
    %v2761 = vpop.f32.mrf.mxu0
    %v2762 = vadd.f32 %v736, %v2761
    %2763 = vdwg.mxu0
    %2764 = vmatpush.msra.mxu0 %v570
    %2765 = vmatpush.msra.mxu0 %v566
    %2766 = vmatpush.msra.mxu0 %v562
    %2767 = vmatpush.msra.mxu0 %v558
    %2768 = vmatpush.msra.mxu0 %v554
    %2769 = vmatpush.msra.mxu0 %v550
    %2770 = vmatpush.msra.mxu0 %v546
    %2771 = vmatpush.msra.mxu0 %v542
    %2772 = vmatpush.msra.mxu0 %v538
    %2773 = vmatpush.msra.mxu0 %v534
    %2774 = vmatpush.msra.mxu0 %v530
    %2775 = vmatpush.msra.mxu0 %v526
    %2776 = vmatpush.msra.mxu0 %v522
    %2777 = vmatpush.msra.mxu0 %v518
    %2778 = vmatpush.msra.mxu0 %v514
    %2779 = vmatpush.msra.mxu0 %v510
    %2780 = vmatmul.f32.gmra.mxu0 %v2503
    %v2781 = vpop.f32.mrf.mxu0
    %v2782 = vadd.f32 %v2762, %v2781
    %2783 = vdwg.mxu0
    %2784 = vmatpush.msra.mxu0 %v507
    %2785 = vmatpush.msra.mxu0 %v503
    %2786 = vmatpush.msra.mxu0 %v499
    %2787 = vmatpush.msra.mxu0 %v495
    %2788 = vmatpush.msra.mxu0 %v491
    %2789 = vmatpush.msra.mxu0 %v487
    %2790 = vmatpush.msra.mxu0 %v483
    %2791 = vmatpush.msra.mxu0 %v479
    %2792 = vmatpush.msra.mxu0 %v475
    %2793 = vmatpush.msra.mxu0 %v471
    %2794 = vmatpush.msra.mxu0 %v467
    %2795 = vmatpush.msra.mxu0 %v463
    %2796 = vmatpush.msra.mxu0 %v459
    %2797 = vmatpush.msra.mxu0 %v455
    %2798 = vmatpush.msra.mxu0 %v451
    %2799 = vmatpush.msra.mxu0 %v447
    %2800 = vmatmul.f32.gmra.mxu0 %v2661
    %v2801 = vpop.f32.mrf.mxu0
    %v2802 = vadd.f32 %v737, %v2801
    %2803 = vdwg.mxu0
    %2804 = vmatpush.msra.mxu0 %v571
    %2805 = vmatpush.msra.mxu0 %v567
    %2806 = vmatpush.msra.mxu0 %v563
    %2807 = vmatpush.msra.mxu0 %v559
    %2808 = vmatpush.msra.mxu0 %v555
    %2809 = vmatpush.msra.mxu0 %v551
    %2810 = vmatpush.msra.mxu0 %v547
    %2811 = vmatpush.msra.mxu0 %v543
    %2812 = vmatpush.msra.mxu0 %v539
    %2813 = vmatpush.msra.mxu0 %v535
    %2814 = vmatpush.msra.mxu0 %v531
    %2815 = vmatpush.msra.mxu0 %v527
    %2816 = vmatpush.msra.mxu0 %v523
    %2817 = vmatpush.msra.mxu0 %v519
    %2818 = vmatpush.msra.mxu0 %v515
    %2819 = vmatpush.msra.mxu0 %v511
    %2820 = vmatmul.f32.gmra.mxu0 %v2503
    %v2821 = vpop.f32.mrf.mxu0
    %v2822 = vadd.f32 %v2802, %v2821
    %2823 = vdwg.mxu0
    %v2824 = vxor.u32 %v2702, 2147483648
    %v2825 = vmul.f32 %v2824, 1.442695
    %v2826 = vpow.pop %v2825
    %v2827 = vadd.f32 %v2826, 1.0
    %v2828 = vrcp.pop %v2827
    %v2829 = vmul.f32 %v2827, %v2828
    %v2830 = vsub.f32 1.0, %v2829
    %v2831 = vmul.f32 %v2828, %v2830
    %v2832 = vadd.f32 %v2828, %v2831
    %vm2833 = vweird.f32 %v2827
    %vm2834 = vweird.f32 %v2828
    %vm2835 = vmor %vm2833, %vm2834
    %v2836 = vsel %vm2835, %v2828, %v2832
    %v2837 = vand.u32 2147483647, %v2827
    %vm2838 = vcmp.eq.f32.partialorder %v2837, 8.507059e+37
    %v2839 = vand.u32 %v2827, 2147483648
    %v2840 = vor.u32 1.1754944e-38, %v2839
    %v2841 = vsel %vm2838, %v2840, %v2836
    %v2842 = vmul.f32 1.0, %v2841
    %v2843 = vxor.u32 %v2742, 2147483648
    %v2844 = vmul.f32 %v2843, 1.442695
    %v2845 = vpow.pop %v2844
    %v2846 = vadd.f32 %v2845, 1.0
    %v2847 = vrcp.pop %v2846
    %v2848 = vmul.f32 %v2846, %v2847
    %v2849 = vsub.f32 1.0, %v2848
    %v2850 = vmul.f32 %v2847, %v2849
    %v2851 = vadd.f32 %v2847, %v2850
    %vm2852 = vweird.f32 %v2846
    %vm2853 = vweird.f32 %v2847
    %vm2854 = vmor %vm2852, %vm2853
    %v2855 = vsel %vm2854, %v2847, %v2851
    %v2856 = vand.u32 2147483647, %v2846
    %vm2857 = vcmp.eq.f32.partialorder %v2856, 8.507059e+37
    %v2858 = vand.u32 %v2846, 2147483648
    %v2859 = vor.u32 1.1754944e-38, %v2858
    %v2860 = vsel %vm2857, %v2859, %v2855
    %v2861 = vmul.f32 1.0, %v2860
    %v2862 = vtanh.pop %v2782
    %v2863 = vxor.u32 %v2822, 2147483648
    %v2864 = vmul.f32 %v2863, 1.442695
    %v2865 = vpow.pop %v2864
    %v2866 = vadd.f32 %v2865, 1.0
    %v2867 = vrcp.pop %v2866
    %v2868 = vmul.f32 %v2866, %v2867
    %v2869 = vsub.f32 1.0, %v2868
    %v2870 = vmul.f32 %v2867, %v2869
    %v2871 = vadd.f32 %v2867, %v2870
    %vm2872 = vweird.f32 %v2866
    %vm2873 = vweird.f32 %v2867
    %vm2874 = vmor %vm2872, %vm2873
    %v2875 = vsel %vm2874, %v2867, %v2871
    %v2876 = vand.u32 2147483647, %v2866
    %vm2877 = vcmp.eq.f32.partialorder %v2876, 8.507059e+37
    %v2878 = vand.u32 %v2866, 2147483648
    %v2879 = vor.u32 1.1754944e-38, %v2878
    %v2880 = vsel %vm2877, %v2879, %v2875
    %v2881 = vmul.f32 1.0, %v2880
    %v2882 = vmul.f32 %v2861, %v2504
    %v2883 = vmul.f32 %v2842, %v2862
    %v2884 = vadd.f32 %v2882, %v2883
    %v2885 = vtanh.pop %v2884
    %v2886 = vmul.f32 %v2881, %v2885
    %v2887 = vsel %vm2510, %v2886, %v2503
    %v2888 = vsel %vm2510, %v2884, %v2504
    %vm2889 = vcmp.gt.s32.totalorder %v573, 6
    %v2890 = vsel %vm2889, 1, 0
    %2891 = vset.pattern.permute.xlu0 0
    %2892 = vperm.xlu0 %2891, %v2890
    %v2893 = vpop.permute.xlu0 %2892
    %vm2894 = vcmp.eq.s32.totalorder %v2893, 1
    %v2895 = vld [vmem:[#allocation2 + $0xc0] sm:$0xff]
    %v2896 = vld [vmem:[#allocation2 + $0xc8] sm:$0xff]
    %v2897 = vld [vmem:[#allocation2 + $0xd0] sm:$0xff]
    %v2898 = vld [vmem:[#allocation2 + $0xd8] sm:$0xff]
    %2899 = vmatpush.msra.mxu0 %v440
    %2900 = vmatpush.msra.mxu0 %v436
    %2901 = vmatpush.msra.mxu0 %v432
    %2902 = vmatpush.msra.mxu0 %v428
    %2903 = vmatpush.msra.mxu0 %v424
    %2904 = vmatpush.msra.mxu0 %v420
    %2905 = vmatpush.msra.mxu0 %v416
    %2906 = vmatpush.msra.mxu0 %v412
    %2907 = vmatpush.msra.mxu0 %v408
    %2908 = vmatpush.msra.mxu0 %v404
    %2909 = vmatpush.msra.mxu0 %v400
    %2910 = vmatpush.msra.mxu0 %v396
    %2911 = vmatpush.msra.mxu0 %v392
    %2912 = vmatpush.msra.mxu0 %v388
    %2913 = vmatpush.msra.mxu0 %v384
    %2914 = vmatpush.msra.mxu0 %v380
    %2915 = vmatmul.f32.gmra.mxu0 %v2662
    %v2916 = vpop.f32.mrf.mxu0
    %v2917 = vadd.f32 0.0, %v2916
    %2918 = vdwg.mxu0
    %2919 = vmatpush.msra.mxu0 %v441
    %2920 = vmatpush.msra.mxu0 %v437
    %2921 = vmatpush.msra.mxu0 %v433
    %2922 = vmatpush.msra.mxu0 %v429
    %2923 = vmatpush.msra.mxu0 %v425
    %2924 = vmatpush.msra.mxu0 %v421
    %2925 = vmatpush.msra.mxu0 %v417
    %2926 = vmatpush.msra.mxu0 %v413
    %2927 = vmatpush.msra.mxu0 %v409
    %2928 = vmatpush.msra.mxu0 %v405
    %2929 = vmatpush.msra.mxu0 %v401
    %2930 = vmatpush.msra.mxu0 %v397
    %2931 = vmatpush.msra.mxu0 %v393
    %2932 = vmatpush.msra.mxu0 %v389
    %2933 = vmatpush.msra.mxu0 %v385
    %2934 = vmatpush.msra.mxu0 %v381
    %2935 = vmatmul.f32.gmra.mxu0 %v2662
    %v2936 = vpop.f32.mrf.mxu0
    %v2937 = vadd.f32 0.0, %v2936
    %2938 = vdwg.mxu0
    %2939 = vmatpush.msra.mxu0 %v442
    %2940 = vmatpush.msra.mxu0 %v438
    %2941 = vmatpush.msra.mxu0 %v434
    %2942 = vmatpush.msra.mxu0 %v430
    %2943 = vmatpush.msra.mxu0 %v426
    %2944 = vmatpush.msra.mxu0 %v422
    %2945 = vmatpush.msra.mxu0 %v418
    %2946 = vmatpush.msra.mxu0 %v414
    %2947 = vmatpush.msra.mxu0 %v410
    %2948 = vmatpush.msra.mxu0 %v406
    %2949 = vmatpush.msra.mxu0 %v402
    %2950 = vmatpush.msra.mxu0 %v398
    %2951 = vmatpush.msra.mxu0 %v394
    %2952 = vmatpush.msra.mxu0 %v390
    %2953 = vmatpush.msra.mxu0 %v386
    %2954 = vmatpush.msra.mxu0 %v382
    %2955 = vmatmul.f32.gmra.mxu0 %v2662
    %v2956 = vpop.f32.mrf.mxu0
    %v2957 = vadd.f32 0.0, %v2956
    %2958 = vdwg.mxu0
    %2959 = vmatpush.msra.mxu0 %v443
    %2960 = vmatpush.msra.mxu0 %v439
    %2961 = vmatpush.msra.mxu0 %v435
    %2962 = vmatpush.msra.mxu0 %v431
    %2963 = vmatpush.msra.mxu0 %v427
    %2964 = vmatpush.msra.mxu0 %v423
    %2965 = vmatpush.msra.mxu0 %v419
    %2966 = vmatpush.msra.mxu0 %v415
    %2967 = vmatpush.msra.mxu0 %v411
    %2968 = vmatpush.msra.mxu0 %v407
    %2969 = vmatpush.msra.mxu0 %v403
    %2970 = vmatpush.msra.mxu0 %v399
    %2971 = vmatpush.msra.mxu0 %v395
    %2972 = vmatpush.msra.mxu0 %v391
    %2973 = vmatpush.msra.mxu0 %v387
    %2974 = vmatpush.msra.mxu0 %v383
    %2975 = vmatmul.f32.gmra.mxu0 %v2662
    %v2976 = vpop.f32.mrf.mxu0
    %v2977 = vadd.f32 0.0, %v2976
    %2978 = vdwg.mxu0
    %v2979 = vadd.f32 %v2895, %v2917
    %v2980 = vadd.f32 %v2896, %v2937
    %v2981 = vadd.f32 %v2897, %v2957
    %v2982 = vadd.f32 %v2898, %v2977
    %v2983 = vxor.u32 %v2979, 2147483648
    %v2984 = vmul.f32 %v2983, 1.442695
    %v2985 = vpow.pop %v2984
    %v2986 = vadd.f32 %v2985, 1.0
    %v2987 = vrcp.pop %v2986
    %v2988 = vmul.f32 %v2986, %v2987
    %v2989 = vsub.f32 1.0, %v2988
    %v2990 = vmul.f32 %v2987, %v2989
    %v2991 = vadd.f32 %v2987, %v2990
    %vm2992 = vweird.f32 %v2986
    %vm2993 = vweird.f32 %v2987
    %vm2994 = vmor %vm2992, %vm2993
    %v2995 = vsel %vm2994, %v2987, %v2991
    %v2996 = vand.u32 2147483647, %v2986
    %vm2997 = vcmp.eq.f32.partialorder %v2996, 8.507059e+37
    %v2998 = vand.u32 %v2986, 2147483648
    %v2999 = vor.u32 1.1754944e-38, %v2998
    %v3000 = vsel %vm2997, %v2999, %v2995
    %v3001 = vmul.f32 1.0, %v3000
    %v3002 = vxor.u32 %v2980, 2147483648
    %v3003 = vmul.f32 %v3002, 1.442695
    %v3004 = vpow.pop %v3003
    %v3005 = vadd.f32 %v3004, 1.0
    %v3006 = vrcp.pop %v3005
    %v3007 = vmul.f32 %v3005, %v3006
    %v3008 = vsub.f32 1.0, %v3007
    %v3009 = vmul.f32 %v3006, %v3008
    %v3010 = vadd.f32 %v3006, %v3009
    %vm3011 = vweird.f32 %v3005
    %vm3012 = vweird.f32 %v3006
    %vm3013 = vmor %vm3011, %vm3012
    %v3014 = vsel %vm3013, %v3006, %v3010
    %v3015 = vand.u32 2147483647, %v3005
    %vm3016 = vcmp.eq.f32.partialorder %v3015, 8.507059e+37
    %v3017 = vand.u32 %v3005, 2147483648
    %v3018 = vor.u32 1.1754944e-38, %v3017
    %v3019 = vsel %vm3016, %v3018, %v3014
    %v3020 = vmul.f32 1.0, %v3019
    %v3021 = vtanh.pop %v2981
    %v3022 = vxor.u32 %v2982, 2147483648
    %v3023 = vmul.f32 %v3022, 1.442695
    %v3024 = vpow.pop %v3023
    %v3025 = vadd.f32 %v3024, 1.0
    %v3026 = vrcp.pop %v3025
    %v3027 = vmul.f32 %v3025, %v3026
    %v3028 = vsub.f32 1.0, %v3027
    %v3029 = vmul.f32 %v3026, %v3028
    %v3030 = vadd.f32 %v3026, %v3029
    %vm3031 = vweird.f32 %v3025
    %vm3032 = vweird.f32 %v3026
    %vm3033 = vmor %vm3031, %vm3032
    %v3034 = vsel %vm3033, %v3026, %v3030
    %v3035 = vand.u32 2147483647, %v3025
    %vm3036 = vcmp.eq.f32.partialorder %v3035, 8.507059e+37
    %v3037 = vand.u32 %v3025, 2147483648
    %v3038 = vor.u32 1.1754944e-38, %v3037
    %v3039 = vsel %vm3036, %v3038, %v3034
    %v3040 = vmul.f32 1.0, %v3039
    %v3041 = vmul.f32 %v3020, %v2663
    %v3042 = vmul.f32 %v3001, %v3021
    %v3043 = vadd.f32 %v3041, %v3042
    %v3044 = vtanh.pop %v3043
    %v3045 = vmul.f32 %v3040, %v3044
    %v3046 = vsel %vm2894, %v3045, %v2662
    %v3047 = vsel %vm2894, %v3043, %v2663
    %3048 = vmatpush.msra.mxu0 %v504
    %3049 = vmatpush.msra.mxu0 %v500
    %3050 = vmatpush.msra.mxu0 %v496
    %3051 = vmatpush.msra.mxu0 %v492
    %3052 = vmatpush.msra.mxu0 %v488
    %3053 = vmatpush.msra.mxu0 %v484
    %3054 = vmatpush.msra.mxu0 %v480
    %3055 = vmatpush.msra.mxu0 %v476
    %3056 = vmatpush.msra.mxu0 %v472
    %3057 = vmatpush.msra.mxu0 %v468
    %3058 = vmatpush.msra.mxu0 %v464
    %3059 = vmatpush.msra.mxu0 %v460
    %3060 = vmatpush.msra.mxu0 %v456
    %3061 = vmatpush.msra.mxu0 %v452
    %3062 = vmatpush.msra.mxu0 %v448
    %3063 = vmatpush.msra.mxu0 %v444
    %3064 = vmatmul.f32.gmra.mxu0 %v3045
    %v3065 = vpop.f32.mrf.mxu0
    %v3066 = vadd.f32 %v734, %v3065
    %3067 = vdwg.mxu0
    %3068 = vmatpush.msra.mxu0 %v568
    %3069 = vmatpush.msra.mxu0 %v564
    %3070 = vmatpush.msra.mxu0 %v560
    %3071 = vmatpush.msra.mxu0 %v556
    %3072 = vmatpush.msra.mxu0 %v552
    %3073 = vmatpush.msra.mxu0 %v548
    %3074 = vmatpush.msra.mxu0 %v544
    %3075 = vmatpush.msra.mxu0 %v540
    %3076 = vmatpush.msra.mxu0 %v536
    %3077 = vmatpush.msra.mxu0 %v532
    %3078 = vmatpush.msra.mxu0 %v528
    %3079 = vmatpush.msra.mxu0 %v524
    %3080 = vmatpush.msra.mxu0 %v520
    %3081 = vmatpush.msra.mxu0 %v516
    %3082 = vmatpush.msra.mxu0 %v512
    %3083 = vmatpush.msra.mxu0 %v508
    %3084 = vmatmul.f32.gmra.mxu0 %v2887
    %v3085 = vpop.f32.mrf.mxu0
    %v3086 = vadd.f32 %v3066, %v3085
    %3087 = vdwg.mxu0
    %3088 = vmatpush.msra.mxu0 %v505
    %3089 = vmatpush.msra.mxu0 %v501
    %3090 = vmatpush.msra.mxu0 %v497
    %3091 = vmatpush.msra.mxu0 %v493
    %3092 = vmatpush.msra.mxu0 %v489
    %3093 = vmatpush.msra.mxu0 %v485
    %3094 = vmatpush.msra.mxu0 %v481
    %3095 = vmatpush.msra.mxu0 %v477
    %3096 = vmatpush.msra.mxu0 %v473
    %3097 = vmatpush.msra.mxu0 %v469
    %3098 = vmatpush.msra.mxu0 %v465
    %3099 = vmatpush.msra.mxu0 %v461
    %3100 = vmatpush.msra.mxu0 %v457
    %3101 = vmatpush.msra.mxu0 %v453
    %3102 = vmatpush.msra.mxu0 %v449
    %3103 = vmatpush.msra.mxu0 %v445
    %3104 = vmatmul.f32.gmra.mxu0 %v3045
    %v3105 = vpop.f32.mrf.mxu0
    %v3106 = vadd.f32 %v735, %v3105
    %3107 = vdwg.mxu0
    %3108 = vmatpush.msra.mxu0 %v569
    %3109 = vmatpush.msra.mxu0 %v565
    %3110 = vmatpush.msra.mxu0 %v561
    %3111 = vmatpush.msra.mxu0 %v557
    %3112 = vmatpush.msra.mxu0 %v553
    %3113 = vmatpush.msra.mxu0 %v549
    %3114 = vmatpush.msra.mxu0 %v545
    %3115 = vmatpush.msra.mxu0 %v541
    %3116 = vmatpush.msra.mxu0 %v537
    %3117 = vmatpush.msra.mxu0 %v533
    %3118 = vmatpush.msra.mxu0 %v529
    %3119 = vmatpush.msra.mxu0 %v525
    %3120 = vmatpush.msra.mxu0 %v521
    %3121 = vmatpush.msra.mxu0 %v517
    %3122 = vmatpush.msra.mxu0 %v513
    %3123 = vmatpush.msra.mxu0 %v509
    %3124 = vmatmul.f32.gmra.mxu0 %v2887
    %v3125 = vpop.f32.mrf.mxu0
    %v3126 = vadd.f32 %v3106, %v3125
    %3127 = vdwg.mxu0
    %3128 = vmatpush.msra.mxu0 %v506
    %3129 = vmatpush.msra.mxu0 %v502
    %3130 = vmatpush.msra.mxu0 %v498
    %3131 = vmatpush.msra.mxu0 %v494
    %3132 = vmatpush.msra.mxu0 %v490
    %3133 = vmatpush.msra.mxu0 %v486
    %3134 = vmatpush.msra.mxu0 %v482
    %3135 = vmatpush.msra.mxu0 %v478
    %3136 = vmatpush.msra.mxu0 %v474
    %3137 = vmatpush.msra.mxu0 %v470
    %3138 = vmatpush.msra.mxu0 %v466
    %3139 = vmatpush.msra.mxu0 %v462
    %3140 = vmatpush.msra.mxu0 %v458
    %3141 = vmatpush.msra.mxu0 %v454
    %3142 = vmatpush.msra.mxu0 %v450
    %3143 = vmatpush.msra.mxu0 %v446
    %3144 = vmatmul.f32.gmra.mxu0 %v3045
    %v3145 = vpop.f32.mrf.mxu0
    %v3146 = vadd.f32 %v736, %v3145
    %3147 = vdwg.mxu0
    %3148 = vmatpush.msra.mxu0 %v570
    %3149 = vmatpush.msra.mxu0 %v566
    %3150 = vmatpush.msra.mxu0 %v562
    %3151 = vmatpush.msra.mxu0 %v558
    %3152 = vmatpush.msra.mxu0 %v554
    %3153 = vmatpush.msra.mxu0 %v550
    %3154 = vmatpush.msra.mxu0 %v546
    %3155 = vmatpush.msra.mxu0 %v542
    %3156 = vmatpush.msra.mxu0 %v538
    %3157 = vmatpush.msra.mxu0 %v534
    %3158 = vmatpush.msra.mxu0 %v530
    %3159 = vmatpush.msra.mxu0 %v526
    %3160 = vmatpush.msra.mxu0 %v522
    %3161 = vmatpush.msra.mxu0 %v518
    %3162 = vmatpush.msra.mxu0 %v514
    %3163 = vmatpush.msra.mxu0 %v510
    %3164 = vmatmul.f32.gmra.mxu0 %v2887
    %v3165 = vpop.f32.mrf.mxu0
    %v3166 = vadd.f32 %v3146, %v3165
    %3167 = vdwg.mxu0
    %3168 = vmatpush.msra.mxu0 %v507
    %3169 = vmatpush.msra.mxu0 %v503
    %3170 = vmatpush.msra.mxu0 %v499
    %3171 = vmatpush.msra.mxu0 %v495
    %3172 = vmatpush.msra.mxu0 %v491
    %3173 = vmatpush.msra.mxu0 %v487
    %3174 = vmatpush.msra.mxu0 %v483
    %3175 = vmatpush.msra.mxu0 %v479
    %3176 = vmatpush.msra.mxu0 %v475
    %3177 = vmatpush.msra.mxu0 %v471
    %3178 = vmatpush.msra.mxu0 %v467
    %3179 = vmatpush.msra.mxu0 %v463
    %3180 = vmatpush.msra.mxu0 %v459
    %3181 = vmatpush.msra.mxu0 %v455
    %3182 = vmatpush.msra.mxu0 %v451
    %3183 = vmatpush.msra.mxu0 %v447
    %3184 = vmatmul.f32.gmra.mxu0 %v3045
    %v3185 = vpop.f32.mrf.mxu0
    %v3186 = vadd.f32 %v737, %v3185
    %3187 = vdwg.mxu0
    %3188 = vmatpush.msra.mxu0 %v571
    %3189 = vmatpush.msra.mxu0 %v567
    %3190 = vmatpush.msra.mxu0 %v563
    %3191 = vmatpush.msra.mxu0 %v559
    %3192 = vmatpush.msra.mxu0 %v555
    %3193 = vmatpush.msra.mxu0 %v551
    %3194 = vmatpush.msra.mxu0 %v547
    %3195 = vmatpush.msra.mxu0 %v543
    %3196 = vmatpush.msra.mxu0 %v539
    %3197 = vmatpush.msra.mxu0 %v535
    %3198 = vmatpush.msra.mxu0 %v531
    %3199 = vmatpush.msra.mxu0 %v527
    %3200 = vmatpush.msra.mxu0 %v523
    %3201 = vmatpush.msra.mxu0 %v519
    %3202 = vmatpush.msra.mxu0 %v515
    %3203 = vmatpush.msra.mxu0 %v511
    %3204 = vmatmul.f32.gmra.mxu0 %v2887
    %v3205 = vpop.f32.mrf.mxu0
    %v3206 = vadd.f32 %v3186, %v3205
    %3207 = vdwg.mxu0
    %v3208 = vxor.u32 %v3086, 2147483648
    %v3209 = vmul.f32 %v3208, 1.442695
    %v3210 = vpow.pop %v3209
    %v3211 = vadd.f32 %v3210, 1.0
    %v3212 = vrcp.pop %v3211
    %v3213 = vmul.f32 %v3211, %v3212
    %v3214 = vsub.f32 1.0, %v3213
    %v3215 = vmul.f32 %v3212, %v3214
    %v3216 = vadd.f32 %v3212, %v3215
    %vm3217 = vweird.f32 %v3211
    %vm3218 = vweird.f32 %v3212
    %vm3219 = vmor %vm3217, %vm3218
    %v3220 = vsel %vm3219, %v3212, %v3216
    %v3221 = vand.u32 2147483647, %v3211
    %vm3222 = vcmp.eq.f32.partialorder %v3221, 8.507059e+37
    %v3223 = vand.u32 %v3211, 2147483648
    %v3224 = vor.u32 1.1754944e-38, %v3223
    %v3225 = vsel %vm3222, %v3224, %v3220
    %v3226 = vmul.f32 1.0, %v3225
    %v3227 = vxor.u32 %v3126, 2147483648
    %v3228 = vmul.f32 %v3227, 1.442695
    %v3229 = vpow.pop %v3228
    %v3230 = vadd.f32 %v3229, 1.0
    %v3231 = vrcp.pop %v3230
    %v3232 = vmul.f32 %v3230, %v3231
    %v3233 = vsub.f32 1.0, %v3232
    %v3234 = vmul.f32 %v3231, %v3233
    %v3235 = vadd.f32 %v3231, %v3234
    %vm3236 = vweird.f32 %v3230
    %vm3237 = vweird.f32 %v3231
    %vm3238 = vmor %vm3236, %vm3237
    %v3239 = vsel %vm3238, %v3231, %v3235
    %v3240 = vand.u32 2147483647, %v3230
    %vm3241 = vcmp.eq.f32.partialorder %v3240, 8.507059e+37
    %v3242 = vand.u32 %v3230, 2147483648
    %v3243 = vor.u32 1.1754944e-38, %v3242
    %v3244 = vsel %vm3241, %v3243, %v3239
    %v3245 = vmul.f32 1.0, %v3244
    %v3246 = vtanh.pop %v3166
    %v3247 = vxor.u32 %v3206, 2147483648
    %v3248 = vmul.f32 %v3247, 1.442695
    %v3249 = vpow.pop %v3248
    %v3250 = vadd.f32 %v3249, 1.0
    %v3251 = vrcp.pop %v3250
    %v3252 = vmul.f32 %v3250, %v3251
    %v3253 = vsub.f32 1.0, %v3252
    %v3254 = vmul.f32 %v3251, %v3253
    %v3255 = vadd.f32 %v3251, %v3254
    %vm3256 = vweird.f32 %v3250
    %vm3257 = vweird.f32 %v3251
    %vm3258 = vmor %vm3256, %vm3257
    %v3259 = vsel %vm3258, %v3251, %v3255
    %v3260 = vand.u32 2147483647, %v3250
    %vm3261 = vcmp.eq.f32.partialorder %v3260, 8.507059e+37
    %v3262 = vand.u32 %v3250, 2147483648
    %v3263 = vor.u32 1.1754944e-38, %v3262
    %v3264 = vsel %vm3261, %v3263, %v3259
    %v3265 = vmul.f32 1.0, %v3264
    %v3266 = vmul.f32 %v3245, %v2888
    %v3267 = vmul.f32 %v3226, %v3246
    %v3268 = vadd.f32 %v3266, %v3267
    %v3269 = vtanh.pop %v3268
    %v3270 = vmul.f32 %v3265, %v3269
    %v3271 = vsel %vm2894, %v3270, %v2887
    %v3272 = vsel %vm2894, %v3268, %v2888
    %vm3273 = vcmp.gt.s32.totalorder %v573, 7
    %v3274 = vsel %vm3273, 1, 0
    %3275 = vset.pattern.permute.xlu0 0
    %3276 = vperm.xlu0 %3275, %v3274
    %v3277 = vpop.permute.xlu0 %3276
    %vm3278 = vcmp.eq.s32.totalorder %v3277, 1
    %v3279 = vld [vmem:[#allocation2 + $0xe0] sm:$0xff]
    %v3280 = vld [vmem:[#allocation2 + $0xe8] sm:$0xff]
    %v3281 = vld [vmem:[#allocation2 + $0xf0] sm:$0xff]
    %v3282 = vld [vmem:[#allocation2 + $0xf8] sm:$0xff]
    %3283 = vmatpush.msra.mxu0 %v440
    %3284 = vmatpush.msra.mxu0 %v436
    %3285 = vmatpush.msra.mxu0 %v432
    %3286 = vmatpush.msra.mxu0 %v428
    %3287 = vmatpush.msra.mxu0 %v424
    %3288 = vmatpush.msra.mxu0 %v420
    %3289 = vmatpush.msra.mxu0 %v416
    %3290 = vmatpush.msra.mxu0 %v412
    %3291 = vmatpush.msra.mxu0 %v408
    %3292 = vmatpush.msra.mxu0 %v404
    %3293 = vmatpush.msra.mxu0 %v400
    %3294 = vmatpush.msra.mxu0 %v396
    %3295 = vmatpush.msra.mxu0 %v392
    %3296 = vmatpush.msra.mxu0 %v388
    %3297 = vmatpush.msra.mxu0 %v384
    %3298 = vmatpush.msra.mxu0 %v380
    %3299 = vmatmul.f32.gmra.mxu0 %v3046
    %v3300 = vpop.f32.mrf.mxu0
    %v3301 = vadd.f32 0.0, %v3300
    %3302 = vdwg.mxu0
    %3303 = vmatpush.msra.mxu0 %v441
    %3304 = vmatpush.msra.mxu0 %v437
    %3305 = vmatpush.msra.mxu0 %v433
    %3306 = vmatpush.msra.mxu0 %v429
    %3307 = vmatpush.msra.mxu0 %v425
    %3308 = vmatpush.msra.mxu0 %v421
    %3309 = vmatpush.msra.mxu0 %v417
    %3310 = vmatpush.msra.mxu0 %v413
    %3311 = vmatpush.msra.mxu0 %v409
    %3312 = vmatpush.msra.mxu0 %v405
    %3313 = vmatpush.msra.mxu0 %v401
    %3314 = vmatpush.msra.mxu0 %v397
    %3315 = vmatpush.msra.mxu0 %v393
    %3316 = vmatpush.msra.mxu0 %v389
    %3317 = vmatpush.msra.mxu0 %v385
    %3318 = vmatpush.msra.mxu0 %v381
    %3319 = vmatmul.f32.gmra.mxu0 %v3046
    %v3320 = vpop.f32.mrf.mxu0
    %v3321 = vadd.f32 0.0, %v3320
    %3322 = vdwg.mxu0
    %3323 = vmatpush.msra.mxu0 %v442
    %3324 = vmatpush.msra.mxu0 %v438
    %3325 = vmatpush.msra.mxu0 %v434
    %3326 = vmatpush.msra.mxu0 %v430
    %3327 = vmatpush.msra.mxu0 %v426
    %3328 = vmatpush.msra.mxu0 %v422
    %3329 = vmatpush.msra.mxu0 %v418
    %3330 = vmatpush.msra.mxu0 %v414
    %3331 = vmatpush.msra.mxu0 %v410
    %3332 = vmatpush.msra.mxu0 %v406
    %3333 = vmatpush.msra.mxu0 %v402
    %3334 = vmatpush.msra.mxu0 %v398
    %3335 = vmatpush.msra.mxu0 %v394
    %3336 = vmatpush.msra.mxu0 %v390
    %3337 = vmatpush.msra.mxu0 %v386
    %3338 = vmatpush.msra.mxu0 %v382
    %3339 = vmatmul.f32.gmra.mxu0 %v3046
    %v3340 = vpop.f32.mrf.mxu0
    %v3341 = vadd.f32 0.0, %v3340
    %3342 = vdwg.mxu0
    %3343 = vmatpush.msra.mxu0 %v443
    %3344 = vmatpush.msra.mxu0 %v439
    %3345 = vmatpush.msra.mxu0 %v435
    %3346 = vmatpush.msra.mxu0 %v431
    %3347 = vmatpush.msra.mxu0 %v427
    %3348 = vmatpush.msra.mxu0 %v423
    %3349 = vmatpush.msra.mxu0 %v419
    %3350 = vmatpush.msra.mxu0 %v415
    %3351 = vmatpush.msra.mxu0 %v411
    %3352 = vmatpush.msra.mxu0 %v407
    %3353 = vmatpush.msra.mxu0 %v403
    %3354 = vmatpush.msra.mxu0 %v399
    %3355 = vmatpush.msra.mxu0 %v395
    %3356 = vmatpush.msra.mxu0 %v391
    %3357 = vmatpush.msra.mxu0 %v387
    %3358 = vmatpush.msra.mxu0 %v383
    %3359 = vmatmul.f32.gmra.mxu0 %v3046
    %v3360 = vpop.f32.mrf.mxu0
    %v3361 = vadd.f32 0.0, %v3360
    %3362 = vdwg.mxu0
    %v3363 = vadd.f32 %v3279, %v3301
    %v3364 = vadd.f32 %v3280, %v3321
    %v3365 = vadd.f32 %v3281, %v3341
    %v3366 = vadd.f32 %v3282, %v3361
    %v3367 = vxor.u32 %v3363, 2147483648
    %v3368 = vmul.f32 %v3367, 1.442695
    %v3369 = vpow.pop %v3368
    %v3370 = vadd.f32 %v3369, 1.0
    %v3371 = vrcp.pop %v3370
    %v3372 = vmul.f32 %v3370, %v3371
    %v3373 = vsub.f32 1.0, %v3372
    %v3374 = vmul.f32 %v3371, %v3373
    %v3375 = vadd.f32 %v3371, %v3374
    %vm3376 = vweird.f32 %v3370
    %vm3377 = vweird.f32 %v3371
    %vm3378 = vmor %vm3376, %vm3377
    %v3379 = vsel %vm3378, %v3371, %v3375
    %v3380 = vand.u32 2147483647, %v3370
    %vm3381 = vcmp.eq.f32.partialorder %v3380, 8.507059e+37
    %v3382 = vand.u32 %v3370, 2147483648
    %v3383 = vor.u32 1.1754944e-38, %v3382
    %v3384 = vsel %vm3381, %v3383, %v3379
    %v3385 = vmul.f32 1.0, %v3384
    %v3386 = vxor.u32 %v3364, 2147483648
    %v3387 = vmul.f32 %v3386, 1.442695
    %v3388 = vpow.pop %v3387
    %v3389 = vadd.f32 %v3388, 1.0
    %v3390 = vrcp.pop %v3389
    %v3391 = vmul.f32 %v3389, %v3390
    %v3392 = vsub.f32 1.0, %v3391
    %v3393 = vmul.f32 %v3390, %v3392
    %v3394 = vadd.f32 %v3390, %v3393
    %vm3395 = vweird.f32 %v3389
    %vm3396 = vweird.f32 %v3390
    %vm3397 = vmor %vm3395, %vm3396
    %v3398 = vsel %vm3397, %v3390, %v3394
    %v3399 = vand.u32 2147483647, %v3389
    %vm3400 = vcmp.eq.f32.partialorder %v3399, 8.507059e+37
    %v3401 = vand.u32 %v3389, 2147483648
    %v3402 = vor.u32 1.1754944e-38, %v3401
    %v3403 = vsel %vm3400, %v3402, %v3398
    %v3404 = vmul.f32 1.0, %v3403
    %v3405 = vtanh.pop %v3365
    %v3406 = vxor.u32 %v3366, 2147483648
    %v3407 = vmul.f32 %v3406, 1.442695
    %v3408 = vpow.pop %v3407
    %v3409 = vadd.f32 %v3408, 1.0
    %v3410 = vrcp.pop %v3409
    %v3411 = vmul.f32 %v3409, %v3410
    %v3412 = vsub.f32 1.0, %v3411
    %v3413 = vmul.f32 %v3410, %v3412
    %v3414 = vadd.f32 %v3410, %v3413
    %vm3415 = vweird.f32 %v3409
    %vm3416 = vweird.f32 %v3410
    %vm3417 = vmor %vm3415, %vm3416
    %v3418 = vsel %vm3417, %v3410, %v3414
    %v3419 = vand.u32 2147483647, %v3409
    %vm3420 = vcmp.eq.f32.partialorder %v3419, 8.507059e+37
    %v3421 = vand.u32 %v3409, 2147483648
    %v3422 = vor.u32 1.1754944e-38, %v3421
    %v3423 = vsel %vm3420, %v3422, %v3418
    %v3424 = vmul.f32 1.0, %v3423
    %v3425 = vmul.f32 %v3404, %v3047
    %v3426 = vmul.f32 %v3385, %v3405
    %v3427 = vadd.f32 %v3425, %v3426
    %v3428 = vtanh.pop %v3427
    %v3429 = vmul.f32 %v3424, %v3428
    %v3430 = vsel %vm3278, %v3429, %v3046
    %v3431 = vsel %vm3278, %v3427, %v3047
    %3432 = vmatpush.msra.mxu0 %v504
    %3433 = vmatpush.msra.mxu0 %v500
    %3434 = vmatpush.msra.mxu0 %v496
    %3435 = vmatpush.msra.mxu0 %v492
    %3436 = vmatpush.msra.mxu0 %v488
    %3437 = vmatpush.msra.mxu0 %v484
    %3438 = vmatpush.msra.mxu0 %v480
    %3439 = vmatpush.msra.mxu0 %v476
    %3440 = vmatpush.msra.mxu0 %v472
    %3441 = vmatpush.msra.mxu0 %v468
    %3442 = vmatpush.msra.mxu0 %v464
    %3443 = vmatpush.msra.mxu0 %v460
    %3444 = vmatpush.msra.mxu0 %v456
    %3445 = vmatpush.msra.mxu0 %v452
    %3446 = vmatpush.msra.mxu0 %v448
    %3447 = vmatpush.msra.mxu0 %v444
    %3448 = vmatmul.f32.gmra.mxu0 %v3429
    %v3449 = vpop.f32.mrf.mxu0
    %v3450 = vadd.f32 %v734, %v3449
    %3451 = vdwg.mxu0
    %3452 = vmatpush.msra.mxu0 %v568
    %3453 = vmatpush.msra.mxu0 %v564
    %3454 = vmatpush.msra.mxu0 %v560
    %3455 = vmatpush.msra.mxu0 %v556
    %3456 = vmatpush.msra.mxu0 %v552
    %3457 = vmatpush.msra.mxu0 %v548
    %3458 = vmatpush.msra.mxu0 %v544
    %3459 = vmatpush.msra.mxu0 %v540
    %3460 = vmatpush.msra.mxu0 %v536
    %3461 = vmatpush.msra.mxu0 %v532
    %3462 = vmatpush.msra.mxu0 %v528
    %3463 = vmatpush.msra.mxu0 %v524
    %3464 = vmatpush.msra.mxu0 %v520
    %3465 = vmatpush.msra.mxu0 %v516
    %3466 = vmatpush.msra.mxu0 %v512
    %3467 = vmatpush.msra.mxu0 %v508
    %3468 = vmatmul.f32.gmra.mxu0 %v3271
    %v3469 = vpop.f32.mrf.mxu0
    %v3470 = vadd.f32 %v3450, %v3469
    %3471 = vdwg.mxu0
    %3472 = vmatpush.msra.mxu0 %v505
    %3473 = vmatpush.msra.mxu0 %v501
    %3474 = vmatpush.msra.mxu0 %v497
    %3475 = vmatpush.msra.mxu0 %v493
    %3476 = vmatpush.msra.mxu0 %v489
    %3477 = vmatpush.msra.mxu0 %v485
    %3478 = vmatpush.msra.mxu0 %v481
    %3479 = vmatpush.msra.mxu0 %v477
    %3480 = vmatpush.msra.mxu0 %v473
    %3481 = vmatpush.msra.mxu0 %v469
    %3482 = vmatpush.msra.mxu0 %v465
    %3483 = vmatpush.msra.mxu0 %v461
    %3484 = vmatpush.msra.mxu0 %v457
    %3485 = vmatpush.msra.mxu0 %v453
    %3486 = vmatpush.msra.mxu0 %v449
    %3487 = vmatpush.msra.mxu0 %v445
    %3488 = vmatmul.f32.gmra.mxu0 %v3429
    %v3489 = vpop.f32.mrf.mxu0
    %v3490 = vadd.f32 %v735, %v3489
    %3491 = vdwg.mxu0
    %3492 = vmatpush.msra.mxu0 %v569
    %3493 = vmatpush.msra.mxu0 %v565
    %3494 = vmatpush.msra.mxu0 %v561
    %3495 = vmatpush.msra.mxu0 %v557
    %3496 = vmatpush.msra.mxu0 %v553
    %3497 = vmatpush.msra.mxu0 %v549
    %3498 = vmatpush.msra.mxu0 %v545
    %3499 = vmatpush.msra.mxu0 %v541
    %3500 = vmatpush.msra.mxu0 %v537
    %3501 = vmatpush.msra.mxu0 %v533
    %3502 = vmatpush.msra.mxu0 %v529
    %3503 = vmatpush.msra.mxu0 %v525
    %3504 = vmatpush.msra.mxu0 %v521
    %3505 = vmatpush.msra.mxu0 %v517
    %3506 = vmatpush.msra.mxu0 %v513
    %3507 = vmatpush.msra.mxu0 %v509
    %3508 = vmatmul.f32.gmra.mxu0 %v3271
    %v3509 = vpop.f32.mrf.mxu0
    %v3510 = vadd.f32 %v3490, %v3509
    %3511 = vdwg.mxu0
    %3512 = vmatpush.msra.mxu0 %v506
    %3513 = vmatpush.msra.mxu0 %v502
    %3514 = vmatpush.msra.mxu0 %v498
    %3515 = vmatpush.msra.mxu0 %v494
    %3516 = vmatpush.msra.mxu0 %v490
    %3517 = vmatpush.msra.mxu0 %v486
    %3518 = vmatpush.msra.mxu0 %v482
    %3519 = vmatpush.msra.mxu0 %v478
    %3520 = vmatpush.msra.mxu0 %v474
    %3521 = vmatpush.msra.mxu0 %v470
    %3522 = vmatpush.msra.mxu0 %v466
    %3523 = vmatpush.msra.mxu0 %v462
    %3524 = vmatpush.msra.mxu0 %v458
    %3525 = vmatpush.msra.mxu0 %v454
    %3526 = vmatpush.msra.mxu0 %v450
    %3527 = vmatpush.msra.mxu0 %v446
    %3528 = vmatmul.f32.gmra.mxu0 %v3429
    %v3529 = vpop.f32.mrf.mxu0
    %v3530 = vadd.f32 %v736, %v3529
    %3531 = vdwg.mxu0
    %3532 = vmatpush.msra.mxu0 %v570
    %3533 = vmatpush.msra.mxu0 %v566
    %3534 = vmatpush.msra.mxu0 %v562
    %3535 = vmatpush.msra.mxu0 %v558
    %3536 = vmatpush.msra.mxu0 %v554
    %3537 = vmatpush.msra.mxu0 %v550
    %3538 = vmatpush.msra.mxu0 %v546
    %3539 = vmatpush.msra.mxu0 %v542
    %3540 = vmatpush.msra.mxu0 %v538
    %3541 = vmatpush.msra.mxu0 %v534
    %3542 = vmatpush.msra.mxu0 %v530
    %3543 = vmatpush.msra.mxu0 %v526
    %3544 = vmatpush.msra.mxu0 %v522
    %3545 = vmatpush.msra.mxu0 %v518
    %3546 = vmatpush.msra.mxu0 %v514
    %3547 = vmatpush.msra.mxu0 %v510
    %3548 = vmatmul.f32.gmra.mxu0 %v3271
    %v3549 = vpop.f32.mrf.mxu0
    %v3550 = vadd.f32 %v3530, %v3549
    %3551 = vdwg.mxu0
    %3552 = vmatpush.msra.mxu0 %v507
    %3553 = vmatpush.msra.mxu0 %v503
    %3554 = vmatpush.msra.mxu0 %v499
    %3555 = vmatpush.msra.mxu0 %v495
    %3556 = vmatpush.msra.mxu0 %v491
    %3557 = vmatpush.msra.mxu0 %v487
    %3558 = vmatpush.msra.mxu0 %v483
    %3559 = vmatpush.msra.mxu0 %v479
    %3560 = vmatpush.msra.mxu0 %v475
    %3561 = vmatpush.msra.mxu0 %v471
    %3562 = vmatpush.msra.mxu0 %v467
    %3563 = vmatpush.msra.mxu0 %v463
    %3564 = vmatpush.msra.mxu0 %v459
    %3565 = vmatpush.msra.mxu0 %v455
    %3566 = vmatpush.msra.mxu0 %v451
    %3567 = vmatpush.msra.mxu0 %v447
    %3568 = vmatmul.f32.gmra.mxu0 %v3429
    %v3569 = vpop.f32.mrf.mxu0
    %v3570 = vadd.f32 %v737, %v3569
    %3571 = vdwg.mxu0
    %3572 = vmatpush.msra.mxu0 %v571
    %3573 = vmatpush.msra.mxu0 %v567
    %3574 = vmatpush.msra.mxu0 %v563
    %3575 = vmatpush.msra.mxu0 %v559
    %3576 = vmatpush.msra.mxu0 %v555
    %3577 = vmatpush.msra.mxu0 %v551
    %3578 = vmatpush.msra.mxu0 %v547
    %3579 = vmatpush.msra.mxu0 %v543
    %3580 = vmatpush.msra.mxu0 %v539
    %3581 = vmatpush.msra.mxu0 %v535
    %3582 = vmatpush.msra.mxu0 %v531
    %3583 = vmatpush.msra.mxu0 %v527
    %3584 = vmatpush.msra.mxu0 %v523
    %3585 = vmatpush.msra.mxu0 %v519
    %3586 = vmatpush.msra.mxu0 %v515
    %3587 = vmatpush.msra.mxu0 %v511
    %3588 = vmatmul.f32.gmra.mxu0 %v3271
    %v3589 = vpop.f32.mrf.mxu0
    %v3590 = vadd.f32 %v3570, %v3589
    %3591 = vdwg.mxu0
    %v3592 = vxor.u32 %v3470, 2147483648
    %v3593 = vmul.f32 %v3592, 1.442695
    %v3594 = vpow.pop %v3593
    %v3595 = vadd.f32 %v3594, 1.0
    %v3596 = vrcp.pop %v3595
    %v3597 = vmul.f32 %v3595, %v3596
    %v3598 = vsub.f32 1.0, %v3597
    %v3599 = vmul.f32 %v3596, %v3598
    %v3600 = vadd.f32 %v3596, %v3599
    %vm3601 = vweird.f32 %v3595
    %vm3602 = vweird.f32 %v3596
    %vm3603 = vmor %vm3601, %vm3602
    %v3604 = vsel %vm3603, %v3596, %v3600
    %v3605 = vand.u32 2147483647, %v3595
    %vm3606 = vcmp.eq.f32.partialorder %v3605, 8.507059e+37
    %v3607 = vand.u32 %v3595, 2147483648
    %v3608 = vor.u32 1.1754944e-38, %v3607
    %v3609 = vsel %vm3606, %v3608, %v3604
    %v3610 = vmul.f32 1.0, %v3609
    %v3611 = vxor.u32 %v3510, 2147483648
    %v3612 = vmul.f32 %v3611, 1.442695
    %v3613 = vpow.pop %v3612
    %v3614 = vadd.f32 %v3613, 1.0
    %v3615 = vrcp.pop %v3614
    %v3616 = vmul.f32 %v3614, %v3615
    %v3617 = vsub.f32 1.0, %v3616
    %v3618 = vmul.f32 %v3615, %v3617
    %v3619 = vadd.f32 %v3615, %v3618
    %vm3620 = vweird.f32 %v3614
    %vm3621 = vweird.f32 %v3615
    %vm3622 = vmor %vm3620, %vm3621
    %v3623 = vsel %vm3622, %v3615, %v3619
    %v3624 = vand.u32 2147483647, %v3614
    %vm3625 = vcmp.eq.f32.partialorder %v3624, 8.507059e+37
    %v3626 = vand.u32 %v3614, 2147483648
    %v3627 = vor.u32 1.1754944e-38, %v3626
    %v3628 = vsel %vm3625, %v3627, %v3623
    %v3629 = vmul.f32 1.0, %v3628
    %v3630 = vtanh.pop %v3550
    %v3631 = vxor.u32 %v3590, 2147483648
    %v3632 = vmul.f32 %v3631, 1.442695
    %v3633 = vpow.pop %v3632
    %v3634 = vadd.f32 %v3633, 1.0
    %v3635 = vrcp.pop %v3634
    %v3636 = vmul.f32 %v3634, %v3635
    %v3637 = vsub.f32 1.0, %v3636
    %v3638 = vmul.f32 %v3635, %v3637
    %v3639 = vadd.f32 %v3635, %v3638
    %vm3640 = vweird.f32 %v3634
    %vm3641 = vweird.f32 %v3635
    %vm3642 = vmor %vm3640, %vm3641
    %v3643 = vsel %vm3642, %v3635, %v3639
    %v3644 = vand.u32 2147483647, %v3634
    %vm3645 = vcmp.eq.f32.partialorder %v3644, 8.507059e+37
    %v3646 = vand.u32 %v3634, 2147483648
    %v3647 = vor.u32 1.1754944e-38, %v3646
    %v3648 = vsel %vm3645, %v3647, %v3643
    %v3649 = vmul.f32 1.0, %v3648
    %v3650 = vmul.f32 %v3629, %v3272
    %v3651 = vmul.f32 %v3610, %v3630
    %v3652 = vadd.f32 %v3650, %v3651
    %v3653 = vtanh.pop %v3652
    %v3654 = vmul.f32 %v3649, %v3653
    %v3655 = vsel %vm3278, %v3654, %v3271
    %v3656 = vsel %vm3278, %v3652, %v3272
    %vm3657 = vcmp.gt.s32.totalorder %v573, 8
    %v3658 = vsel %vm3657, 1, 0
    %3659 = vset.pattern.permute.xlu0 0
    %3660 = vperm.xlu0 %3659, %v3658
    %v3661 = vpop.permute.xlu0 %3660
    %vm3662 = vcmp.eq.s32.totalorder %v3661, 1
    %v3663 = vld [vmem:[#allocation2 + $0x100] sm:$0xff]
    %v3664 = vld [vmem:[#allocation2 + $0x108] sm:$0xff]
    %v3665 = vld [vmem:[#allocation2 + $0x110] sm:$0xff]
    %v3666 = vld [vmem:[#allocation2 + $0x118] sm:$0xff]
    %3667 = vmatpush.msra.mxu0 %v440
    %3668 = vmatpush.msra.mxu0 %v436
    %3669 = vmatpush.msra.mxu0 %v432
    %3670 = vmatpush.msra.mxu0 %v428
    %3671 = vmatpush.msra.mxu0 %v424
    %3672 = vmatpush.msra.mxu0 %v420
    %3673 = vmatpush.msra.mxu0 %v416
    %3674 = vmatpush.msra.mxu0 %v412
    %3675 = vmatpush.msra.mxu0 %v408
    %3676 = vmatpush.msra.mxu0 %v404
    %3677 = vmatpush.msra.mxu0 %v400
    %3678 = vmatpush.msra.mxu0 %v396
    %3679 = vmatpush.msra.mxu0 %v392
    %3680 = vmatpush.msra.mxu0 %v388
    %3681 = vmatpush.msra.mxu0 %v384
    %3682 = vmatpush.msra.mxu0 %v380
    %3683 = vmatmul.f32.gmra.mxu0 %v3430
    %v3684 = vpop.f32.mrf.mxu0
    %v3685 = vadd.f32 0.0, %v3684
    %3686 = vdwg.mxu0
    %3687 = vmatpush.msra.mxu0 %v441
    %3688 = vmatpush.msra.mxu0 %v437
    %3689 = vmatpush.msra.mxu0 %v433
    %3690 = vmatpush.msra.mxu0 %v429
    %3691 = vmatpush.msra.mxu0 %v425
    %3692 = vmatpush.msra.mxu0 %v421
    %3693 = vmatpush.msra.mxu0 %v417
    %3694 = vmatpush.msra.mxu0 %v413
    %3695 = vmatpush.msra.mxu0 %v409
    %3696 = vmatpush.msra.mxu0 %v405
    %3697 = vmatpush.msra.mxu0 %v401
    %3698 = vmatpush.msra.mxu0 %v397
    %3699 = vmatpush.msra.mxu0 %v393
    %3700 = vmatpush.msra.mxu0 %v389
    %3701 = vmatpush.msra.mxu0 %v385
    %3702 = vmatpush.msra.mxu0 %v381
    %3703 = vmatmul.f32.gmra.mxu0 %v3430
    %v3704 = vpop.f32.mrf.mxu0
    %v3705 = vadd.f32 0.0, %v3704
    %3706 = vdwg.mxu0
    %3707 = vmatpush.msra.mxu0 %v442
    %3708 = vmatpush.msra.mxu0 %v438
    %3709 = vmatpush.msra.mxu0 %v434
    %3710 = vmatpush.msra.mxu0 %v430
    %3711 = vmatpush.msra.mxu0 %v426
    %3712 = vmatpush.msra.mxu0 %v422
    %3713 = vmatpush.msra.mxu0 %v418
    %3714 = vmatpush.msra.mxu0 %v414
    %3715 = vmatpush.msra.mxu0 %v410
    %3716 = vmatpush.msra.mxu0 %v406
    %3717 = vmatpush.msra.mxu0 %v402
    %3718 = vmatpush.msra.mxu0 %v398
    %3719 = vmatpush.msra.mxu0 %v394
    %3720 = vmatpush.msra.mxu0 %v390
    %3721 = vmatpush.msra.mxu0 %v386
    %3722 = vmatpush.msra.mxu0 %v382
    %3723 = vmatmul.f32.gmra.mxu0 %v3430
    %v3724 = vpop.f32.mrf.mxu0
    %v3725 = vadd.f32 0.0, %v3724
    %3726 = vdwg.mxu0
    %3727 = vmatpush.msra.mxu0 %v443
    %3728 = vmatpush.msra.mxu0 %v439
    %3729 = vmatpush.msra.mxu0 %v435
    %3730 = vmatpush.msra.mxu0 %v431
    %3731 = vmatpush.msra.mxu0 %v427
    %3732 = vmatpush.msra.mxu0 %v423
    %3733 = vmatpush.msra.mxu0 %v419
    %3734 = vmatpush.msra.mxu0 %v415
    %3735 = vmatpush.msra.mxu0 %v411
    %3736 = vmatpush.msra.mxu0 %v407
    %3737 = vmatpush.msra.mxu0 %v403
    %3738 = vmatpush.msra.mxu0 %v399
    %3739 = vmatpush.msra.mxu0 %v395
    %3740 = vmatpush.msra.mxu0 %v391
    %3741 = vmatpush.msra.mxu0 %v387
    %3742 = vmatpush.msra.mxu0 %v383
    %3743 = vmatmul.f32.gmra.mxu0 %v3430
    %v3744 = vpop.f32.mrf.mxu0
    %v3745 = vadd.f32 0.0, %v3744
    %3746 = vdwg.mxu0
    %v3747 = vadd.f32 %v3663, %v3685
    %v3748 = vadd.f32 %v3664, %v3705
    %v3749 = vadd.f32 %v3665, %v3725
    %v3750 = vadd.f32 %v3666, %v3745
    %v3751 = vxor.u32 %v3747, 2147483648
    %v3752 = vmul.f32 %v3751, 1.442695
    %v3753 = vpow.pop %v3752
    %v3754 = vadd.f32 %v3753, 1.0
    %v3755 = vrcp.pop %v3754
    %v3756 = vmul.f32 %v3754, %v3755
    %v3757 = vsub.f32 1.0, %v3756
    %v3758 = vmul.f32 %v3755, %v3757
    %v3759 = vadd.f32 %v3755, %v3758
    %vm3760 = vweird.f32 %v3754
    %vm3761 = vweird.f32 %v3755
    %vm3762 = vmor %vm3760, %vm3761
    %v3763 = vsel %vm3762, %v3755, %v3759
    %v3764 = vand.u32 2147483647, %v3754
    %vm3765 = vcmp.eq.f32.partialorder %v3764, 8.507059e+37
    %v3766 = vand.u32 %v3754, 2147483648
    %v3767 = vor.u32 1.1754944e-38, %v3766
    %v3768 = vsel %vm3765, %v3767, %v3763
    %v3769 = vmul.f32 1.0, %v3768
    %v3770 = vxor.u32 %v3748, 2147483648
    %v3771 = vmul.f32 %v3770, 1.442695
    %v3772 = vpow.pop %v3771
    %v3773 = vadd.f32 %v3772, 1.0
    %v3774 = vrcp.pop %v3773
    %v3775 = vmul.f32 %v3773, %v3774
    %v3776 = vsub.f32 1.0, %v3775
    %v3777 = vmul.f32 %v3774, %v3776
    %v3778 = vadd.f32 %v3774, %v3777
    %vm3779 = vweird.f32 %v3773
    %vm3780 = vweird.f32 %v3774
    %vm3781 = vmor %vm3779, %vm3780
    %v3782 = vsel %vm3781, %v3774, %v3778
    %v3783 = vand.u32 2147483647, %v3773
    %vm3784 = vcmp.eq.f32.partialorder %v3783, 8.507059e+37
    %v3785 = vand.u32 %v3773, 2147483648
    %v3786 = vor.u32 1.1754944e-38, %v3785
    %v3787 = vsel %vm3784, %v3786, %v3782
    %v3788 = vmul.f32 1.0, %v3787
    %v3789 = vtanh.pop %v3749
    %v3790 = vxor.u32 %v3750, 2147483648
    %v3791 = vmul.f32 %v3790, 1.442695
    %v3792 = vpow.pop %v3791
    %v3793 = vadd.f32 %v3792, 1.0
    %v3794 = vrcp.pop %v3793
    %v3795 = vmul.f32 %v3793, %v3794
    %v3796 = vsub.f32 1.0, %v3795
    %v3797 = vmul.f32 %v3794, %v3796
    %v3798 = vadd.f32 %v3794, %v3797
    %vm3799 = vweird.f32 %v3793
    %vm3800 = vweird.f32 %v3794
    %vm3801 = vmor %vm3799, %vm3800
    %v3802 = vsel %vm3801, %v3794, %v3798
    %v3803 = vand.u32 2147483647, %v3793
    %vm3804 = vcmp.eq.f32.partialorder %v3803, 8.507059e+37
    %v3805 = vand.u32 %v3793, 2147483648
    %v3806 = vor.u32 1.1754944e-38, %v3805
    %v3807 = vsel %vm3804, %v3806, %v3802
    %v3808 = vmul.f32 1.0, %v3807
    %v3809 = vmul.f32 %v3788, %v3431
    %v3810 = vmul.f32 %v3769, %v3789
    %v3811 = vadd.f32 %v3809, %v3810
    %v3812 = vtanh.pop %v3811
    %v3813 = vmul.f32 %v3808, %v3812
    %3814 = vmatpush.msra.mxu0 %v504
    %3815 = vmatpush.msra.mxu0 %v500
    %3816 = vmatpush.msra.mxu0 %v496
    %3817 = vmatpush.msra.mxu0 %v492
    %3818 = vmatpush.msra.mxu0 %v488
    %3819 = vmatpush.msra.mxu0 %v484
    %3820 = vmatpush.msra.mxu0 %v480
    %3821 = vmatpush.msra.mxu0 %v476
    %3822 = vmatpush.msra.mxu0 %v472
    %3823 = vmatpush.msra.mxu0 %v468
    %3824 = vmatpush.msra.mxu0 %v464
    %3825 = vmatpush.msra.mxu0 %v460
    %3826 = vmatpush.msra.mxu0 %v456
    %3827 = vmatpush.msra.mxu0 %v452
    %3828 = vmatpush.msra.mxu0 %v448
    %3829 = vmatpush.msra.mxu0 %v444
    %3830 = vmatmul.f32.gmra.mxu0 %v3813
    %v3831 = vpop.f32.mrf.mxu0
    %v3832 = vadd.f32 %v734, %v3831
    %3833 = vdwg.mxu0
    %3834 = vmatpush.msra.mxu0 %v568
    %3835 = vmatpush.msra.mxu0 %v564
    %3836 = vmatpush.msra.mxu0 %v560
    %3837 = vmatpush.msra.mxu0 %v556
    %3838 = vmatpush.msra.mxu0 %v552
    %3839 = vmatpush.msra.mxu0 %v548
    %3840 = vmatpush.msra.mxu0 %v544
    %3841 = vmatpush.msra.mxu0 %v540
    %3842 = vmatpush.msra.mxu0 %v536
    %3843 = vmatpush.msra.mxu0 %v532
    %3844 = vmatpush.msra.mxu0 %v528
    %3845 = vmatpush.msra.mxu0 %v524
    %3846 = vmatpush.msra.mxu0 %v520
    %3847 = vmatpush.msra.mxu0 %v516
    %3848 = vmatpush.msra.mxu0 %v512
    %3849 = vmatpush.msra.mxu0 %v508
    %3850 = vmatmul.f32.gmra.mxu0 %v3655
    %v3851 = vpop.f32.mrf.mxu0
    %v3852 = vadd.f32 %v3832, %v3851
    %3853 = vdwg.mxu0
    %3854 = vmatpush.msra.mxu0 %v505
    %3855 = vmatpush.msra.mxu0 %v501
    %3856 = vmatpush.msra.mxu0 %v497
    %3857 = vmatpush.msra.mxu0 %v493
    %3858 = vmatpush.msra.mxu0 %v489
    %3859 = vmatpush.msra.mxu0 %v485
    %3860 = vmatpush.msra.mxu0 %v481
    %3861 = vmatpush.msra.mxu0 %v477
    %3862 = vmatpush.msra.mxu0 %v473
    %3863 = vmatpush.msra.mxu0 %v469
    %3864 = vmatpush.msra.mxu0 %v465
    %3865 = vmatpush.msra.mxu0 %v461
    %3866 = vmatpush.msra.mxu0 %v457
    %3867 = vmatpush.msra.mxu0 %v453
    %3868 = vmatpush.msra.mxu0 %v449
    %3869 = vmatpush.msra.mxu0 %v445
    %3870 = vmatmul.f32.gmra.mxu0 %v3813
    %v3871 = vpop.f32.mrf.mxu0
    %v3872 = vadd.f32 %v735, %v3871
    %3873 = vdwg.mxu0
    %3874 = vmatpush.msra.mxu0 %v569
    %3875 = vmatpush.msra.mxu0 %v565
    %3876 = vmatpush.msra.mxu0 %v561
    %3877 = vmatpush.msra.mxu0 %v557
    %3878 = vmatpush.msra.mxu0 %v553
    %3879 = vmatpush.msra.mxu0 %v549
    %3880 = vmatpush.msra.mxu0 %v545
    %3881 = vmatpush.msra.mxu0 %v541
    %3882 = vmatpush.msra.mxu0 %v537
    %3883 = vmatpush.msra.mxu0 %v533
    %3884 = vmatpush.msra.mxu0 %v529
    %3885 = vmatpush.msra.mxu0 %v525
    %3886 = vmatpush.msra.mxu0 %v521
    %3887 = vmatpush.msra.mxu0 %v517
    %3888 = vmatpush.msra.mxu0 %v513
    %3889 = vmatpush.msra.mxu0 %v509
    %3890 = vmatmul.f32.gmra.mxu0 %v3655
    %v3891 = vpop.f32.mrf.mxu0
    %v3892 = vadd.f32 %v3872, %v3891
    %3893 = vdwg.mxu0
    %3894 = vmatpush.msra.mxu0 %v506
    %3895 = vmatpush.msra.mxu0 %v502
    %3896 = vmatpush.msra.mxu0 %v498
    %3897 = vmatpush.msra.mxu0 %v494
    %3898 = vmatpush.msra.mxu0 %v490
    %3899 = vmatpush.msra.mxu0 %v486
    %3900 = vmatpush.msra.mxu0 %v482
    %3901 = vmatpush.msra.mxu0 %v478
    %3902 = vmatpush.msra.mxu0 %v474
    %3903 = vmatpush.msra.mxu0 %v470
    %3904 = vmatpush.msra.mxu0 %v466
    %3905 = vmatpush.msra.mxu0 %v462
    %3906 = vmatpush.msra.mxu0 %v458
    %3907 = vmatpush.msra.mxu0 %v454
    %3908 = vmatpush.msra.mxu0 %v450
    %3909 = vmatpush.msra.mxu0 %v446
    %3910 = vmatmul.f32.gmra.mxu0 %v3813
    %v3911 = vpop.f32.mrf.mxu0
    %v3912 = vadd.f32 %v736, %v3911
    %3913 = vdwg.mxu0
    %3914 = vmatpush.msra.mxu0 %v570
    %3915 = vmatpush.msra.mxu0 %v566
    %3916 = vmatpush.msra.mxu0 %v562
    %3917 = vmatpush.msra.mxu0 %v558
    %3918 = vmatpush.msra.mxu0 %v554
    %3919 = vmatpush.msra.mxu0 %v550
    %3920 = vmatpush.msra.mxu0 %v546
    %3921 = vmatpush.msra.mxu0 %v542
    %3922 = vmatpush.msra.mxu0 %v538
    %3923 = vmatpush.msra.mxu0 %v534
    %3924 = vmatpush.msra.mxu0 %v530
    %3925 = vmatpush.msra.mxu0 %v526
    %3926 = vmatpush.msra.mxu0 %v522
    %3927 = vmatpush.msra.mxu0 %v518
    %3928 = vmatpush.msra.mxu0 %v514
    %3929 = vmatpush.msra.mxu0 %v510
    %3930 = vmatmul.f32.gmra.mxu0 %v3655
    %v3931 = vpop.f32.mrf.mxu0
    %v3932 = vadd.f32 %v3912, %v3931
    %3933 = vdwg.mxu0
    %3934 = vmatpush.msra.mxu0 %v507
    %3935 = vmatpush.msra.mxu0 %v503
    %3936 = vmatpush.msra.mxu0 %v499
    %3937 = vmatpush.msra.mxu0 %v495
    %3938 = vmatpush.msra.mxu0 %v491
    %3939 = vmatpush.msra.mxu0 %v487
    %3940 = vmatpush.msra.mxu0 %v483
    %3941 = vmatpush.msra.mxu0 %v479
    %3942 = vmatpush.msra.mxu0 %v475
    %3943 = vmatpush.msra.mxu0 %v471
    %3944 = vmatpush.msra.mxu0 %v467
    %3945 = vmatpush.msra.mxu0 %v463
    %3946 = vmatpush.msra.mxu0 %v459
    %3947 = vmatpush.msra.mxu0 %v455
    %3948 = vmatpush.msra.mxu0 %v451
    %3949 = vmatpush.msra.mxu0 %v447
    %3950 = vmatmul.f32.gmra.mxu0 %v3813
    %v3951 = vpop.f32.mrf.mxu0
    %v3952 = vadd.f32 %v737, %v3951
    %3953 = vdwg.mxu0
    %3954 = vmatpush.msra.mxu0 %v571
    %3955 = vmatpush.msra.mxu0 %v567
    %3956 = vmatpush.msra.mxu0 %v563
    %3957 = vmatpush.msra.mxu0 %v559
    %3958 = vmatpush.msra.mxu0 %v555
    %3959 = vmatpush.msra.mxu0 %v551
    %3960 = vmatpush.msra.mxu0 %v547
    %3961 = vmatpush.msra.mxu0 %v543
    %3962 = vmatpush.msra.mxu0 %v539
    %3963 = vmatpush.msra.mxu0 %v535
    %3964 = vmatpush.msra.mxu0 %v531
    %3965 = vmatpush.msra.mxu0 %v527
    %3966 = vmatpush.msra.mxu0 %v523
    %3967 = vmatpush.msra.mxu0 %v519
    %3968 = vmatpush.msra.mxu0 %v515
    %3969 = vmatpush.msra.mxu0 %v511
    %3970 = vmatmul.f32.gmra.mxu0 %v3655
    %v3971 = vpop.f32.mrf.mxu0
    %v3972 = vadd.f32 %v3952, %v3971
    %3973 = vdwg.mxu0
    %v3974 = vxor.u32 %v3852, 2147483648
    %v3975 = vmul.f32 %v3974, 1.442695
    %v3976 = vpow.pop %v3975
    %v3977 = vadd.f32 %v3976, 1.0
    %v3978 = vrcp.pop %v3977
    %v3979 = vmul.f32 %v3977, %v3978
    %v3980 = vsub.f32 1.0, %v3979
    %v3981 = vmul.f32 %v3978, %v3980
    %v3982 = vadd.f32 %v3978, %v3981
    %vm3983 = vweird.f32 %v3977
    %vm3984 = vweird.f32 %v3978
    %vm3985 = vmor %vm3983, %vm3984
    %v3986 = vsel %vm3985, %v3978, %v3982
    %v3987 = vand.u32 2147483647, %v3977
    %vm3988 = vcmp.eq.f32.partialorder %v3987, 8.507059e+37
    %v3989 = vand.u32 %v3977, 2147483648
    %v3990 = vor.u32 1.1754944e-38, %v3989
    %v3991 = vsel %vm3988, %v3990, %v3986
    %v3992 = vmul.f32 1.0, %v3991
    %v3993 = vxor.u32 %v3892, 2147483648
    %v3994 = vmul.f32 %v3993, 1.442695
    %v3995 = vpow.pop %v3994
    %v3996 = vadd.f32 %v3995, 1.0
    %v3997 = vrcp.pop %v3996
    %v3998 = vmul.f32 %v3996, %v3997
    %v3999 = vsub.f32 1.0, %v3998
    %v4000 = vmul.f32 %v3997, %v3999
    %v4001 = vadd.f32 %v3997, %v4000
    %vm4002 = vweird.f32 %v3996
    %vm4003 = vweird.f32 %v3997
    %vm4004 = vmor %vm4002, %vm4003
    %v4005 = vsel %vm4004, %v3997, %v4001
    %v4006 = vand.u32 2147483647, %v3996
    %vm4007 = vcmp.eq.f32.partialorder %v4006, 8.507059e+37
    %v4008 = vand.u32 %v3996, 2147483648
    %v4009 = vor.u32 1.1754944e-38, %v4008
    %v4010 = vsel %vm4007, %v4009, %v4005
    %v4011 = vmul.f32 1.0, %v4010
    %v4012 = vtanh.pop %v3932
    %v4013 = vxor.u32 %v3972, 2147483648
    %v4014 = vmul.f32 %v4013, 1.442695
    %v4015 = vpow.pop %v4014
    %v4016 = vadd.f32 %v4015, 1.0
    %v4017 = vrcp.pop %v4016
    %v4018 = vmul.f32 %v4016, %v4017
    %v4019 = vsub.f32 1.0, %v4018
    %v4020 = vmul.f32 %v4017, %v4019
    %v4021 = vadd.f32 %v4017, %v4020
    %vm4022 = vweird.f32 %v4016
    %vm4023 = vweird.f32 %v4017
    %vm4024 = vmor %vm4022, %vm4023
    %v4025 = vsel %vm4024, %v4017, %v4021
    %v4026 = vand.u32 2147483647, %v4016
    %vm4027 = vcmp.eq.f32.partialorder %v4026, 8.507059e+37
    %v4028 = vand.u32 %v4016, 2147483648
    %v4029 = vor.u32 1.1754944e-38, %v4028
    %v4030 = vsel %vm4027, %v4029, %v4025
    %v4031 = vmul.f32 1.0, %v4030
    %v4032 = vmul.f32 %v4011, %v3656
    %v4033 = vmul.f32 %v3992, %v4012
    %v4034 = vadd.f32 %v4032, %v4033
    %v4035 = vtanh.pop %v4034
    %v4036 = vmul.f32 %v4031, %v4035
    %v4037 = vsel %vm3662, %v4036, %v3655
    %v4038 = vpack.c.bf16 %v965, %v965
    %v4039 = vpack.c.bf16 %v1351, %v1351
    %v4040 = vpack.c.bf16 %v1736, %v1736
    %v4041 = vpack.c.bf16 %v4037, %v4037
    %v4042 = vld [vmem:[#allocation9] sm:$0xf]
    %v4043 = vld [vmem:[#allocation9 + $0x4] sm:$0xf]
    %v4044 = vld [vmem:[#allocation9 + $0x8] sm:$0xf]
    %v4045 = vld [vmem:[#allocation9 + $0xc] sm:$0xf]
    %v4046 = vld [vmem:[#allocation9 + $0x10] sm:$0xf]
    %v4047 = vld [vmem:[#allocation9 + $0x14] sm:$0xf]
    %v4048 = vld [vmem:[#allocation9 + $0x18] sm:$0xf]
    %v4049 = vld [vmem:[#allocation9 + $0x1c] sm:$0xf]
    %v4050 = vld [vmem:[#allocation9 + $0x20] sm:$0xf]
    %v4051 = vld [vmem:[#allocation9 + $0x24] sm:$0xf]
    %v4052 = vld [vmem:[#allocation9 + $0x28] sm:$0xf]
    %v4053 = vld [vmem:[#allocation9 + $0x2c] sm:$0xf]
    %v4054 = vld [vmem:[#allocation9 + $0x30] sm:$0xf]
    %v4055 = vld [vmem:[#allocation9 + $0x34] sm:$0xf]
    %v4056 = vld [vmem:[#allocation9 + $0x38] sm:$0xf]
    %v4057 = vld [vmem:[#allocation9 + $0x3c] sm:$0xf]
    %v4058 = vld [vmem:[#allocation9 + $0x40] sm:$0xf]
    %v4059 = vld [vmem:[#allocation9 + $0x44] sm:$0xf]
    %v4060 = vld [vmem:[#allocation9 + $0x48] sm:$0xf]
    %v4061 = vld [vmem:[#allocation9 + $0x4c] sm:$0xf]
    %v4062 = vld [vmem:[#allocation9 + $0x50] sm:$0xf]
    %v4063 = vld [vmem:[#allocation9 + $0x54] sm:$0xf]
    %v4064 = vld [vmem:[#allocation9 + $0x58] sm:$0xf]
    %v4065 = vld [vmem:[#allocation9 + $0x5c] sm:$0xf]
    %v4066 = vld [vmem:[#allocation9 + $0x60] sm:$0xf]
    %v4067 = vld [vmem:[#allocation9 + $0x64] sm:$0xf]
    %v4068 = vld [vmem:[#allocation9 + $0x68] sm:$0xf]
    %v4069 = vld [vmem:[#allocation9 + $0x6c] sm:$0xf]
    %v4070 = vld [vmem:[#allocation9 + $0x70] sm:$0xf]
    %v4071 = vld [vmem:[#allocation9 + $0x74] sm:$0xf]
    %v4072 = vld [vmem:[#allocation9 + $0x78] sm:$0xf]
    %v4073 = vld [vmem:[#allocation9 + $0x7c] sm:$0xf]
    %v4074 = vld [vmem:[#allocation9 + $0x80] sm:$0xf]
    %v4075 = vld [vmem:[#allocation9 + $0x84] sm:$0xf]
    %v4076 = vld [vmem:[#allocation9 + $0x88] sm:$0xf]
    %v4077 = vld [vmem:[#allocation9 + $0x8c] sm:$0xf]
    %v4078 = vld [vmem:[#allocation9 + $0x90] sm:$0xf]
    %v4079 = vld [vmem:[#allocation9 + $0x94] sm:$0xf]
    %v4080 = vld [vmem:[#allocation9 + $0x98] sm:$0xf]
    %v4081 = vld [vmem:[#allocation9 + $0x9c] sm:$0xf]
    %v4082 = vld [vmem:[#allocation9 + $0xa0] sm:$0xf]
    %v4083 = vld [vmem:[#allocation9 + $0xa4] sm:$0xf]
    %v4084 = vld [vmem:[#allocation9 + $0xa8] sm:$0xf]
    %v4085 = vld [vmem:[#allocation9 + $0xac] sm:$0xf]
    %v4086 = vld [vmem:[#allocation9 + $0xb0] sm:$0xf]
    %v4087 = vld [vmem:[#allocation9 + $0xb4] sm:$0xf]
    %v4088 = vld [vmem:[#allocation9 + $0xb8] sm:$0xf]
    %v4089 = vld [vmem:[#allocation9 + $0xbc] sm:$0xf]
    %v4090 = vld [vmem:[#allocation9 + $0xc0] sm:$0xf]
    %v4091 = vld [vmem:[#allocation9 + $0xc4] sm:$0xf]
    %v4092 = vld [vmem:[#allocation9 + $0xc8] sm:$0xf]
    %v4093 = vld [vmem:[#allocation9 + $0xcc] sm:$0xf]
    %v4094 = vld [vmem:[#allocation9 + $0xd0] sm:$0xf]
    %v4095 = vld [vmem:[#allocation9 + $0xd4] sm:$0xf]
    %v4096 = vld [vmem:[#allocation9 + $0xd8] sm:$0xf]
    %v4097 = vld [vmem:[#allocation9 + $0xdc] sm:$0xf]
    %v4098 = vld [vmem:[#allocation9 + $0xe0] sm:$0xf]
    %v4099 = vld [vmem:[#allocation9 + $0xe4] sm:$0xf]
    %v4100 = vld [vmem:[#allocation9 + $0xe8] sm:$0xf]
    %v4101 = vld [vmem:[#allocation9 + $0xec] sm:$0xf]
    %v4102 = vld [vmem:[#allocation9 + $0xf0] sm:$0xf]
    %v4103 = vld [vmem:[#allocation9 + $0xf4] sm:$0xf]
    %v4104 = vld [vmem:[#allocation9 + $0xf8] sm:$0xf]
    %v4105 = vld [vmem:[#allocation9 + $0xfc] sm:$0xf]
    %v4106 = vld [vmem:[%s8] sm:$0x1]
    %v4108 = vperm.slane %v4106, 0
    %v4174 = vunpack.c.l.b16 %v4042
    %v4175 = vunpack.c.l.b16 %v4043
    %v4176 = vunpack.c.l.b16 %v4044
    %v4177 = vunpack.c.l.b16 %v4045
    %v4178 = vunpack.c.l.b16 %v4046
    %v4179 = vunpack.c.l.b16 %v4047
    %v4180 = vunpack.c.l.b16 %v4048
    %v4181 = vunpack.c.l.b16 %v4049
    %v4182 = vunpack.c.l.b16 %v4050
    %v4183 = vunpack.c.l.b16 %v4051
    %v4184 = vunpack.c.l.b16 %v4052
    %v4185 = vunpack.c.l.b16 %v4053
    %v4186 = vunpack.c.l.b16 %v4054
    %v4187 = vunpack.c.l.b16 %v4055
    %v4188 = vunpack.c.l.b16 %v4056
    %v4189 = vunpack.c.l.b16 %v4057
    %v4190 = vunpack.c.l.b16 %v4058
    %v4191 = vunpack.c.l.b16 %v4059
    %v4192 = vunpack.c.l.b16 %v4060
    %v4193 = vunpack.c.l.b16 %v4061
    %v4194 = vunpack.c.l.b16 %v4062
    %v4195 = vunpack.c.l.b16 %v4063
    %v4196 = vunpack.c.l.b16 %v4064
    %v4197 = vunpack.c.l.b16 %v4065
    %v4198 = vunpack.c.l.b16 %v4066
    %v4199 = vunpack.c.l.b16 %v4067
    %v4200 = vunpack.c.l.b16 %v4068
    %v4201 = vunpack.c.l.b16 %v4069
    %v4202 = vunpack.c.l.b16 %v4070
    %v4203 = vunpack.c.l.b16 %v4071
    %v4204 = vunpack.c.l.b16 %v4072
    %v4205 = vunpack.c.l.b16 %v4073
    %v4206 = vunpack.c.l.b16 %v4074
    %v4207 = vunpack.c.l.b16 %v4075
    %v4208 = vunpack.c.l.b16 %v4076
    %v4209 = vunpack.c.l.b16 %v4077
    %v4210 = vunpack.c.l.b16 %v4078
    %v4211 = vunpack.c.l.b16 %v4079
    %v4212 = vunpack.c.l.b16 %v4080
    %v4213 = vunpack.c.l.b16 %v4081
    %v4214 = vunpack.c.l.b16 %v4082
    %v4215 = vunpack.c.l.b16 %v4083
    %v4216 = vunpack.c.l.b16 %v4084
    %v4217 = vunpack.c.l.b16 %v4085
    %v4218 = vunpack.c.l.b16 %v4086
    %v4219 = vunpack.c.l.b16 %v4087
    %v4220 = vunpack.c.l.b16 %v4088
    %v4221 = vunpack.c.l.b16 %v4089
    %v4222 = vunpack.c.l.b16 %v4090
    %v4223 = vunpack.c.l.b16 %v4091
    %v4224 = vunpack.c.l.b16 %v4092
    %v4225 = vunpack.c.l.b16 %v4093
    %v4226 = vunpack.c.l.b16 %v4094
    %v4227 = vunpack.c.l.b16 %v4095
    %v4228 = vunpack.c.l.b16 %v4096
    %v4229 = vunpack.c.l.b16 %v4097
    %v4230 = vunpack.c.l.b16 %v4098
    %v4231 = vunpack.c.l.b16 %v4099
    %v4232 = vunpack.c.l.b16 %v4100
    %v4233 = vunpack.c.l.b16 %v4101
    %v4234 = vunpack.c.l.b16 %v4102
    %v4235 = vunpack.c.l.b16 %v4103
    %v4236 = vunpack.c.l.b16 %v4104
    %v4237 = vunpack.c.l.b16 %v4105
    %v4238 = vpack.c.b16 %v4175, %v4174
    %v4239 = vpack.c.b16 %v4177, %v4176
    %v4240 = vpack.c.b16 %v4179, %v4178
    %v4241 = vpack.c.b16 %v4181, %v4180
    %v4242 = vpack.c.b16 %v4183, %v4182
    %v4243 = vpack.c.b16 %v4185, %v4184
    %v4244 = vpack.c.b16 %v4187, %v4186
    %v4245 = vpack.c.b16 %v4189, %v4188
    %v4246 = vpack.c.b16 %v4191, %v4190
    %v4247 = vpack.c.b16 %v4193, %v4192
    %v4248 = vpack.c.b16 %v4195, %v4194
    %v4249 = vpack.c.b16 %v4197, %v4196
    %v4250 = vpack.c.b16 %v4199, %v4198
    %v4251 = vpack.c.b16 %v4201, %v4200
    %v4252 = vpack.c.b16 %v4203, %v4202
    %v4253 = vpack.c.b16 %v4205, %v4204
    %v4254 = vpack.c.b16 %v4207, %v4206
    %v4255 = vpack.c.b16 %v4209, %v4208
    %v4256 = vpack.c.b16 %v4211, %v4210
    %v4257 = vpack.c.b16 %v4213, %v4212
    %v4258 = vpack.c.b16 %v4215, %v4214
    %v4259 = vpack.c.b16 %v4217, %v4216
    %v4260 = vpack.c.b16 %v4219, %v4218
    %v4261 = vpack.c.b16 %v4221, %v4220
    %v4262 = vpack.c.b16 %v4223, %v4222
    %v4263 = vpack.c.b16 %v4225, %v4224
    %v4264 = vpack.c.b16 %v4227, %v4226
    %v4265 = vpack.c.b16 %v4229, %v4228
    %v4266 = vpack.c.b16 %v4231, %v4230
    %v4267 = vpack.c.b16 %v4233, %v4232
    %v4268 = vpack.c.b16 %v4235, %v4234
    %v4269 = vpack.c.b16 %v4237, %v4236
    %4302 = vmatpush.bf16.msra.mxu0 %v4245
    %4303 = vmatpush.bf16.msra.mxu0 %v4244
    %4304 = vmatpush.bf16.msra.mxu0 %v4243
    %4305 = vmatpush.bf16.msra.mxu0 %v4242
    %4306 = vmatpush.bf16.msra.mxu0 %v4241
    %4307 = vmatpush.bf16.msra.mxu0 %v4240
    %4308 = vmatpush.bf16.msra.mxu0 %v4239
    %4309 = vmatpush.bf16.msra.mxu0 %v4238
    %4310 = vmatmul.bf16.gmra.mxu0 %v4038
    %v4311 = vpop.f32.mrf.mxu0
    %v4312 = vadd.f32 %v4108, %v4311
    %v4313 = vpop.f32.mrf.mxu0
    %4314 = vdwg.mxu0
    %4315 = vmatpush.bf16.msra.mxu0 %v4253
    %4316 = vmatpush.bf16.msra.mxu0 %v4252
    %4317 = vmatpush.bf16.msra.mxu0 %v4251
    %4318 = vmatpush.bf16.msra.mxu0 %v4250
    %4319 = vmatpush.bf16.msra.mxu0 %v4249
    %4320 = vmatpush.bf16.msra.mxu0 %v4248
    %4321 = vmatpush.bf16.msra.mxu0 %v4247
    %4322 = vmatpush.bf16.msra.mxu0 %v4246
    %4323 = vmatmul.bf16.gmra.mxu0 %v4039
    %v4324 = vpop.f32.mrf.mxu0
    %v4325 = vadd.f32 %v4312, %v4324
    %v4326 = vpop.f32.mrf.mxu0
    %4327 = vdwg.mxu0
    %4328 = vmatpush.bf16.msra.mxu0 %v4261
    %4329 = vmatpush.bf16.msra.mxu0 %v4260
    %4330 = vmatpush.bf16.msra.mxu0 %v4259
    %4331 = vmatpush.bf16.msra.mxu0 %v4258
    %4332 = vmatpush.bf16.msra.mxu0 %v4257
    %4333 = vmatpush.bf16.msra.mxu0 %v4256
    %4334 = vmatpush.bf16.msra.mxu0 %v4255
    %4335 = vmatpush.bf16.msra.mxu0 %v4254
    %4336 = vmatmul.bf16.gmra.mxu0 %v4040
    %v4337 = vpop.f32.mrf.mxu0
    %v4338 = vadd.f32 %v4325, %v4337
    %v4339 = vpop.f32.mrf.mxu0
    %4340 = vdwg.mxu0
    %4341 = vmatpush.bf16.msra.mxu0 %v4269
    %4342 = vmatpush.bf16.msra.mxu0 %v4268
    %4343 = vmatpush.bf16.msra.mxu0 %v4267
    %4344 = vmatpush.bf16.msra.mxu0 %v4266
    %4345 = vmatpush.bf16.msra.mxu0 %v4265
    %4346 = vmatpush.bf16.msra.mxu0 %v4264
    %4347 = vmatpush.bf16.msra.mxu0 %v4263
    %4348 = vmatpush.bf16.msra.mxu0 %v4262
    %4349 = vmatmul.bf16.gmra.mxu0 %v4041
    %v4350 = vpop.f32.mrf.mxu0
    %v4351 = vadd.f32 %v4338, %v4350
    %v4352 = vpop.f32.mrf.mxu0
    %4353 = vdwg.mxu0
    %4354 = vmax.xlane.f32.xlu0 %v4351
    %v4355 = vpop.xlane.xlu0 %4354
    %v4356 = vsub.f32 %v4351, %v4355
    %v4357 = vmul.f32 %v4356, 1.442695
    %v4358 = vpow.pop %v4357
    %4359 = vadd.xlane.f32.xlu0 %v4358
    %v4360 = vpop.xlane.xlu0 %4359
    %v4361 = vlog2.pop %v4360
    %v4362 = vmul.f32 %v4361, 0.6931472
    %v4363 = vadd.f32 %v4362, %v4355
    %v4364 = vsub.f32 %v4351, %v4363
    %4365 = vst [vmem:[#allocation11] sm:$0xff] %v4364
    // Predicated region
    $region54: #{tpu_custom_call.1} parent=1 // pred_check
      _
    $region55: #{tpu_custom_call.1} parent=1 // pred_check_branch
      %4367 = sbr.rel (0) target = $region57
    $region56: #{tpu_custom_call.1} parent=1 // pred_region
      %4369 = vsyncadd [#allocation5], 0
      %s4371 = sshll.u32 [#allocation11], 4
      %s4372 = int_to_ptr.vmem [resolvable:$true] %s4371
      %s4373 = sshll.u32 %s9, 4
      %s4374 = int_to_ptr.hbm [resolvable:$true] %s4373
      %4376 = dma.vmem_to_hbm [thread:$0]  %s4372, 128, %s4374, [#allocation5]
    $region57: #{tpu_custom_call.1} parent=1 // pred_fallthru
      _
    // Predicated region
    $region58: #{tpu_custom_call.1} parent=1 // pred_check
      _
    $region59: #{tpu_custom_call.1} parent=1 // pred_check_branch
      %4378 = sbr.rel (0) target = $region61
    $region60: #{tpu_custom_call.1} parent=1 // pred_region
      %4380 = dma.done [#allocation5], 128
    $region61: #{tpu_custom_call.1} parent=1 // pred_fallthru
      _
    %4381 = vsyncpa [#allocation4], 1
    %4382 = vsyncpa [#allocation7], 1
    %4383 = vsyncpa [#allocation10], 1
    %4384 = vsyncpa [#allocation5], 1

</llo_original>
